<compile_context>
chip_gen: v7x
topology: tpu7x:2x2x1
jax: 0.10.0
libtpu: 0.0.40
codegen_flags: <defaults>
</compile_context>

<pallas_src>
import functools

import jax
import jax.numpy as jnp
from jax.experimental import pallas as pl
from jax.experimental.pallas import tpu as pltpu

NEG_SLOPE = 0.1

# Set to jnp.bfloat16 for full-rate MXU on v5e/v6e/v7x (accumulation stays f32; biases/LeakyReLU stay
# f32 on the VPU).  Kept f32 by default to stay bit-faithful to the PyTorch module at 2e-3 tolerance.
MXU_DTYPE = jnp.float32


def _vmem_limit_bytes():
    """Generation-aware VMEM budget: ~3/4 of physical, capped at 100 MiB."""
    try:
        cap = getattr(pltpu.get_tpu_info(), "vmem_capacity_bytes", None)
        if cap:
            return int(min(cap * 3 // 4, 100 * 1024 * 1024))
    except Exception:
        pass
    return 48 * 1024 * 1024


# ----------------------------- fused per-level kernel ------------------------------ #

def _decoder_level_kernel(*refs, fuse_out):
    """up(x) -> LeakyReLU -> concat(up, skip) -> Conv3x3(2C->Cout) -> LeakyReLU (-> 1x1 out-conv).

    x_ref : (1, Hs, Ws, C)        low-res NHWC input (un-padded).
    s_ref : (1, Ho, Ws, 2C)       skip, free view of NHWC (Ho, 2Ws, C): lanes [even-col C | odd-col C].
    wup   : (4C, 4C)              packed sub-pixel ConvT weight, result lanes [p00|p01|p10|p11].
    bup   : (1, 4C)               ConvT bias tiled over the 4 phases.
    wc    : (3, 6C, Cout)         3x3 conv weight, per-kh rows [kw0: cin 0..2C-1 | kw1 | kw2].
    bc    : (1, Cout)
    wo/bo : (Cout, Od) / (1, Od)  optional fused 1x1 out-conv (weight pre-transposed -> plain NN matmul).
    o_ref : (1, Ho, Ws, 2*cdim)   free view of NHWC (Ho, 2Ws, cdim).
    xs    : VMEM (Hs+1, Ws+1, C)  low-res input zero-padded at bottom/right (in-kernel pad).
    ppad  : VMEM (Hs+1, 2, Ws+2, 4C)  padded concat input in column-parity-split form.
    """
    if fuse_out:
        (x_ref, s_ref, wup_ref, bup_ref, wc_ref, bc_ref, wo_ref, bo_ref,
         o_ref, xs, ppad) = refs
    else:
        (x_ref, s_ref, wup_ref, bup_ref, wc_ref, bc_ref,
         o_ref, xs, ppad) = refs

    _, Hs, Ws, C = x_ref.shape
    Ho = 2 * Hs
    C2, C4 = 2 * C, 4 * C
    Cout = wc_ref.shape[2]

    # ---- 1. sub-pixel ConvTranspose2d(k3, s2, p1, op1) as ONE (4C x 4C) matmul + LeakyReLU ----
    xs[0:Hs, 0:Ws, :] = x_ref[0].astype(xs.dtype)
    xs[Hs:Hs + 1, :, :] = jnp.zeros((1, Ws + 1, C), xs.dtype)
    xs[0:Hs, Ws:Ws + 1, :] = jnp.zeros((Hs, 1, C), xs.dtype)

    x_v = xs[0:Hs, 0:Ws, :]                 # x[m,   n  ]
    x_dn = xs[1:Hs + 1, 0:Ws, :]            # x[m+1, n  ]
    x_rt = xs[0:Hs, 1:Ws + 1, :]            # x[m,   n+1]
    x_dr = xs[1:Hs + 1, 1:Ws + 1, :]        # x[m+1, n+1]
    slabs = jnp.concatenate([x_dr, x_dn, x_rt, x_v], axis=-1)          # (Hs, Ws, 4C)
    r = jnp.dot(slabs.reshape(Hs * Ws, C4), wup_ref[...],
                preferred_element_type=jnp.float32) + bup_ref[...]
    r = jnp.where(r > 0, r, NEG_SLOPE * r)                             # (Hs*Ws, 4C) = [p00|p01|p10|p11]
    r = r.reshape(Hs, Ws, C4)

    # ---- 2. fused channel-concat into the padded conv input (column-parity-split VMEM scratch) ----
    # ppad[(i, j), n, :] = padded conv-input row t = 2*i + j (t=0 / t=Ho+1 are the top/bottom zero-pad
    # rows, conv row y = t-1), column-pair n-1 (n=0 / n=Ws+1 are left/right pads); lanes are
    # [up@even-col | skip@even-col | up@odd-col | skip@odd-col].
    sv = s_ref[0].reshape(Hs, 2, Ws, C2)    # (y-pair, y-parity, col-pair, [even C | odd C])
    s_even, s_odd = sv[:, 0], sv[:, 1]

    # zero only the 1-px border (interior fully overwritten every grid step; per-step so every core's
    # private scratch is initialised -- no program_id==0 gating).
    ppad[0:1, 0:1, :, :] = jnp.zeros((1, 1, Ws + 2, C4), ppad.dtype)          # top pad row
    ppad[Hs:Hs + 1, 1:2, :, :] = jnp.zeros((1, 1, Ws + 2, C4), ppad.dtype)    # bottom pad row
    ppad[:, :, 0:1, :] = jnp.zeros((Hs + 1, 2, 1, C4), ppad.dtype)            # left pad col
    ppad[:, :, Ws + 1:Ws + 2, :] = jnp.zeros((Hs + 1, 2, 1, C4), ppad.dtype)  # right pad col

    row_even = jnp.concatenate(             # conv rows y = 2m   -> phases p00 / p01
        [r[:, :, 0:C], s_even[:, :, 0:C], r[:, :, C:C2], s_even[:, :, C:C2]], axis=-1)
    row_odd = jnp.concatenate(              # conv rows y = 2m+1 -> phases p10 / p11
        [r[:, :, C2:3 * C], s_odd[:, :, 0:C], r[:, :, 3 * C:C4], s_odd[:, :, C:C2]], axis=-1)
    ppad[0:Hs, 1:2, 1:Ws + 1, :] = row_even.reshape(Hs, 1, Ws, C4).astype(ppad.dtype)
    ppad[1:Hs + 1, 0:1, 1:Ws + 1, :] = row_odd.reshape(Hs, 1, Ws, C4).astype(ppad.dtype)

    # ---- 3. 3x3 conv: im2col built once over the full padded height, kw taps folded into K=6C ----
    pp = ppad[...].reshape((Hs + 1) * 2, Ws + 2, C4)                   # (Ho+2, Ws+2, 4C), free merge
    # output col-parity 0 (x=2n):   taps [P1@n-1 | P0@n | P1@n]
    # output col-parity 1 (x=2n+1): taps [P0@n   | P1@n | P0@n+1]      (P = [up C | skip C])
    cols0 = jnp.concatenate([pp[:, 0:Ws, C2:C4], pp[:, 1:Ws + 1, :]], axis=-1)   # (Ho+2, Ws, 6C)
    cols1 = jnp.concatenate([pp[:, 1:Ws + 1, :], pp[:, 2:Ws + 2, 0:C2]], axis=-1)
    cols = jnp.concatenate([cols0[None], cols1[None]], axis=0)                    # (2, Ho+2, Ws, 6C)

    acc = jnp.zeros((2 * Ho * Ws, Cout), jnp.float32)
    for dy in range(3):                         # unrolled: 3 MXU launches, leading-axis row windows
        band = cols[:, dy:dy + Ho]              # (2, Ho, Ws, 6C) -- no W-shifted copies per dy
        acc = acc + jnp.dot(band.reshape(2 * Ho * Ws, 6 * C), wc_ref[dy],
                            preferred_element_type=jnp.float32)
    h = acc + bc_ref[...]
    h = jnp.where(h > 0, h, NEG_SLOPE * h)      # rows ordered (col-parity, y, n)

    # ---- 4. store; (Ho, Ws, 2*cdim) is a free byte-view of NHWC (Ho, 2Ws, cdim) ----
    if fuse_out:
        Od = wo_ref.shape[1]
        out = jnp.dot(h.astype(wo_ref.dtype), wo_ref[...],
                      preferred_element_type=jnp.float32) + bo_ref[...]
        outr = out.reshape(2, Ho, Ws, Od)
        o_ref[0] = jnp.concatenate([outr[0], outr[1]], axis=-1)
    else:
        hr = h.reshape(2, Ho, Ws, Cout)
        o_ref[0] = jnp.concatenate([hr[0], hr[1]], axis=-1)


# ------------------------------ weight packing & wrapper ------------------------ #

def _pack_upsample_weight(w_ct):
    """PyTorch ConvTranspose2d weight (Cin, Cout, 3, 3) -> (4C, 4C) sub-pixel block matrix.

    Operand row blocks: [x[m+1,n+1] | x[m+1,n] | x[m,n+1] | x[m,n]];
    result col blocks:  [y[2m,2n] | y[2m,2n+1] | y[2m+1,2n] | y[2m+1,2n+1]].
    """
    C = w_ct.shape[0]
    Z = jnp.zeros((C, C), w_ct.dtype)
    tap = lambda kh, kw: w_ct[:, :, kh, kw]
    col_p00 = jnp.concatenate([Z, Z, Z, tap(1, 1)], axis=0)
    col_p01 = jnp.concatenate([Z, Z, tap(1, 0), tap(1, 2)], axis=0)
    col_p10 = jnp.concatenate([Z, tap(0, 1), Z, tap(2, 1)], axis=0)
    col_p11 = jnp.concatenate([tap(0, 0), tap(0, 2), tap(2, 0), tap(2, 2)], axis=0)
    return jnp.concatenate([col_p00, col_p01, col_p10, col_p11], axis=1)    # (4C, 4C)


def _pack_cat_weight(w_pt):
    """PyTorch Conv2d weight (Cout, 2C, 3, 3) -> (3, 6C, Cout); per-kh rows [kw0: cin 0..2C-1 | kw1 | kw2]."""
    Cout, C2 = w_pt.shape[0], w_pt.shape[1]
    return jnp.transpose(w_pt, (2, 3, 1, 0)).reshape(3, 3 * C2, Cout)


def pack_decoder_params(p):
    """Pack / reorder all weights once (not per forward call)."""
    f = jnp.float32
    return {
        "up1_w": _pack_upsample_weight(p["up1_w"]).astype(MXU_DTYPE),
        "up1_b": jnp.tile(p["up1_b"].reshape(1, -1), (1, 4)).astype(f),
        "cat1_w": _pack_cat_weight(p["cat1_w"]).astype(MXU_DTYPE),
        "cat1_b": p["cat1_b"].reshape(1, -1).astype(f),
        "up2_w": _pack_upsample_weight(p["up2_w"]).astype(MXU_DTYPE),
        "up2_b": jnp.tile(p["up2_b"].reshape(1, -1), (1, 4)).astype(f),
        "cat2_w": _pack_cat_weight(p["cat2_w"]).astype(MXU_DTYPE),
        "cat2_b": p["cat2_b"].reshape(1, -1).astype(f),
        "out_w_t": p["out_w"].reshape(p["out_w"].shape[0], -1).T.astype(MXU_DTYPE),  # (Cout, Od)
        "out_b": p["out_b"].reshape(1, -1).astype(f),
    }


def decoder_level_pallas(x, skip, wup, bup4, wc, bc, wo_t=None, bo=None):
    """One fused decoder level.  x: (B, Hs, Ws, C) NHWC; skip: (B, 2Hs, 2Ws, C) NHWC.

    Returns NHWC (B, 2Hs, 2Ws, Cout), or (B, 2Hs, 2Ws, Od) when the 1x1 out-conv is fused.
    """
    B, Hs, Ws, C = x.shape
    Ho, Wo = 2 * Hs, 2 * Ws
    Cout = wc.shape[2]
    fuse = wo_t is not None

    skip_v = skip.reshape(B, Ho, Ws, 2 * C)   # free NHWC byte-view: lanes [even-col C | odd-col C]

    in_specs = [
        pl.BlockSpec((1, Hs, Ws, C), lambda i: (i, 0, 0, 0)),
        pl.BlockSpec((1, Ho, Ws, 2 * C), lambda i: (i, 0, 0, 0)),
        pl.BlockSpec((4 * C, 4 * C), lambda i: (0, 0)),
        pl.BlockSpec((1, 4 * C), lambda i: (0, 0)),
        pl.BlockSpec((3, 6 * C, Cout), lambda i: (0, 0, 0)),
        pl.BlockSpec((1, Cout), lambda i: (0, 0)),
    ]
    args = [x, skip_v, wup, bup4, wc, bc]
    if fuse:
        Od = wo_t.shape[1]
        in_specs += [pl.BlockSpec((Cout, Od), lambda i: (0, 0)),
                     pl.BlockSpec((1, Od), lambda i: (0, 0))]
        args += [wo_t, bo]
        cdim = Od
    else:
        cdim = Cout

    out = pl.pallas_call(
        functools.partial(_decoder_level_kernel, fuse_out=fuse),
        out_shape=jax.ShapeDtypeStruct((B, Ho, Ws, 2 * cdim), jnp.float32),
        grid=(B,),
        in_specs=in_specs,
        out_specs=pl.BlockSpec((1, Ho, Ws, 2 * cdim), lambda i: (i, 0, 0, 0)),
        scratch_shapes=[
            pltpu.VMEM((Hs + 1, Ws + 1, C), MXU_DTYPE),          # xs  : padded low-res input
            pltpu.VMEM((Hs + 1, 2, Ws + 2, 4 * C), MXU_DTYPE),   # ppad: padded, parity-split concat
        ],
        compiler_params=pltpu.CompilerParams(
            dimension_semantics=("parallel",),
            vmem_limit_bytes=_vmem_limit_bytes(),
        ),
    )(*args)
    return out.reshape(B, Ho, Wo, cdim)       # free byte-view back to NHWC


# ------------------------------ forward pass -------------------------------- #

def unet_decoder_forward(packed, x3, x2, x1):
    """x3: [B, C, H/4, W/4], x2: [B, C, H/2, W/2], x1: [B, C, H, W] (NCHW, like PyTorch)."""
    to_nhwc = lambda t: jnp.transpose(t, (0, 2, 3, 1))
    h1 = decoder_level_pallas(to_nhwc(x3), to_nhwc(x2),
                              packed["up1_w"], packed["up1_b"],
                              packed["cat1_w"], packed["cat1_b"])
    out = decoder_level_pallas(h1, to_nhwc(x1),
                               packed["up2_w"], packed["up2_b"],
                               packed["cat2_w"], packed["cat2_b"],
                               wo_t=packed["out_w_t"], bo=packed["out_b"])
    return jnp.transpose(out, (0, 3, 1, 2))   # tiny final NHWC->NCHW transpose of (B, out_dim, H, W)


# ------------------------------ params & reference -------------------------- #

def init_params(key, hidden, out_dim):
    ks = jax.random.split(key, 10)

    def u(k, shape, fan_in):
        bound = 1.0 / (fan_in ** 0.5)
        return jax.random.uniform(k, shape, jnp.float32, -bound, bound)

    return {
        "up1_w": u(ks[0], (hidden, hidden, 3, 3), hidden * 9),      # ConvT weight (Cin, Cout, 3, 3)
        "up1_b": u(ks[1], (hidden,), hidden * 9),
        "cat1_w": u(ks[2], (hidden, 2 * hidden, 3, 3), 2 * hidden * 9),
        "cat1_b": u(ks[3], (hidden,), 2 * hidden * 9),
        "up2_w": u(ks[4], (hidden, hidden, 3, 3), hidden * 9),
        "up2_b": u(ks[5], (hidden,), hidden * 9),
        "cat2_w": u(ks[6], (hidden, 2 * hidden, 3, 3), 2 * hidden * 9),
        "cat2_b": u(ks[7], (hidden,), 2 * hidden * 9),
        "out_w": u(ks[8], (out_dim, hidden, 1, 1), hidden),
        "out_b": u(ks[9], (out_dim,), hidden),
    }


def ref_forward(p, x3, x2, x1):
    """Pure-JAX reference (XLA convs, NCHW) matching the PyTorch module."""
    leaky = lambda t: jnp.where(t > 0, t, NEG_SLOPE * t)

    def convT(x, w, b):
        wf = jnp.transpose(w[:, :, ::-1, ::-1], (1, 0, 2, 3))  # (Cout, Cin, 3, 3)
        y = jax.lax.conv_general_dilated(
            x, wf, (1, 1), ((1, 2), (1, 2)), lhs_dilation=(2, 2),
            dimension_numbers=("NCHW", "OIHW", "NCHW"))
        return y + b[None, :, None, None]

    def conv(x, w, b, pad):
        y = jax.lax.conv_general_dilated(
            x, w, (1, 1), ((pad, pad), (pad, pad)),
            dimension_numbers=("NCHW", "OIHW", "NCHW"))
        return y + b[None, :, None, None]

    h = leaky(convT(x3, p["up1_w"], p["up1_b"]))
    h = jnp.concatenate([h, x2], axis=1)
    h = leaky(conv(h, p["cat1_w"], p["cat1_b"], 1))
    h = leaky(convT(h, p["up2_w"], p["up2_b"]))
    h = jnp.concatenate([h, x1], axis=1)
    h = leaky(conv(h, p["cat2_w"], p["cat2_b"], 1))
    return conv(h, p["out_w"], p["out_b"], 0)


# ----------------------------------- main ----------------------------------- #

if __name__ == "__main__":
    B, hidden, out_dim, H, W = 2, 32, 4, 16, 16
    key = jax.random.PRNGKey(0)
    kp, k1, k2, k3 = jax.random.split(key, 4)
    params = init_params(kp, hidden, out_dim)
    packed = pack_decoder_params(params)        # weights packed once, outside the forward pass

    x1 = jax.random.normal(k1, (B, hidden, H, W), jnp.float32)
    x2 = jax.random.normal(k2, (B, hidden, H // 2, W // 2), jnp.float32)
    x3 = jax.random.normal(k3, (B, hidden, H // 4, W // 4), jnp.float32)

    out = jax.jit(unet_decoder_forward)(packed, x3, x2, x1)
    out = jax.block_until_ready(out)
    assert out.shape == (B, out_dim, H, W), out.shape

    ref = ref_forward(params, x3, x2, x1)
    err = float(jnp.max(jnp.abs(out - ref)))
    assert jnp.allclose(out, ref, rtol=2e-3, atol=2e-3), f"max abs err {err}"

    print("KERNEL_OK")
</pallas_src>

<mosaic_0001>
module attributes {stable_mosaic.version = 11 : i64} {
  func.func @_decoder_level_kernel(%arg0: i32, %arg1: memref<1x4x4x32xf32, #tpu.memory_space<vmem>>, %arg2: memref<1x8x4x64xf32, #tpu.memory_space<vmem>>, %arg3: memref<128x128xf32, #tpu.memory_space<vmem>>, %arg4: memref<1x128xf32, #tpu.memory_space<vmem>>, %arg5: memref<3x192x32xf32, #tpu.memory_space<vmem>>, %arg6: memref<1x32xf32, #tpu.memory_space<vmem>>, %arg7: memref<1x8x4x64xf32, #tpu.memory_space<vmem>>, %arg8: memref<5x5x32xf32, #tpu.memory_space<vmem>>, %arg9: memref<5x2x6x128xf32, #tpu.memory_space<vmem>>) attributes {dimension_semantics = [#tpu.dimension_semantics<parallel>], iteration_bounds = array<i64: 2>, scalar_prefetch = 0 : i64, scratch_operands = 2 : i64, tpu.core_type = #tpu.core_type<tc>, window_params = [{transform_indices = @transform_0, window_bounds = array<i64: 1, 4, 4, 32>}, {transform_indices = @transform_1, window_bounds = array<i64: 1, 8, 4, 64>}, {pipeline_mode = #tpu.pipeline_mode<synchronous>, transform_indices = @transform_2, window_bounds = array<i64: 128, 128>}, {pipeline_mode = #tpu.pipeline_mode<synchronous>, transform_indices = @transform_3, window_bounds = array<i64: 1, 128>}, {pipeline_mode = #tpu.pipeline_mode<synchronous>, transform_indices = @transform_4, window_bounds = array<i64: 3, 192, 32>}, {pipeline_mode = #tpu.pipeline_mode<synchronous>, transform_indices = @transform_5, window_bounds = array<i64: 1, 32>}, {transform_indices = @transform_6, window_bounds = array<i64: 1, 8, 4, 64>}]} {
    %c0 = arith.constant 0 : index
    %c0_0 = arith.constant 0 : index
    %c0_1 = arith.constant 0 : index
    %c0_2 = arith.constant 0 : index
    %0 = vector.load %arg1[%c0, %c0_0, %c0_1, %c0_2] : memref<1x4x4x32xf32, #tpu.memory_space<vmem>>, vector<1x4x4x32xf32>
    %1 = vector.shape_cast %0 : vector<1x4x4x32xf32> to vector<4x4x32xf32>
    %c0_3 = arith.constant 0 : index
    %c0_4 = arith.constant 0 : index
    %c0_5 = arith.constant 0 : index
    %2 = vector.load %arg8[%c0_3, %c0_4, %c0_5] : memref<5x5x32xf32, #tpu.memory_space<vmem>>, vector<4x4x32xf32>
    tpu.vector_store %arg8[%c0_3, %c0_4, %c0_5], %1 {strides = array<i32>} : memref<5x5x32xf32, #tpu.memory_space<vmem>>, vector<4x4x32xf32>,
    %cst = arith.constant 0.000000e+00 : f32
    %3 = vector.broadcast %cst : f32 to vector<1x5x32xf32>
    %c4 = arith.constant 4 : index
    %c0_6 = arith.constant 0 : index
    %c0_7 = arith.constant 0 : index
    %4 = vector.load %arg8[%c4, %c0_6, %c0_7] : memref<5x5x32xf32, #tpu.memory_space<vmem>>, vector<1x5x32xf32>
    tpu.vector_store %arg8[%c4, %c0_6, %c0_7], %3 {strides = array<i32>} : memref<5x5x32xf32, #tpu.memory_space<vmem>>, vector<1x5x32xf32>,
    %cst_8 = arith.constant 0.000000e+00 : f32
    %5 = vector.broadcast %cst_8 : f32 to vector<4x1x32xf32>
    %c0_9 = arith.constant 0 : index
    %c4_10 = arith.constant 4 : index
    %c0_11 = arith.constant 0 : index
    %6 = vector.load %arg8[%c0_9, %c4_10, %c0_11] : memref<5x5x32xf32, #tpu.memory_space<vmem>>, vector<4x1x32xf32>
    tpu.vector_store %arg8[%c0_9, %c4_10, %c0_11], %5 {strides = array<i32>} : memref<5x5x32xf32, #tpu.memory_space<vmem>>, vector<4x1x32xf32>,
    %c0_12 = arith.constant 0 : index
    %c0_13 = arith.constant 0 : index
    %c0_14 = arith.constant 0 : index
    %7 = vector.load %arg8[%c0_12, %c0_13, %c0_14] : memref<5x5x32xf32, #tpu.memory_space<vmem>>, vector<4x4x32xf32>
    %c1 = arith.constant 1 : index
    %c0_15 = arith.constant 0 : index
    %c0_16 = arith.constant 0 : index
    %8 = vector.load %arg8[%c1, %c0_15, %c0_16] : memref<5x5x32xf32, #tpu.memory_space<vmem>>, vector<4x4x32xf32>
    %c0_17 = arith.constant 0 : index
    %c1_18 = arith.constant 1 : index
    %c0_19 = arith.constant 0 : index
    %9 = vector.load %arg8[%c0_17, %c1_18, %c0_19] : memref<5x5x32xf32, #tpu.memory_space<vmem>>, vector<4x4x32xf32>
    %c1_20 = arith.constant 1 : index
    %c1_21 = arith.constant 1 : index
    %c0_22 = arith.constant 0 : index
    %10 = vector.load %arg8[%c1_20, %c1_21, %c0_22] : memref<5x5x32xf32, #tpu.memory_space<vmem>>, vector<4x4x32xf32>
    %11 = tpu.concatenate %10, %8, %9, %7 in 2 : vector<4x4x32xf32>, vector<4x4x32xf32>, vector<4x4x32xf32>, vector<4x4x32xf32> -> vector<4x4x128xf32>
    %12 = vector.shape_cast %11 : vector<4x4x128xf32> to vector<16x128xf32>
    %c0_23 = arith.constant 0 : index
    %c0_24 = arith.constant 0 : index
    %13 = vector.load %arg3[%c0_23, %c0_24] : memref<128x128xf32, #tpu.memory_space<vmem>>, vector<128x128xf32>
    %cst_25 = arith.constant dense<0.000000e+00> : vector<16x128xf32>
    %14 = tpu.matmul %12, %13, %cst_25 {dimension_numbers = #tpu.dot_dimension_numbers<[1], [0], [0], [1], [0, 0, 1, 1], [], []>} : vector<16x128xf32>, vector<128x128xf32>, vector<16x128xf32> -> vector<16x128xf32>
    %c0_26 = arith.constant 0 : index
    %c0_27 = arith.constant 0 : index
    %15 = vector.load %arg4[%c0_26, %c0_27] : memref<1x128xf32, #tpu.memory_space<vmem>>, vector<1x128xf32>
    %16 = vector.broadcast %15 : vector<1x128xf32> to vector<16x128xf32>
    %17 = arith.addf %14, %16 : vector<16x128xf32>
    %cst_28 = arith.constant 0.000000e+00 : f32
    %18 = vector.broadcast %cst_28 : f32 to vector<16x128xf32>
    %19 = arith.cmpf ogt, %17, %18 : vector<16x128xf32>
    %cst_29 = arith.constant 1.000000e-01 : f32
    %20 = vector.broadcast %cst_29 : f32 to vector<16x128xf32>
    %21 = arith.mulf %20, %17 : vector<16x128xf32>
    %22 = arith.select %19, %17, %21 : vector<16x128xi1>, vector<16x128xf32>
    %23 = vector.shape_cast %22 : vector<16x128xf32> to vector<4x4x128xf32>
    %c0_30 = arith.constant 0 : index
    %c0_31 = arith.constant 0 : index
    %c0_32 = arith.constant 0 : index
    %c0_33 = arith.constant 0 : index
    %24 = vector.load %arg2[%c0_30, %c0_31, %c0_32, %c0_33] : memref<1x8x4x64xf32, #tpu.memory_space<vmem>>, vector<1x8x4x64xf32>
    %25 = vector.shape_cast %24 : vector<1x8x4x64xf32> to vector<8x4x64xf32>
    %26 = vector.shape_cast %25 : vector<8x4x64xf32> to vector<4x2x4x64xf32>
    %27 = vector.extract_strided_slice %26 {offsets = [0, 0, 0, 0], sizes = [4, 1, 4, 64], strides = [1, 1, 1, 1]} : vector<4x2x4x64xf32> to vector<4x1x4x64xf32>
    %28 = vector.shape_cast %27 : vector<4x1x4x64xf32> to vector<4x4x64xf32>
    %29 = vector.extract_strided_slice %26 {offsets = [0, 1, 0, 0], sizes = [4, 1, 4, 64], strides = [1, 1, 1, 1]} : vector<4x2x4x64xf32> to vector<4x1x4x64xf32>
    %30 = vector.shape_cast %29 : vector<4x1x4x64xf32> to vector<4x4x64xf32>
    %cst_34 = arith.constant 0.000000e+00 : f32
    %31 = vector.broadcast %cst_34 : f32 to vector<1x1x6x128xf32>
    %c0_35 = arith.constant 0 : index
    %c0_36 = arith.constant 0 : index
    %c0_37 = arith.constant 0 : index
    %c0_38 = arith.constant 0 : index
    %32 = vector.load %arg9[%c0_35, %c0_36, %c0_37, %c0_38] : memref<5x2x6x128xf32, #tpu.memory_space<vmem>>, vector<1x1x6x128xf32>
    tpu.vector_store %arg9[%c0_35, %c0_36, %c0_37, %c0_38], %31 {strides = array<i32>} : memref<5x2x6x128xf32, #tpu.memory_space<vmem>>, vector<1x1x6x128xf32>,
    %cst_39 = arith.constant 0.000000e+00 : f32
    %33 = vector.broadcast %cst_39 : f32 to vector<1x1x6x128xf32>
    %c4_40 = arith.constant 4 : index
    %c1_41 = arith.constant 1 : index
    %c0_42 = arith.constant 0 : index
    %c0_43 = arith.constant 0 : index
    %34 = vector.load %arg9[%c4_40, %c1_41, %c0_42, %c0_43] : memref<5x2x6x128xf32, #tpu.memory_space<vmem>>, vector<1x1x6x128xf32>
    tpu.vector_store %arg9[%c4_40, %c1_41, %c0_42, %c0_43], %33 {strides = array<i32>} : memref<5x2x6x128xf32, #tpu.memory_space<vmem>>, vector<1x1x6x128xf32>,
    %cst_44 = arith.constant 0.000000e+00 : f32
    %35 = vector.broadcast %cst_44 : f32 to vector<5x2x1x128xf32>
    %c0_45 = arith.constant 0 : index
    %c0_46 = arith.constant 0 : index
    %c0_47 = arith.constant 0 : index
    %c0_48 = arith.constant 0 : index
    %36 = vector.load %arg9[%c0_45, %c0_46, %c0_47, %c0_48] : memref<5x2x6x128xf32, #tpu.memory_space<vmem>>, vector<5x2x1x128xf32>
    tpu.vector_store %arg9[%c0_45, %c0_46, %c0_47, %c0_48], %35 {strides = array<i32>} : memref<5x2x6x128xf32, #tpu.memory_space<vmem>>, vector<5x2x1x128xf32>,
    %cst_49 = arith.constant 0.000000e+00 : f32
    %37 = vector.broadcast %cst_49 : f32 to vector<5x2x1x128xf32>
    %c0_50 = arith.constant 0 : index
    %c0_51 = arith.constant 0 : index
    %c5 = arith.constant 5 : index
    %c0_52 = arith.constant 0 : index
    %38 = vector.load %arg9[%c0_50, %c0_51, %c5, %c0_52] : memref<5x2x6x128xf32, #tpu.memory_space<vmem>>, vector<5x2x1x128xf32>
    tpu.vector_store %arg9[%c0_50, %c0_51, %c5, %c0_52], %37 {strides = array<i32>} : memref<5x2x6x128xf32, #tpu.memory_space<vmem>>, vector<5x2x1x128xf32>,
    %39 = vector.extract_strided_slice %23 {offsets = [0, 0, 0], sizes = [4, 4, 32], strides = [1, 1, 1]} : vector<4x4x128xf32> to vector<4x4x32xf32>
    %40 = vector.extract_strided_slice %28 {offsets = [0, 0, 0], sizes = [4, 4, 32], strides = [1, 1, 1]} : vector<4x4x64xf32> to vector<4x4x32xf32>
    %41 = vector.extract_strided_slice %23 {offsets = [0, 0, 32], sizes = [4, 4, 32], strides = [1, 1, 1]} : vector<4x4x128xf32> to vector<4x4x32xf32>
    %42 = vector.extract_strided_slice %28 {offsets = [0, 0, 32], sizes = [4, 4, 32], strides = [1, 1, 1]} : vector<4x4x64xf32> to vector<4x4x32xf32>
    %43 = tpu.concatenate %39, %40, %41, %42 in 2 : vector<4x4x32xf32>, vector<4x4x32xf32>, vector<4x4x32xf32>, vector<4x4x32xf32> -> vector<4x4x128xf32>
    %44 = vector.extract_strided_slice %23 {offsets = [0, 0, 64], sizes = [4, 4, 32], strides = [1, 1, 1]} : vector<4x4x128xf32> to vector<4x4x32xf32>
    %45 = vector.extract_strided_slice %30 {offsets = [0, 0, 0], sizes = [4, 4, 32], strides = [1, 1, 1]} : vector<4x4x64xf32> to vector<4x4x32xf32>
    %46 = vector.extract_strided_slice %23 {offsets = [0, 0, 96], sizes = [4, 4, 32], strides = [1, 1, 1]} : vector<4x4x128xf32> to vector<4x4x32xf32>
    %47 = vector.extract_strided_slice %30 {offsets = [0, 0, 32], sizes = [4, 4, 32], strides = [1, 1, 1]} : vector<4x4x64xf32> to vector<4x4x32xf32>
    %48 = tpu.concatenate %44, %45, %46, %47 in 2 : vector<4x4x32xf32>, vector<4x4x32xf32>, vector<4x4x32xf32>, vector<4x4x32xf32> -> vector<4x4x128xf32>
    %49 = vector.shape_cast %43 : vector<4x4x128xf32> to vector<4x1x4x128xf32>
    %c0_53 = arith.constant 0 : index
    %c1_54 = arith.constant 1 : index
    %c1_55 = arith.constant 1 : index
    %c0_56 = arith.constant 0 : index
    %50 = vector.load %arg9[%c0_53, %c1_54, %c1_55, %c0_56] : memref<5x2x6x128xf32, #tpu.memory_space<vmem>>, vector<4x1x4x128xf32>
    tpu.vector_store %arg9[%c0_53, %c1_54, %c1_55, %c0_56], %49 {strides = array<i32>} : memref<5x2x6x128xf32, #tpu.memory_space<vmem>>, vector<4x1x4x128xf32>,
    %51 = vector.shape_cast %48 : vector<4x4x128xf32> to vector<4x1x4x128xf32>
    %c1_57 = arith.constant 1 : index
    %c0_58 = arith.constant 0 : index
    %c1_59 = arith.constant 1 : index
    %c0_60 = arith.constant 0 : index
    %52 = vector.load %arg9[%c1_57, %c0_58, %c1_59, %c0_60] : memref<5x2x6x128xf32, #tpu.memory_space<vmem>>, vector<4x1x4x128xf32>
    tpu.vector_store %arg9[%c1_57, %c0_58, %c1_59, %c0_60], %51 {strides = array<i32>} : memref<5x2x6x128xf32, #tpu.memory_space<vmem>>, vector<4x1x4x128xf32>,
    %c0_61 = arith.constant 0 : index
    %c0_62 = arith.constant 0 : index
    %c0_63 = arith.constant 0 : index
    %c0_64 = arith.constant 0 : index
    %53 = vector.load %arg9[%c0_61, %c0_62, %c0_63, %c0_64] : memref<5x2x6x128xf32, #tpu.memory_space<vmem>>, vector<5x2x6x128xf32>
    %54 = vector.shape_cast %53 : vector<5x2x6x128xf32> to vector<10x6x128xf32>
    %55 = vector.extract_strided_slice %54 {offsets = [0, 0, 64], sizes = [10, 4, 64], strides = [1, 1, 1]} : vector<10x6x128xf32> to vector<10x4x64xf32>
    %56 = vector.extract_strided_slice %54 {offsets = [0, 1, 0], sizes = [10, 4, 128], strides = [1, 1, 1]} : vector<10x6x128xf32> to vector<10x4x128xf32>
    %57 = tpu.concatenate %55, %56 in 2 : vector<10x4x64xf32>, vector<10x4x128xf32> -> vector<10x4x192xf32>
    %58 = vector.extract_strided_slice %54 {offsets = [0, 1, 0], sizes = [10, 4, 128], strides = [1, 1, 1]} : vector<10x6x128xf32> to vector<10x4x128xf32>
    %59 = vector.extract_strided_slice %54 {offsets = [0, 2, 0], sizes = [10, 4, 64], strides = [1, 1, 1]} : vector<10x6x128xf32> to vector<10x4x64xf32>
    %60 = tpu.concatenate %58, %59 in 2 : vector<10x4x128xf32>, vector<10x4x64xf32> -> vector<10x4x192xf32>
    %61 = vector.shape_cast %57 : vector<10x4x192xf32> to vector<1x10x4x192xf32>
    %62 = vector.shape_cast %60 : vector<10x4x192xf32> to vector<1x10x4x192xf32>
    %63 = tpu.concatenate %61, %62 in 0 : vector<1x10x4x192xf32>, vector<1x10x4x192xf32> -> vector<2x10x4x192xf32>
    %cst_65 = arith.constant 0.000000e+00 : f32
    %64 = vector.broadcast %cst_65 : f32 to vector<64x32xf32>
    %65 = vector.extract_strided_slice %63 {offsets = [0, 0, 0, 0], sizes = [2, 8, 4, 192], strides = [1, 1, 1, 1]} : vector<2x10x4x192xf32> to vector<2x8x4x192xf32>
    %66 = vector.shape_cast %65 : vector<2x8x4x192xf32> to vector<64x192xf32>
    %c0_66 = arith.constant 0 : index
    %c0_67 = arith.constant 0 : index
    %c0_68 = arith.constant 0 : index
    %67 = vector.load %arg5[%c0_66, %c0_67, %c0_68] : memref<3x192x32xf32, #tpu.memory_space<vmem>>, vector<1x192x32xf32>
    %68 = vector.shape_cast %67 : vector<1x192x32xf32> to vector<192x32xf32>
    %cst_69 = arith.constant dense<0.000000e+00> : vector<64x32xf32>
    %69 = tpu.matmul %66, %68, %cst_69 {dimension_numbers = #tpu.dot_dimension_numbers<[1], [0], [0], [1], [0, 0, 1, 1], [], []>} : vector<64x192xf32>, vector<192x32xf32>, vector<64x32xf32> -> vector<64x32xf32>
    %70 = arith.addf %64, %69 : vector<64x32xf32>
    %71 = vector.extract_strided_slice %63 {offsets = [0, 1, 0, 0], sizes = [2, 8, 4, 192], strides = [1, 1, 1, 1]} : vector<2x10x4x192xf32> to vector<2x8x4x192xf32>
    %72 = vector.shape_cast %71 : vector<2x8x4x192xf32> to vector<64x192xf32>
    %c1_70 = arith.constant 1 : index
    %c0_71 = arith.constant 0 : index
    %c0_72 = arith.constant 0 : index
    %73 = vector.load %arg5[%c1_70, %c0_71, %c0_72] : memref<3x192x32xf32, #tpu.memory_space<vmem>>, vector<1x192x32xf32>
    %74 = vector.shape_cast %73 : vector<1x192x32xf32> to vector<192x32xf32>
    %cst_73 = arith.constant dense<0.000000e+00> : vector<64x32xf32>
    %75 = tpu.matmul %72, %74, %cst_73 {dimension_numbers = #tpu.dot_dimension_numbers<[1], [0], [0], [1], [0, 0, 1, 1], [], []>} : vector<64x192xf32>, vector<192x32xf32>, vector<64x32xf32> -> vector<64x32xf32>
    %76 = arith.addf %70, %75 : vector<64x32xf32>
    %77 = vector.extract_strided_slice %63 {offsets = [0, 2, 0, 0], sizes = [2, 8, 4, 192], strides = [1, 1, 1, 1]} : vector<2x10x4x192xf32> to vector<2x8x4x192xf32>
    %78 = vector.shape_cast %77 : vector<2x8x4x192xf32> to vector<64x192xf32>
    %c2 = arith.constant 2 : index
    %c0_74 = arith.constant 0 : index
    %c0_75 = arith.constant 0 : index
    %79 = vector.load %arg5[%c2, %c0_74, %c0_75] : memref<3x192x32xf32, #tpu.memory_space<vmem>>, vector<1x192x32xf32>
    %80 = vector.shape_cast %79 : vector<1x192x32xf32> to vector<192x32xf32>
    %cst_76 = arith.constant dense<0.000000e+00> : vector<64x32xf32>
    %81 = tpu.matmul %78, %80, %cst_76 {dimension_numbers = #tpu.dot_dimension_numbers<[1], [0], [0], [1], [0, 0, 1, 1], [], []>} : vector<64x192xf32>, vector<192x32xf32>, vector<64x32xf32> -> vector<64x32xf32>
    %82 = arith.addf %76, %81 : vector<64x32xf32>
    %c0_77 = arith.constant 0 : index
    %c0_78 = arith.constant 0 : index
    %83 = vector.load %arg6[%c0_77, %c0_78] : memref<1x32xf32, #tpu.memory_space<vmem>>, vector<1x32xf32>
    %84 = vector.broadcast %83 : vector<1x32xf32> to vector<64x32xf32>
    %85 = arith.addf %82, %84 : vector<64x32xf32>
    %cst_79 = arith.constant 0.000000e+00 : f32
    %86 = vector.broadcast %cst_79 : f32 to vector<64x32xf32>
    %87 = arith.cmpf ogt, %85, %86 : vector<64x32xf32>
    %cst_80 = arith.constant 1.000000e-01 : f32
    %88 = vector.broadcast %cst_80 : f32 to vector<64x32xf32>
    %89 = arith.mulf %88, %85 : vector<64x32xf32>
    %90 = arith.select %87, %85, %89 : vector<64x32xi1>, vector<64x32xf32>
    %91 = vector.shape_cast %90 : vector<64x32xf32> to vector<2x8x4x32xf32>
    %92 = vector.extract_strided_slice %91 {offsets = [0, 0, 0, 0], sizes = [1, 8, 4, 32], strides = [1, 1, 1, 1]} : vector<2x8x4x32xf32> to vector<1x8x4x32xf32>
    %93 = vector.shape_cast %92 : vector<1x8x4x32xf32> to vector<8x4x32xf32>
    %94 = vector.extract_strided_slice %91 {offsets = [1, 0, 0, 0], sizes = [1, 8, 4, 32], strides = [1, 1, 1, 1]} : vector<2x8x4x32xf32> to vector<1x8x4x32xf32>
    %95 = vector.shape_cast %94 : vector<1x8x4x32xf32> to vector<8x4x32xf32>
    %96 = tpu.concatenate %93, %95 in 2 : vector<8x4x32xf32>, vector<8x4x32xf32> -> vector<8x4x64xf32>
    %c0_81 = arith.constant 0 : index
    %c0_82 = arith.constant 0 : index
    %c0_83 = arith.constant 0 : index
    %c0_84 = arith.constant 0 : index
    %97 = vector.load %arg7[%c0_81, %c0_82, %c0_83, %c0_84] : memref<1x8x4x64xf32, #tpu.memory_space<vmem>>, vector<1x8x4x64xf32>
    %98 = vector.shape_cast %97 : vector<1x8x4x64xf32> to vector<8x4x64xf32>
    %99 = vector.shape_cast %96 : vector<8x4x64xf32> to vector<1x8x4x64xf32>
    tpu.vector_store %arg7[%c0_81, %c0_82, %c0_83, %c0_84], %99 {strides = array<i32>} : memref<1x8x4x64xf32, #tpu.memory_space<vmem>>, vector<1x8x4x64xf32>,
    return
  }
  func.func @transform_0(%arg0: i32) -> (i32, i32, i32, i32) {
    %c0_i32 = arith.constant 0 : i32
    %c0_i32_0 = arith.constant 0 : i32
    %c0_i32_1 = arith.constant 0 : i32
    %c0_i32_2 = arith.constant 0 : i32
    return %arg0, %c0_i32, %c0_i32_0, %c0_i32_1 : i32, i32, i32, i32
  }
  func.func @transform_1(%arg0: i32) -> (i32, i32, i32, i32) {
    %c0_i32 = arith.constant 0 : i32
    %c0_i32_0 = arith.constant 0 : i32
    %c0_i32_1 = arith.constant 0 : i32
    %c0_i32_2 = arith.constant 0 : i32
    return %arg0, %c0_i32, %c0_i32_0, %c0_i32_1 : i32, i32, i32, i32
  }
  func.func @transform_2(%arg0: i32) -> (i32, i32) {
    %c0_i32 = arith.constant 0 : i32
    %c0_i32_0 = arith.constant 0 : i32
    %c0_i32_1 = arith.constant 0 : i32
    return %c0_i32, %c0_i32_0 : i32, i32
  }
  func.func @transform_3(%arg0: i32) -> (i32, i32) {
    %c0_i32 = arith.constant 0 : i32
    %c0_i32_0 = arith.constant 0 : i32
    %c0_i32_1 = arith.constant 0 : i32
    return %c0_i32, %c0_i32_0 : i32, i32
  }
  func.func @transform_4(%arg0: i32) -> (i32, i32, i32) {
    %c0_i32 = arith.constant 0 : i32
    %c0_i32_0 = arith.constant 0 : i32
    %c0_i32_1 = arith.constant 0 : i32
    %c0_i32_2 = arith.constant 0 : i32
    return %c0_i32, %c0_i32_0, %c0_i32_1 : i32, i32, i32
  }
  func.func @transform_5(%arg0: i32) -> (i32, i32) {
    %c0_i32 = arith.constant 0 : i32
    %c0_i32_0 = arith.constant 0 : i32
    %c0_i32_1 = arith.constant 0 : i32
    return %c0_i32, %c0_i32_0 : i32, i32
  }
  func.func @transform_6(%arg0: i32) -> (i32, i32, i32, i32) {
    %c0_i32 = arith.constant 0 : i32
    %c0_i32_0 = arith.constant 0 : i32
    %c0_i32_1 = arith.constant 0 : i32
    %c0_i32_2 = arith.constant 0 : i32
    return %arg0, %c0_i32, %c0_i32_0, %c0_i32_1 : i32, i32, i32, i32
  }
}

module attributes {stable_mosaic.version = 11 : i64} {
  func.func @_decoder_level_kernel(%arg0: i32, %arg1: memref<1x8x8x32xf32, #tpu.memory_space<vmem>>, %arg2: memref<1x16x8x64xf32, #tpu.memory_space<vmem>>, %arg3: memref<128x128xf32, #tpu.memory_space<vmem>>, %arg4: memref<1x128xf32, #tpu.memory_space<vmem>>, %arg5: memref<3x192x32xf32, #tpu.memory_space<vmem>>, %arg6: memref<1x32xf32, #tpu.memory_space<vmem>>, %arg7: memref<32x4xf32, #tpu.memory_space<vmem>>, %arg8: memref<1x4xf32, #tpu.memory_space<vmem>>, %arg9: memref<1x16x8x8xf32, #tpu.memory_space<vmem>>, %arg10: memref<9x9x32xf32, #tpu.memory_space<vmem>>, %arg11: memref<9x2x10x128xf32, #tpu.memory_space<vmem>>) attributes {dimension_semantics = [#tpu.dimension_semantics<parallel>], iteration_bounds = array<i64: 2>, scalar_prefetch = 0 : i64, scratch_operands = 2 : i64, tpu.core_type = #tpu.core_type<tc>, window_params = [{transform_indices = @transform_0, window_bounds = array<i64: 1, 8, 8, 32>}, {transform_indices = @transform_1, window_bounds = array<i64: 1, 16, 8, 64>}, {pipeline_mode = #tpu.pipeline_mode<synchronous>, transform_indices = @transform_2, window_bounds = array<i64: 128, 128>}, {pipeline_mode = #tpu.pipeline_mode<synchronous>, transform_indices = @transform_3, window_bounds = array<i64: 1, 128>}, {pipeline_mode = #tpu.pipeline_mode<synchronous>, transform_indices = @transform_4, window_bounds = array<i64: 3, 192, 32>}, {pipeline_mode = #tpu.pipeline_mode<synchronous>, transform_indices = @transform_5, window_bounds = array<i64: 1, 32>}, {pipeline_mode = #tpu.pipeline_mode<synchronous>, transform_indices = @transform_6, window_bounds = array<i64: 32, 4>}, {pipeline_mode = #tpu.pipeline_mode<synchronous>, transform_indices = @transform_7, window_bounds = array<i64: 1, 4>}, {transform_indices = @transform_8, window_bounds = array<i64: 1, 16, 8, 8>}]} {
    %c0 = arith.constant 0 : index
    %c0_0 = arith.constant 0 : index
    %c0_1 = arith.constant 0 : index
    %c0_2 = arith.constant 0 : index
    %0 = vector.load %arg1[%c0, %c0_0, %c0_1, %c0_2] : memref<1x8x8x32xf32, #tpu.memory_space<vmem>>, vector<1x8x8x32xf32>
    %1 = vector.shape_cast %0 : vector<1x8x8x32xf32> to vector<8x8x32xf32>
    %c0_3 = arith.constant 0 : index
    %c0_4 = arith.constant 0 : index
    %c0_5 = arith.constant 0 : index
    %2 = vector.load %arg10[%c0_3, %c0_4, %c0_5] : memref<9x9x32xf32, #tpu.memory_space<vmem>>, vector<8x8x32xf32>
    tpu.vector_store %arg10[%c0_3, %c0_4, %c0_5], %1 {strides = array<i32>} : memref<9x9x32xf32, #tpu.memory_space<vmem>>, vector<8x8x32xf32>,
    %cst = arith.constant 0.000000e+00 : f32
    %3 = vector.broadcast %cst : f32 to vector<1x9x32xf32>
    %c8 = arith.constant 8 : index
    %c0_6 = arith.constant 0 : index
    %c0_7 = arith.constant 0 : index
    %4 = vector.load %arg10[%c8, %c0_6, %c0_7] : memref<9x9x32xf32, #tpu.memory_space<vmem>>, vector<1x9x32xf32>
    tpu.vector_store %arg10[%c8, %c0_6, %c0_7], %3 {strides = array<i32>} : memref<9x9x32xf32, #tpu.memory_space<vmem>>, vector<1x9x32xf32>,
    %cst_8 = arith.constant 0.000000e+00 : f32
    %5 = vector.broadcast %cst_8 : f32 to vector<8x1x32xf32>
    %c0_9 = arith.constant 0 : index
    %c8_10 = arith.constant 8 : index
    %c0_11 = arith.constant 0 : index
    %6 = vector.load %arg10[%c0_9, %c8_10, %c0_11] : memref<9x9x32xf32, #tpu.memory_space<vmem>>, vector<8x1x32xf32>
    tpu.vector_store %arg10[%c0_9, %c8_10, %c0_11], %5 {strides = array<i32>} : memref<9x9x32xf32, #tpu.memory_space<vmem>>, vector<8x1x32xf32>,
    %c0_12 = arith.constant 0 : index
    %c0_13 = arith.constant 0 : index
    %c0_14 = arith.constant 0 : index
    %7 = vector.load %arg10[%c0_12, %c0_13, %c0_14] : memref<9x9x32xf32, #tpu.memory_space<vmem>>, vector<8x8x32xf32>
    %c1 = arith.constant 1 : index
    %c0_15 = arith.constant 0 : index
    %c0_16 = arith.constant 0 : index
    %8 = vector.load %arg10[%c1, %c0_15, %c0_16] : memref<9x9x32xf32, #tpu.memory_space<vmem>>, vector<8x8x32xf32>
    %c0_17 = arith.constant 0 : index
    %c1_18 = arith.constant 1 : index
    %c0_19 = arith.constant 0 : index
    %9 = vector.load %arg10[%c0_17, %c1_18, %c0_19] : memref<9x9x32xf32, #tpu.memory_space<vmem>>, vector<8x8x32xf32>
    %c1_20 = arith.constant 1 : index
    %c1_21 = arith.constant 1 : index
    %c0_22 = arith.constant 0 : index
    %10 = vector.load %arg10[%c1_20, %c1_21, %c0_22] : memref<9x9x32xf32, #tpu.memory_space<vmem>>, vector<8x8x32xf32>
    %11 = tpu.concatenate %10, %8, %9, %7 in 2 : vector<8x8x32xf32>, vector<8x8x32xf32>, vector<8x8x32xf32>, vector<8x8x32xf32> -> vector<8x8x128xf32>
    %12 = vector.shape_cast %11 : vector<8x8x128xf32> to vector<64x128xf32>
    %c0_23 = arith.constant 0 : index
    %c0_24 = arith.constant 0 : index
    %13 = vector.load %arg3[%c0_23, %c0_24] : memref<128x128xf32, #tpu.memory_space<vmem>>, vector<128x128xf32>
    %cst_25 = arith.constant dense<0.000000e+00> : vector<64x128xf32>
    %14 = tpu.matmul %12, %13, %cst_25 {dimension_numbers = #tpu.dot_dimension_numbers<[1], [0], [0], [1], [0, 0, 1, 1], [], []>} : vector<64x128xf32>, vector<128x128xf32>, vector<64x128xf32> -> vector<64x128xf32>
    %c0_26 = arith.constant 0 : index
    %c0_27 = arith.constant 0 : index
    %15 = vector.load %arg4[%c0_26, %c0_27] : memref<1x128xf32, #tpu.memory_space<vmem>>, vector<1x128xf32>
    %16 = vector.broadcast %15 : vector<1x128xf32> to vector<64x128xf32>
    %17 = arith.addf %14, %16 : vector<64x128xf32>
    %cst_28 = arith.constant 0.000000e+00 : f32
    %18 = vector.broadcast %cst_28 : f32 to vector<64x128xf32>
    %19 = arith.cmpf ogt, %17, %18 : vector<64x128xf32>
    %cst_29 = arith.constant 1.000000e-01 : f32
    %20 = vector.broadcast %cst_29 : f32 to vector<64x128xf32>
    %21 = arith.mulf %20, %17 : vector<64x128xf32>
    %22 = arith.select %19, %17, %21 : vector<64x128xi1>, vector<64x128xf32>
    %23 = vector.shape_cast %22 : vector<64x128xf32> to vector<8x8x128xf32>
    %c0_30 = arith.constant 0 : index
    %c0_31 = arith.constant 0 : index
    %c0_32 = arith.constant 0 : index
    %c0_33 = arith.constant 0 : index
    %24 = vector.load %arg2[%c0_30, %c0_31, %c0_32, %c0_33] : memref<1x16x8x64xf32, #tpu.memory_space<vmem>>, vector<1x16x8x64xf32>
    %25 = vector.shape_cast %24 : vector<1x16x8x64xf32> to vector<16x8x64xf32>
    %26 = vector.shape_cast %25 : vector<16x8x64xf32> to vector<8x2x8x64xf32>
    %27 = vector.extract_strided_slice %26 {offsets = [0, 0, 0, 0], sizes = [8, 1, 8, 64], strides = [1, 1, 1, 1]} : vector<8x2x8x64xf32> to vector<8x1x8x64xf32>
    %28 = vector.shape_cast %27 : vector<8x1x8x64xf32> to vector<8x8x64xf32>
    %29 = vector.extract_strided_slice %26 {offsets = [0, 1, 0, 0], sizes = [8, 1, 8, 64], strides = [1, 1, 1, 1]} : vector<8x2x8x64xf32> to vector<8x1x8x64xf32>
    %30 = vector.shape_cast %29 : vector<8x1x8x64xf32> to vector<8x8x64xf32>
    %cst_34 = arith.constant 0.000000e+00 : f32
    %31 = vector.broadcast %cst_34 : f32 to vector<1x1x10x128xf32>
    %c0_35 = arith.constant 0 : index
    %c0_36 = arith.constant 0 : index
    %c0_37 = arith.constant 0 : index
    %c0_38 = arith.constant 0 : index
    %32 = vector.load %arg11[%c0_35, %c0_36, %c0_37, %c0_38] : memref<9x2x10x128xf32, #tpu.memory_space<vmem>>, vector<1x1x10x128xf32>
    tpu.vector_store %arg11[%c0_35, %c0_36, %c0_37, %c0_38], %31 {strides = array<i32>} : memref<9x2x10x128xf32, #tpu.memory_space<vmem>>, vector<1x1x10x128xf32>,
    %cst_39 = arith.constant 0.000000e+00 : f32
    %33 = vector.broadcast %cst_39 : f32 to vector<1x1x10x128xf32>
    %c8_40 = arith.constant 8 : index
    %c1_41 = arith.constant 1 : index
    %c0_42 = arith.constant 0 : index
    %c0_43 = arith.constant 0 : index
    %34 = vector.load %arg11[%c8_40, %c1_41, %c0_42, %c0_43] : memref<9x2x10x128xf32, #tpu.memory_space<vmem>>, vector<1x1x10x128xf32>
    tpu.vector_store %arg11[%c8_40, %c1_41, %c0_42, %c0_43], %33 {strides = array<i32>} : memref<9x2x10x128xf32, #tpu.memory_space<vmem>>, vector<1x1x10x128xf32>,
    %cst_44 = arith.constant 0.000000e+00 : f32
    %35 = vector.broadcast %cst_44 : f32 to vector<9x2x1x128xf32>
    %c0_45 = arith.constant 0 : index
    %c0_46 = arith.constant 0 : index
    %c0_47 = arith.constant 0 : index
    %c0_48 = arith.constant 0 : index
    %36 = vector.load %arg11[%c0_45, %c0_46, %c0_47, %c0_48] : memref<9x2x10x128xf32, #tpu.memory_space<vmem>>, vector<9x2x1x128xf32>
    tpu.vector_store %arg11[%c0_45, %c0_46, %c0_47, %c0_48], %35 {strides = array<i32>} : memref<9x2x10x128xf32, #tpu.memory_space<vmem>>, vector<9x2x1x128xf32>,
    %cst_49 = arith.constant 0.000000e+00 : f32
    %37 = vector.broadcast %cst_49 : f32 to vector<9x2x1x128xf32>
    %c0_50 = arith.constant 0 : index
    %c0_51 = arith.constant 0 : index
    %c9 = arith.constant 9 : index
    %c0_52 = arith.constant 0 : index
    %38 = vector.load %arg11[%c0_50, %c0_51, %c9, %c0_52] : memref<9x2x10x128xf32, #tpu.memory_space<vmem>>, vector<9x2x1x128xf32>
    tpu.vector_store %arg11[%c0_50, %c0_51, %c9, %c0_52], %37 {strides = array<i32>} : memref<9x2x10x128xf32, #tpu.memory_space<vmem>>, vector<9x2x1x128xf32>,
    %39 = vector.extract_strided_slice %23 {offsets = [0, 0, 0], sizes = [8, 8, 32], strides = [1, 1, 1]} : vector<8x8x128xf32> to vector<8x8x32xf32>
    %40 = vector.extract_strided_slice %28 {offsets = [0, 0, 0], sizes = [8, 8, 32], strides = [1, 1, 1]} : vector<8x8x64xf32> to vector<8x8x32xf32>
    %41 = vector.extract_strided_slice %23 {offsets = [0, 0, 32], sizes = [8, 8, 32], strides = [1, 1, 1]} : vector<8x8x128xf32> to vector<8x8x32xf32>
    %42 = vector.extract_strided_slice %28 {offsets = [0, 0, 32], sizes = [8, 8, 32], strides = [1, 1, 1]} : vector<8x8x64xf32> to vector<8x8x32xf32>
    %43 = tpu.concatenate %39, %40, %41, %42 in 2 : vector<8x8x32xf32>, vector<8x8x32xf32>, vector<8x8x32xf32>, vector<8x8x32xf32> -> vector<8x8x128xf32>
    %44 = vector.extract_strided_slice %23 {offsets = [0, 0, 64], sizes = [8, 8, 32], strides = [1, 1, 1]} : vector<8x8x128xf32> to vector<8x8x32xf32>
    %45 = vector.extract_strided_slice %30 {offsets = [0, 0, 0], sizes = [8, 8, 32], strides = [1, 1, 1]} : vector<8x8x64xf32> to vector<8x8x32xf32>
    %46 = vector.extract_strided_slice %23 {offsets = [0, 0, 96], sizes = [8, 8, 32], strides = [1, 1, 1]} : vector<8x8x128xf32> to vector<8x8x32xf32>
    %47 = vector.extract_strided_slice %30 {offsets = [0, 0, 32], sizes = [8, 8, 32], strides = [1, 1, 1]} : vector<8x8x64xf32> to vector<8x8x32xf32>
    %48 = tpu.concatenate %44, %45, %46, %47 in 2 : vector<8x8x32xf32>, vector<8x8x32xf32>, vector<8x8x32xf32>, vector<8x8x32xf32> -> vector<8x8x128xf32>
    %49 = vector.shape_cast %43 : vector<8x8x128xf32> to vector<8x1x8x128xf32>
    %c0_53 = arith.constant 0 : index
    %c1_54 = arith.constant 1 : index
    %c1_55 = arith.constant 1 : index
    %c0_56 = arith.constant 0 : index
    %50 = vector.load %arg11[%c0_53, %c1_54, %c1_55, %c0_56] : memref<9x2x10x128xf32, #tpu.memory_space<vmem>>, vector<8x1x8x128xf32>
    tpu.vector_store %arg11[%c0_53, %c1_54, %c1_55, %c0_56], %49 {strides = array<i32>} : memref<9x2x10x128xf32, #tpu.memory_space<vmem>>, vector<8x1x8x128xf32>,
    %51 = vector.shape_cast %48 : vector<8x8x128xf32> to vector<8x1x8x128xf32>
    %c1_57 = arith.constant 1 : index
    %c0_58 = arith.constant 0 : index
    %c1_59 = arith.constant 1 : index
    %c0_60 = arith.constant 0 : index
    %52 = vector.load %arg11[%c1_57, %c0_58, %c1_59, %c0_60] : memref<9x2x10x128xf32, #tpu.memory_space<vmem>>, vector<8x1x8x128xf32>
    tpu.vector_store %arg11[%c1_57, %c0_58, %c1_59, %c0_60], %51 {strides = array<i32>} : memref<9x2x10x128xf32, #tpu.memory_space<vmem>>, vector<8x1x8x128xf32>,
    %c0_61 = arith.constant 0 : index
    %c0_62 = arith.constant 0 : index
    %c0_63 = arith.constant 0 : index
    %c0_64 = arith.constant 0 : index
    %53 = vector.load %arg11[%c0_61, %c0_62, %c0_63, %c0_64] : memref<9x2x10x128xf32, #tpu.memory_space<vmem>>, vector<9x2x10x128xf32>
    %54 = vector.shape_cast %53 : vector<9x2x10x128xf32> to vector<18x10x128xf32>
    %55 = vector.extract_strided_slice %54 {offsets = [0, 0, 64], sizes = [18, 8, 64], strides = [1, 1, 1]} : vector<18x10x128xf32> to vector<18x8x64xf32>
    %56 = vector.extract_strided_slice %54 {offsets = [0, 1, 0], sizes = [18, 8, 128], strides = [1, 1, 1]} : vector<18x10x128xf32> to vector<18x8x128xf32>
    %57 = tpu.concatenate %55, %56 in 2 : vector<18x8x64xf32>, vector<18x8x128xf32> -> vector<18x8x192xf32>
    %58 = vector.extract_strided_slice %54 {offsets = [0, 1, 0], sizes = [18, 8, 128], strides = [1, 1, 1]} : vector<18x10x128xf32> to vector<18x8x128xf32>
    %59 = vector.extract_strided_slice %54 {offsets = [0, 2, 0], sizes = [18, 8, 64], strides = [1, 1, 1]} : vector<18x10x128xf32> to vector<18x8x64xf32>
    %60 = tpu.concatenate %58, %59 in 2 : vector<18x8x128xf32>, vector<18x8x64xf32> -> vector<18x8x192xf32>
    %61 = vector.shape_cast %57 : vector<18x8x192xf32> to vector<1x18x8x192xf32>
    %62 = vector.shape_cast %60 : vector<18x8x192xf32> to vector<1x18x8x192xf32>
    %63 = tpu.concatenate %61, %62 in 0 : vector<1x18x8x192xf32>, vector<1x18x8x192xf32> -> vector<2x18x8x192xf32>
    %cst_65 = arith.constant 0.000000e+00 : f32
    %64 = vector.broadcast %cst_65 : f32 to vector<256x32xf32>
    %65 = vector.extract_strided_slice %63 {offsets = [0, 0, 0, 0], sizes = [2, 16, 8, 192], strides = [1, 1, 1, 1]} : vector<2x18x8x192xf32> to vector<2x16x8x192xf32>
    %66 = vector.shape_cast %65 : vector<2x16x8x192xf32> to vector<256x192xf32>
    %c0_66 = arith.constant 0 : index
    %c0_67 = arith.constant 0 : index
    %c0_68 = arith.constant 0 : index
    %67 = vector.load %arg5[%c0_66, %c0_67, %c0_68] : memref<3x192x32xf32, #tpu.memory_space<vmem>>, vector<1x192x32xf32>
    %68 = vector.shape_cast %67 : vector<1x192x32xf32> to vector<192x32xf32>
    %cst_69 = arith.constant dense<0.000000e+00> : vector<256x32xf32>
    %69 = tpu.matmul %66, %68, %cst_69 {dimension_numbers = #tpu.dot_dimension_numbers<[1], [0], [0], [1], [0, 0, 1, 1], [], []>} : vector<256x192xf32>, vector<192x32xf32>, vector<256x32xf32> -> vector<256x32xf32>
    %70 = arith.addf %64, %69 : vector<256x32xf32>
    %71 = vector.extract_strided_slice %63 {offsets = [0, 1, 0, 0], sizes = [2, 16, 8, 192], strides = [1, 1, 1, 1]} : vector<2x18x8x192xf32> to vector<2x16x8x192xf32>
    %72 = vector.shape_cast %71 : vector<2x16x8x192xf32> to vector<256x192xf32>
    %c1_70 = arith.constant 1 : index
    %c0_71 = arith.constant 0 : index
    %c0_72 = arith.constant 0 : index
    %73 = vector.load %arg5[%c1_70, %c0_71, %c0_72] : memref<3x192x32xf32, #tpu.memory_space<vmem>>, vector<1x192x32xf32>
    %74 = vector.shape_cast %73 : vector<1x192x32xf32> to vector<192x32xf32>
    %cst_73 = arith.constant dense<0.000000e+00> : vector<256x32xf32>
    %75 = tpu.matmul %72, %74, %cst_73 {dimension_numbers = #tpu.dot_dimension_numbers<[1], [0], [0], [1], [0, 0, 1, 1], [], []>} : vector<256x192xf32>, vector<192x32xf32>, vector<256x32xf32> -> vector<256x32xf32>
    %76 = arith.addf %70, %75 : vector<256x32xf32>
    %77 = vector.extract_strided_slice %63 {offsets = [0, 2, 0, 0], sizes = [2, 16, 8, 192], strides = [1, 1, 1, 1]} : vector<2x18x8x192xf32> to vector<2x16x8x192xf32>
    %78 = vector.shape_cast %77 : vector<2x16x8x192xf32> to vector<256x192xf32>
    %c2 = arith.constant 2 : index
    %c0_74 = arith.constant 0 : index
    %c0_75 = arith.constant 0 : index
    %79 = vector.load %arg5[%c2, %c0_74, %c0_75] : memref<3x192x32xf32, #tpu.memory_space<vmem>>, vector<1x192x32xf32>
    %80 = vector.shape_cast %79 : vector<1x192x32xf32> to vector<192x32xf32>
    %cst_76 = arith.constant dense<0.000000e+00> : vector<256x32xf32>
    %81 = tpu.matmul %78, %80, %cst_76 {dimension_numbers = #tpu.dot_dimension_numbers<[1], [0], [0], [1], [0, 0, 1, 1], [], []>} : vector<256x192xf32>, vector<192x32xf32>, vector<256x32xf32> -> vector<256x32xf32>
    %82 = arith.addf %76, %81 : vector<256x32xf32>
    %c0_77 = arith.constant 0 : index
    %c0_78 = arith.constant 0 : index
    %83 = vector.load %arg6[%c0_77, %c0_78] : memref<1x32xf32, #tpu.memory_space<vmem>>, vector<1x32xf32>
    %84 = vector.broadcast %83 : vector<1x32xf32> to vector<256x32xf32>
    %85 = arith.addf %82, %84 : vector<256x32xf32>
    %cst_79 = arith.constant 0.000000e+00 : f32
    %86 = vector.broadcast %cst_79 : f32 to vector<256x32xf32>
    %87 = arith.cmpf ogt, %85, %86 : vector<256x32xf32>
    %cst_80 = arith.constant 1.000000e-01 : f32
    %88 = vector.broadcast %cst_80 : f32 to vector<256x32xf32>
    %89 = arith.mulf %88, %85 : vector<256x32xf32>
    %90 = arith.select %87, %85, %89 : vector<256x32xi1>, vector<256x32xf32>
    %c0_81 = arith.constant 0 : index
    %c0_82 = arith.constant 0 : index
    %91 = vector.load %arg7[%c0_81, %c0_82] : memref<32x4xf32, #tpu.memory_space<vmem>>, vector<32x4xf32>
    %cst_83 = arith.constant dense<0.000000e+00> : vector<256x4xf32>
    %92 = tpu.matmul %90, %91, %cst_83 {dimension_numbers = #tpu.dot_dimension_numbers<[1], [0], [0], [1], [0, 0, 1, 1], [], []>} : vector<256x32xf32>, vector<32x4xf32>, vector<256x4xf32> -> vector<256x4xf32>
    %c0_84 = arith.constant 0 : index
    %c0_85 = arith.constant 0 : index
    %93 = vector.load %arg8[%c0_84, %c0_85] : memref<1x4xf32, #tpu.memory_space<vmem>>, vector<1x4xf32>
    %94 = vector.broadcast %93 : vector<1x4xf32> to vector<256x4xf32>
    %95 = arith.addf %92, %94 : vector<256x4xf32>
    %96 = vector.shape_cast %95 : vector<256x4xf32> to vector<2x16x8x4xf32>
    %97 = vector.extract_strided_slice %96 {offsets = [0, 0, 0, 0], sizes = [1, 16, 8, 4], strides = [1, 1, 1, 1]} : vector<2x16x8x4xf32> to vector<1x16x8x4xf32>
    %98 = vector.shape_cast %97 : vector<1x16x8x4xf32> to vector<16x8x4xf32>
    %99 = vector.extract_strided_slice %96 {offsets = [1, 0, 0, 0], sizes = [1, 16, 8, 4], strides = [1, 1, 1, 1]} : vector<2x16x8x4xf32> to vector<1x16x8x4xf32>
    %100 = vector.shape_cast %99 : vector<1x16x8x4xf32> to vector<16x8x4xf32>
    %101 = tpu.concatenate %98, %100 in 2 : vector<16x8x4xf32>, vector<16x8x4xf32> -> vector<16x8x8xf32>
    %c0_86 = arith.constant 0 : index
    %c0_87 = arith.constant 0 : index
    %c0_88 = arith.constant 0 : index
    %c0_89 = arith.constant 0 : index
    %102 = vector.load %arg9[%c0_86, %c0_87, %c0_88, %c0_89] : memref<1x16x8x8xf32, #tpu.memory_space<vmem>>, vector<1x16x8x8xf32>
    %103 = vector.shape_cast %102 : vector<1x16x8x8xf32> to vector<16x8x8xf32>
    %104 = vector.shape_cast %101 : vector<16x8x8xf32> to vector<1x16x8x8xf32>
    tpu.vector_store %arg9[%c0_86, %c0_87, %c0_88, %c0_89], %104 {strides = array<i32>} : memref<1x16x8x8xf32, #tpu.memory_space<vmem>>, vector<1x16x8x8xf32>,
    return
  }
  func.func @transform_0(%arg0: i32) -> (i32, i32, i32, i32) {
    %c0_i32 = arith.constant 0 : i32
    %c0_i32_0 = arith.constant 0 : i32
    %c0_i32_1 = arith.constant 0 : i32
    %c0_i32_2 = arith.constant 0 : i32
    return %arg0, %c0_i32, %c0_i32_0, %c0_i32_1 : i32, i32, i32, i32
  }
  func.func @transform_1(%arg0: i32) -> (i32, i32, i32, i32) {
    %c0_i32 = arith.constant 0 : i32
    %c0_i32_0 = arith.constant 0 : i32
    %c0_i32_1 = arith.constant 0 : i32
    %c0_i32_2 = arith.constant 0 : i32
    return %arg0, %c0_i32, %c0_i32_0, %c0_i32_1 : i32, i32, i32, i32
  }
  func.func @transform_2(%arg0: i32) -> (i32, i32) {
    %c0_i32 = arith.constant 0 : i32
    %c0_i32_0 = arith.constant 0 : i32
    %c0_i32_1 = arith.constant 0 : i32
    return %c0_i32, %c0_i32_0 : i32, i32
  }
  func.func @transform_3(%arg0: i32) -> (i32, i32) {
    %c0_i32 = arith.constant 0 : i32
    %c0_i32_0 = arith.constant 0 : i32
    %c0_i32_1 = arith.constant 0 : i32
    return %c0_i32, %c0_i32_0 : i32, i32
  }
  func.func @transform_4(%arg0: i32) -> (i32, i32, i32) {
    %c0_i32 = arith.constant 0 : i32
    %c0_i32_0 = arith.constant 0 : i32
    %c0_i32_1 = arith.constant 0 : i32
    %c0_i32_2 = arith.constant 0 : i32
    return %c0_i32, %c0_i32_0, %c0_i32_1 : i32, i32, i32
  }
  func.func @transform_5(%arg0: i32) -> (i32, i32) {
    %c0_i32 = arith.constant 0 : i32
    %c0_i32_0 = arith.constant 0 : i32
    %c0_i32_1 = arith.constant 0 : i32
    return %c0_i32, %c0_i32_0 : i32, i32
  }
  func.func @transform_6(%arg0: i32) -> (i32, i32) {
    %c0_i32 = arith.constant 0 : i32
    %c0_i32_0 = arith.constant 0 : i32
    %c0_i32_1 = arith.constant 0 : i32
    return %c0_i32, %c0_i32_0 : i32, i32
  }
  func.func @transform_7(%arg0: i32) -> (i32, i32) {
    %c0_i32 = arith.constant 0 : i32
    %c0_i32_0 = arith.constant 0 : i32
    %c0_i32_1 = arith.constant 0 : i32
    return %c0_i32, %c0_i32_0 : i32, i32
  }
  func.func @transform_8(%arg0: i32) -> (i32, i32, i32, i32) {
    %c0_i32 = arith.constant 0 : i32
    %c0_i32_0 = arith.constant 0 : i32
    %c0_i32_1 = arith.constant 0 : i32
    %c0_i32_2 = arith.constant 0 : i32
    return %arg0, %c0_i32, %c0_i32_0, %c0_i32_1 : i32, i32, i32, i32
  }
}

</mosaic_0001>

<llo_original>
// kernel: unet_decoder_forward.2
$region0: #{unet_decoder_forward.2}
  #allocation0 [shape = 'u32[]', space=smem, size = 0x4, offset = 0x4, fixed_abs, tag = 'smem constant byte address 0x4 - core index']
  #allocation1 [shape = 'u32[144,128]{1,0:T(1,128)}', space=vmem, size = 0x12000, scoped, tag = 'internal scratch']
  #allocation2 [shape = 'f32[5,5,32]{2,1,0:T(8,128)}', space=vmem, size = 0x5000, scoped, tag = 'scratch operand']
  #allocation3 [shape = 'f32[5,2,6,128]{3,2,1,0:T(8,128)}', space=vmem, size = 0xa000, scoped, tag = 'scratch operand']
  %s0 = inlined_call_operand.vmem [shape: f32[2,4,4,32], index: 0, kind: input, shape index: {}]
  %s1 = inlined_call_operand.vmem [shape: f32[2,8,4,64], index: 1, kind: input, shape index: {}]
  %s2 = inlined_call_operand.vmem [shape: f32[128,128], index: 2, kind: input, shape index: {}]
  %s3 = inlined_call_operand.vmem [shape: f32[1,128], index: 3, kind: input, shape index: {}]
  %s4 = inlined_call_operand.vmem [shape: f32[3,192,32], index: 4, kind: input, shape index: {}]
  %s5 = inlined_call_operand.vmem [shape: f32[1,32], index: 5, kind: input, shape index: {}]
  %s6 = inlined_call_operand.vmem [shape: f32[2,8,4,64], index: 6, kind: output, shape index: {}]
  %s7 = sld [smem:[#allocation0]]
  $region57: #{unet_decoder_forward.2} parent=0
    _
  %s9 = ssub.s32 1, %s7
  %s10 = scalar_select 0, %s9, %s7
  loop: start=0, step=1, limit=4
  $region2: #{unet_decoder_forward.2} parent=0 // loop_pre_header
    _
  $region3: #{unet_decoder_forward.2} parent=0 // loop_header
    %s12 = sphi 0, %s16
    %p13 = scmp.ge.s32.totalorder %s12, 4
    %s22 = sphi 0, %s24
    %s25 = sphi 0, %s22
    %s26 = sphi 0, %s25
    %s42 = sphi 0, %s26
    %s48 = sphi 0, %s50
    %s51 = sphi 0, %s48
    %s52 = sphi 0, %s51
    %s68 = sphi 0, %s52
    %s72 = sphi 0, %s72
    %s74 = sphi 0, %s72
    %s75 = sphi 0, %s74
    %s89 = sphi 0, %s75
    %s93 = sphi 0, %s93
    %s95 = sphi 0, %s93
    %s96 = sphi 0, %s95
    %s110 = sphi 0, %s96
    %s114 = sphi 0, %s114
    %s116 = sphi 0, %s114
    %s117 = sphi 0, %s116
    %s131 = sphi 0, %s117
    %s135 = sphi 0, %s135
    %s137 = sphi 0, %s135
    %s138 = sphi 0, %s137
    %s152 = sphi 0, %s138
    %s158 = sphi 0, %s160
    %s161 = sphi 0, %s158
    %s162 = sphi 0, %s161
    %s178 = sphi 0, %s162
  $region4: #{unet_decoder_forward.2} parent=0 // loop_header_branch
    %15 = sbr.rel (%p13) target = $region8
  $region5: #{unet_decoder_forward.2} parent=0 // loop_body
    %s17 = ssub.s32 %s12, 1
    %s18 = ssub.s32 %s12, 2
    %s19 = sadd.s32 %s12, 1
    %s20 = ssub.s32 %s12, %s19
    %p21 = scmp.eq.s32.totalorder %s20, 0
    %s23 = sadd.s32 %s22, 1
    %s24 = scalar_select %p21, %s22, %s23
    %p27 = pneg %p21
    %p28 = scmp.eq.s32.totalorder %s12, 1
    %p29 = por %p27, %p28
    %p30 = scmp.ne.s32.totalorder %s22, %s25
    %p31 = scmp.eq.s32.totalorder %s12, 0
    %p32 = por %p30, %p31
    %p33 = scmp.ne.s32.totalorder %s22, %s25
    %p34 = scmp.eq.s32.totalorder %s17, 1
    %p35 = por %p33, %p34
    %p36 = scmp.ne.s32.totalorder %s25, %s26
    %p37 = scmp.eq.s32.totalorder %s17, 0
    %p38 = por %p36, %p37
    %p39 = scmp.ne.s32.totalorder %s25, %s26
    %p40 = scmp.eq.s32.totalorder %s18, 1
    %p41 = por %p39, %p40
    %p43 = scmp.ne.s32.totalorder %s26, %s42
    %p44 = scmp.eq.s32.totalorder %s18, 0
    %p45 = por %p43, %p44
    %s46 = ssub.s32 %s12, %s19
    %p47 = scmp.eq.s32.totalorder %s46, 0
    %s49 = sadd.s32 %s48, 1
    %s50 = scalar_select %p47, %s48, %s49
    %p53 = pneg %p47
    %p54 = scmp.eq.s32.totalorder %s12, 1
    %p55 = por %p53, %p54
    %p56 = scmp.ne.s32.totalorder %s48, %s51
    %p57 = scmp.eq.s32.totalorder %s12, 0
    %p58 = por %p56, %p57
    %p59 = scmp.ne.s32.totalorder %s48, %s51
    %p60 = scmp.eq.s32.totalorder %s17, 1
    %p61 = por %p59, %p60
    %p62 = scmp.ne.s32.totalorder %s51, %s52
    %p63 = scmp.eq.s32.totalorder %s17, 0
    %p64 = por %p62, %p63
    %p65 = scmp.ne.s32.totalorder %s51, %s52
    %p66 = scmp.eq.s32.totalorder %s18, 1
    %p67 = por %p65, %p66
    %p69 = scmp.ne.s32.totalorder %s52, %s68
    %p70 = scmp.eq.s32.totalorder %s18, 0
    %p71 = por %p69, %p70
    %s73 = sadd.s32 %s72, 1
    %p76 = scmp.eq.s32.totalorder %s12, 1
    %p77 = scmp.ne.s32.totalorder %s72, %s74
    %p78 = scmp.eq.s32.totalorder %s12, 0
    %p79 = por %p77, %p78
    %p80 = scmp.ne.s32.totalorder %s72, %s74
    %p81 = scmp.eq.s32.totalorder %s17, 1
    %p82 = por %p80, %p81
    %p83 = scmp.ne.s32.totalorder %s74, %s75
    %p84 = scmp.eq.s32.totalorder %s17, 0
    %p85 = por %p83, %p84
    %p86 = scmp.ne.s32.totalorder %s74, %s75
    %p87 = scmp.eq.s32.totalorder %s18, 1
    %p88 = por %p86, %p87
    %p90 = scmp.ne.s32.totalorder %s75, %s89
    %p91 = scmp.eq.s32.totalorder %s18, 0
    %p92 = por %p90, %p91
    %s94 = sadd.s32 %s93, 1
    %p97 = scmp.eq.s32.totalorder %s12, 1
    %p98 = scmp.ne.s32.totalorder %s93, %s95
    %p99 = scmp.eq.s32.totalorder %s12, 0
    %p100 = por %p98, %p99
    %p101 = scmp.ne.s32.totalorder %s93, %s95
    %p102 = scmp.eq.s32.totalorder %s17, 1
    %p103 = por %p101, %p102
    %p104 = scmp.ne.s32.totalorder %s95, %s96
    %p105 = scmp.eq.s32.totalorder %s17, 0
    %p106 = por %p104, %p105
    %p107 = scmp.ne.s32.totalorder %s95, %s96
    %p108 = scmp.eq.s32.totalorder %s18, 1
    %p109 = por %p107, %p108
    %p111 = scmp.ne.s32.totalorder %s96, %s110
    %p112 = scmp.eq.s32.totalorder %s18, 0
    %p113 = por %p111, %p112
    %s115 = sadd.s32 %s114, 1
    %p118 = scmp.eq.s32.totalorder %s12, 1
    %p119 = scmp.ne.s32.totalorder %s114, %s116
    %p120 = scmp.eq.s32.totalorder %s12, 0
    %p121 = por %p119, %p120
    %p122 = scmp.ne.s32.totalorder %s114, %s116
    %p123 = scmp.eq.s32.totalorder %s17, 1
    %p124 = por %p122, %p123
    %p125 = scmp.ne.s32.totalorder %s116, %s117
    %p126 = scmp.eq.s32.totalorder %s17, 0
    %p127 = por %p125, %p126
    %p128 = scmp.ne.s32.totalorder %s116, %s117
    %p129 = scmp.eq.s32.totalorder %s18, 1
    %p130 = por %p128, %p129
    %p132 = scmp.ne.s32.totalorder %s117, %s131
    %p133 = scmp.eq.s32.totalorder %s18, 0
    %p134 = por %p132, %p133
    %s136 = sadd.s32 %s135, 1
    %p139 = scmp.eq.s32.totalorder %s12, 1
    %p140 = scmp.ne.s32.totalorder %s135, %s137
    %p141 = scmp.eq.s32.totalorder %s12, 0
    %p142 = por %p140, %p141
    %p143 = scmp.ne.s32.totalorder %s135, %s137
    %p144 = scmp.eq.s32.totalorder %s17, 1
    %p145 = por %p143, %p144
    %p146 = scmp.ne.s32.totalorder %s137, %s138
    %p147 = scmp.eq.s32.totalorder %s17, 0
    %p148 = por %p146, %p147
    %p149 = scmp.ne.s32.totalorder %s137, %s138
    %p150 = scmp.eq.s32.totalorder %s18, 1
    %p151 = por %p149, %p150
    %p153 = scmp.ne.s32.totalorder %s138, %s152
    %p154 = scmp.eq.s32.totalorder %s18, 0
    %p155 = por %p153, %p154
    %s156 = ssub.s32 %s12, %s19
    %p157 = scmp.eq.s32.totalorder %s156, 0
    %s159 = sadd.s32 %s158, 1
    %s160 = scalar_select %p157, %s158, %s159
    %p163 = pneg %p157
    %p164 = scmp.eq.s32.totalorder %s12, 1
    %p165 = por %p163, %p164
    %p166 = scmp.ne.s32.totalorder %s158, %s161
    %p167 = scmp.eq.s32.totalorder %s12, 0
    %p168 = por %p166, %p167
    %p169 = scmp.ne.s32.totalorder %s158, %s161
    %p170 = scmp.eq.s32.totalorder %s17, 1
    %p171 = por %p169, %p170
    %p172 = scmp.ne.s32.totalorder %s161, %s162
    %p173 = scmp.eq.s32.totalorder %s17, 0
    %p174 = por %p172, %p173
    %p175 = scmp.ne.s32.totalorder %s161, %s162
    %p176 = scmp.eq.s32.totalorder %s18, 1
    %p177 = por %p175, %p176
    %p179 = scmp.ne.s32.totalorder %s162, %s178
    %p180 = scmp.eq.s32.totalorder %s18, 0
    %p181 = por %p179, %p180
    %p182 = scmp.le.s32.totalorder 1, %s12
    %p183 = scmp.lt.s32.totalorder %s12, 3
    %p184 = pnand %p182, %p183
    %p185 = pneg %p184
    // Predicated region
    $region9: #{unet_decoder_forward.2} parent=5 // pred_check
      _
    $region10: #{unet_decoder_forward.2} parent=5 // pred_check_branch
      %187 = sbr.rel (%p184) target = $region12
    $region11: #{unet_decoder_forward.2} parent=5 // pred_region
      %s188 = ssub.s32 %s12, 1
      // Predicated region
      $region13: #{unet_decoder_forward.2} parent=11 // pred_check
        %p189 = pneg %p85
      $region14: #{unet_decoder_forward.2} parent=11 // pred_check_branch
        %191 = sbr.rel (%p189) target = $region16
      $region15: #{unet_decoder_forward.2} parent=11 // pred_region
        _
      $region16: #{unet_decoder_forward.2} parent=11 // pred_fallthru
        _
      // Predicated region
      $region17: #{unet_decoder_forward.2} parent=11 // pred_check
        %p192 = pneg %p106
      $region18: #{unet_decoder_forward.2} parent=11 // pred_check_branch
        %194 = sbr.rel (%p192) target = $region20
      $region19: #{unet_decoder_forward.2} parent=11 // pred_region
        _
      $region20: #{unet_decoder_forward.2} parent=11 // pred_fallthru
        _
      // Predicated region
      $region21: #{unet_decoder_forward.2} parent=11 // pred_check
        %p195 = pneg %p127
      $region22: #{unet_decoder_forward.2} parent=11 // pred_check_branch
        %197 = sbr.rel (%p195) target = $region24
      $region23: #{unet_decoder_forward.2} parent=11 // pred_region
        _
      $region24: #{unet_decoder_forward.2} parent=11 // pred_fallthru
        _
      // Predicated region
      $region25: #{unet_decoder_forward.2} parent=11 // pred_check
        %p198 = pneg %p148
      $region26: #{unet_decoder_forward.2} parent=11 // pred_check_branch
        %200 = sbr.rel (%p198) target = $region28
      $region27: #{unet_decoder_forward.2} parent=11 // pred_region
        _
      $region28: #{unet_decoder_forward.2} parent=11 // pred_fallthru
        _
    $region12: #{unet_decoder_forward.2} parent=5 // pred_fallthru
      _
    %p201 = scmp.lt.s32.totalorder %s12, 2
    // Predicated region
    $region29: #{unet_decoder_forward.2} parent=5 // pred_check
      %p202 = pneg %p201
    $region30: #{unet_decoder_forward.2} parent=5 // pred_check_branch
      %204 = sbr.rel (%p202) target = $region32
    $region31: #{unet_decoder_forward.2} parent=5 // pred_region
      // Predicated region
      $region33: #{unet_decoder_forward.2} parent=31 // pred_check
        %p205 = pneg %p32
      $region34: #{unet_decoder_forward.2} parent=31 // pred_check_branch
        %207 = sbr.rel (%p205) target = $region36
      $region35: #{unet_decoder_forward.2} parent=31 // pred_region
        %p208 = scmp.lt.s32.totalorder %s12, 1
        %s209 = scalar_select %p208, %s12, 1
        %s210 = smul.addr %s209, 4
        %s211 = smul.addr %s210, 4
        %s212 = scalar_lea.vmem %s0, %s211
      $region36: #{unet_decoder_forward.2} parent=31 // pred_fallthru
        _
      // Predicated region
      $region37: #{unet_decoder_forward.2} parent=31 // pred_check
        %p213 = pneg %p58
      $region38: #{unet_decoder_forward.2} parent=31 // pred_check_branch
        %215 = sbr.rel (%p213) target = $region40
      $region39: #{unet_decoder_forward.2} parent=31 // pred_region
        %p216 = scmp.lt.s32.totalorder %s12, 1
        %s217 = scalar_select %p216, %s12, 1
        %s218 = smul.addr %s217, 8
        %s219 = smul.addr %s218, 4
        %s220 = scalar_lea.vmem %s1, %s219
      $region40: #{unet_decoder_forward.2} parent=31 // pred_fallthru
        _
    $region32: #{unet_decoder_forward.2} parent=5 // pred_fallthru
      _
    %p221 = scmp.le.s32.totalorder 1, %s12
    %p222 = scmp.lt.s32.totalorder %s12, 3
    %p223 = pnand %p221, %p222
    %p224 = pneg %p223
    // Predicated region
    $region41: #{unet_decoder_forward.2} parent=5 // pred_check
      _
    $region42: #{unet_decoder_forward.2} parent=5 // pred_check_branch
      %226 = sbr.rel (%p223) target = $region44
    $region43: #{unet_decoder_forward.2} parent=5 // pred_region
      %s227 = ssub.s32 %s12, 1
      %p228 = scmp.lt.s32.totalorder %s17, 1
      %s229 = scalar_select %p228, %s17, 1
      %s230 = smul.addr %s229, 4
      %s231 = smul.addr %s230, 4
      %s232 = scalar_lea.vmem %s0, %s231
      %p233 = pneg %p38
      %p234 = pneg %p35
      %p235 = scmp.lt.s32.totalorder %s17, 1
      %s236 = scalar_select %p235, %s17, 1
      %s237 = smul.addr %s236, 8
      %s238 = smul.addr %s237, 4
      %s239 = scalar_lea.vmem %s1, %s238
      %p240 = pneg %p64
      %p241 = pneg %p61
      %p242 = pneg %p85
      %p243 = pneg %p82
      %p244 = pneg %p106
      %p245 = pneg %p103
      %p246 = pneg %p127
      %p247 = pneg %p124
      %p248 = pneg %p148
      %p249 = pneg %p145
      %p250 = pneg %p174
      %p251 = pneg %p171
      %p252 = scmp.lt.s32.totalorder %s17, 1
      %s253 = scalar_select %p252, %s17, 1
      %s254 = smul.addr %s253, 8
      %s255 = smul.addr %s254, 4
      %s256 = scalar_lea.vmem %s6, %s255
      %p257 = scmp.lt.s32.totalorder %s17, 1
      %s258 = scalar_select %p257, %s17, 1
      %s259 = smul.addr %s258, 4
      %s260 = smul.addr %s259, 4
      %s261 = scalar_lea.vmem %s0, %s260
      %p262 = scmp.lt.s32.totalorder %s17, 1
      %s263 = scalar_select %p262, %s17, 1
      %s264 = smul.addr %s263, 8
      %s265 = smul.addr %s264, 4
      %s266 = scalar_lea.vmem %s1, %s265
      %p267 = scmp.lt.s32.totalorder %s17, 1
      %s268 = scalar_select %p267, %s17, 1
      %s269 = smul.addr %s268, 8
      %s270 = smul.addr %s269, 4
      %s271 = scalar_lea.vmem %s6, %s270
      %v272 = vld [vmem:[%s261] sm:$0xf]
      %v273 = vld [vmem:[%s261 + $0x4] sm:$0xf]
      %v274 = vld [vmem:[%s261 + $0x8] sm:$0xf]
      %v275 = vld [vmem:[%s261 + $0xc] sm:$0xf]
      %vm276 = vcmask 257024
      %277 = vst.msk [vmem:[#allocation2] sm:$0xf] %vm276, %v272
      %278 = vst.msk [vmem:[#allocation2 + $0x8] sm:$0xf] %vm276, %v273
      %279 = vst.msk [vmem:[#allocation2 + $0x10] sm:$0xf] %vm276, %v274
      %280 = vst.msk [vmem:[#allocation2 + $0x18] sm:$0xf] %vm276, %v275
      %s281 = scalar_lea.vmem [#allocation2], 32
      %vm282 = vcmask 258048
      %283 = vst.msk [vmem:[%s281] sm:$0x1f] %vm282, 0.0
      %vm284 = vcmask 253952
      %285 = vst.msk [vmem:[#allocation2 + $0x4] sm:$0x1] %vm284, 0.0
      %286 = vst.msk [vmem:[#allocation2 + $0xc] sm:$0x1] %vm284, 0.0
      %287 = vst.msk [vmem:[#allocation2 + $0x14] sm:$0x1] %vm284, 0.0
      %288 = vst.msk [vmem:[#allocation2 + $0x1c] sm:$0x1] %vm284, 0.0
      %v289 = vld [vmem:[#allocation2] sm:$0xf]
      %v290 = vld [vmem:[#allocation2 + $0x8] sm:$0xf]
      %v291 = vld [vmem:[#allocation2 + $0x10] sm:$0xf]
      %v292 = vld [vmem:[#allocation2 + $0x18] sm:$0xf]
      %s293 = scalar_lea.vmem [#allocation2], 8
      %v294 = vld [vmem:[%s293] sm:$0xf]
      %v295 = vld [vmem:[%s293 + $0x8] sm:$0xf]
      %v296 = vld [vmem:[%s293 + $0x10] sm:$0xf]
      %v297 = vld [vmem:[%s293 + $0x18] sm:$0xf]
      %v298 = vld [vmem:[#allocation2 + $0x1] sm:$0xf]
      %v299 = vld [vmem:[#allocation2 + $0x9] sm:$0xf]
      %v300 = vld [vmem:[#allocation2 + $0x11] sm:$0xf]
      %v301 = vld [vmem:[#allocation2 + $0x19] sm:$0xf]
      %v302 = vld [vmem:[%s293 + $0x1] sm:$0xf]
      %v303 = vld [vmem:[%s293 + $0x9] sm:$0xf]
      %v304 = vld [vmem:[%s293 + $0x11] sm:$0xf]
      %v305 = vld [vmem:[%s293 + $0x19] sm:$0xf]
      %310 = vrot.lane.b32.xlu0 %v294, 32
      %v311 = vpop.permute.xlu0 %310
      %312 = vrot.lane.b32.xlu0 %v295, 32
      %v313 = vpop.permute.xlu0 %312
      %314 = vrot.lane.b32.xlu0 %v296, 32
      %v315 = vpop.permute.xlu0 %314
      %316 = vrot.lane.b32.xlu0 %v297, 32
      %v317 = vpop.permute.xlu0 %316
      %326 = vrot.lane.b32.xlu0 %v298, 64
      %v327 = vpop.permute.xlu0 %326
      %328 = vrot.lane.b32.xlu0 %v299, 64
      %v329 = vpop.permute.xlu0 %328
      %330 = vrot.lane.b32.xlu0 %v300, 64
      %v331 = vpop.permute.xlu0 %330
      %332 = vrot.lane.b32.xlu0 %v301, 64
      %v333 = vpop.permute.xlu0 %332
      %342 = vrot.lane.b32.xlu0 %v289, 96
      %v343 = vpop.permute.xlu0 %342
      %344 = vrot.lane.b32.xlu0 %v290, 96
      %v345 = vpop.permute.xlu0 %344
      %346 = vrot.lane.b32.xlu0 %v291, 96
      %v347 = vpop.permute.xlu0 %346
      %348 = vrot.lane.b32.xlu0 %v292, 96
      %v349 = vpop.permute.xlu0 %348
      %vm354 = vcmask 261120
      %v355 = vsel %vm354, %v302, %v311
      %v356 = vsel %vm354, %v303, %v313
      %v357 = vsel %vm354, %v304, %v315
      %v358 = vsel %vm354, %v305, %v317
      %vm359 = vcmask 523264
      %v360 = vsel %vm359, %v355, %v327
      %v361 = vsel %vm359, %v356, %v329
      %v362 = vsel %vm359, %v357, %v331
      %v363 = vsel %vm359, %v358, %v333
      %vm364 = vcmask 785408
      %v365 = vsel %vm364, %v360, %v343
      %v366 = vsel %vm364, %v361, %v345
      %v367 = vsel %vm364, %v362, %v347
      %v368 = vsel %vm364, %v363, %v349
      %v369 = vld [vmem:[%s2] sm:$0xff]
      %v370 = vld [vmem:[%s2 + $0x8] sm:$0xff]
      %v371 = vld [vmem:[%s2 + $0x10] sm:$0xff]
      %v372 = vld [vmem:[%s2 + $0x18] sm:$0xff]
      %v373 = vld [vmem:[%s2 + $0x20] sm:$0xff]
      %v374 = vld [vmem:[%s2 + $0x28] sm:$0xff]
      %v375 = vld [vmem:[%s2 + $0x30] sm:$0xff]
      %v376 = vld [vmem:[%s2 + $0x38] sm:$0xff]
      %v377 = vld [vmem:[%s2 + $0x40] sm:$0xff]
      %v378 = vld [vmem:[%s2 + $0x48] sm:$0xff]
      %v379 = vld [vmem:[%s2 + $0x50] sm:$0xff]
      %v380 = vld [vmem:[%s2 + $0x58] sm:$0xff]
      %v381 = vld [vmem:[%s2 + $0x60] sm:$0xff]
      %v382 = vld [vmem:[%s2 + $0x68] sm:$0xff]
      %v383 = vld [vmem:[%s2 + $0x70] sm:$0xff]
      %v384 = vld [vmem:[%s2 + $0x78] sm:$0xff]
      %v385 = vld [vmem:[%s3] sm:$0x1]
      %v387 = vlaneseq
      %v388 = vshrl.u32 %v387, 7
      %v389 = vsub.s32 0, %v388
      %v390 = vrot.slane %v385, %v389
      %v396 = vcombine.low %v365, %v366
      %v397 = vcombine.low %v367, %v368
      %400 = vmatprep.subr.mxu0 0.0
      %401 = vmatpush1.msra.mxu0 %v369
      %402 = vmatprep.subr.mxu0 0.0
      %403 = vmatpush1.msra.mxu0 %v370
      %404 = vmatprep.subr.mxu0 0.0
      %405 = vmatpush1.msra.mxu0 %v371
      %406 = vmatprep.subr.mxu0 0.0
      %407 = vmatpush1.msra.mxu0 %v372
      %408 = vmatprep.subr.mxu0 0.0
      %409 = vmatpush1.msra.mxu0 %v373
      %410 = vmatprep.subr.mxu0 0.0
      %411 = vmatpush1.msra.mxu0 %v374
      %412 = vmatprep.subr.mxu0 0.0
      %413 = vmatpush1.msra.mxu0 %v375
      %414 = vmatprep.subr.mxu0 0.0
      %415 = vmatpush1.msra.mxu0 %v376
      %416 = vmatprep.subr.mxu0 0.0
      %417 = vmatpush1.msra.mxu0 %v377
      %418 = vmatprep.subr.mxu0 0.0
      %419 = vmatpush1.msra.mxu0 %v378
      %420 = vmatprep.subr.mxu0 0.0
      %421 = vmatpush1.msra.mxu0 %v379
      %422 = vmatprep.subr.mxu0 0.0
      %423 = vmatpush1.msra.mxu0 %v380
      %424 = vmatprep.subr.mxu0 0.0
      %425 = vmatpush1.msra.mxu0 %v381
      %426 = vmatprep.subr.mxu0 0.0
      %427 = vmatpush1.msra.mxu0 %v382
      %428 = vmatprep.subr.mxu0 0.0
      %429 = vmatpush1.msra.mxu0 %v383
      %430 = vmatprep.subr.mxu0 0.0
      %431 = vmatpush1.msra.mxu0 %v384
      %432 = vmatprep.subr.mxu0 0.0
      %433 = vmatpush1.msra.mxu0 0.0
      %434 = vmatprep.subr.mxu0 0.0
      %435 = vmatpush1.msra.mxu0 0.0
      %436 = vmatprep.subr.mxu0 0.0
      %437 = vmatpush1.msra.mxu0 0.0
      %438 = vmatprep.subr.mxu0 0.0
      %439 = vmatpush1.msra.mxu0 0.0
      %440 = vmatprep.subr.mxu0 0.0
      %441 = vmatpush1.msra.mxu0 0.0
      %442 = vmatprep.subr.mxu0 0.0
      %443 = vmatpush1.msra.mxu0 0.0
      %444 = vmatprep.subr.mxu0 0.0
      %445 = vmatpush1.msra.mxu0 0.0
      %446 = vmatprep.subr.mxu0 0.0
      %447 = vmatpush1.msra.mxu0 0.0
      %448 = vmatprep.subr.mxu0 0.0
      %449 = vmatpush1.msra.mxu0 0.0
      %450 = vmatprep.subr.mxu0 0.0
      %451 = vmatpush1.msra.mxu0 0.0
      %452 = vmatprep.subr.mxu0 0.0
      %453 = vmatpush1.msra.mxu0 0.0
      %454 = vmatprep.subr.mxu0 0.0
      %455 = vmatpush1.msra.mxu0 0.0
      %456 = vmatprep.subr.mxu0 0.0
      %457 = vmatpush1.msra.mxu0 0.0
      %458 = vmatprep.subr.mxu0 0.0
      %459 = vmatpush1.msra.mxu0 0.0
      %460 = vmatprep.subr.mxu0 0.0
      %461 = vmatpush1.msra.mxu0 0.0
      %462 = vmatprep.subr.mxu0 0.0
      %463 = vmatpush1.msra.mxu0 0.0
      %464 = vmatprep.mubr.f32.mxu0 0.0
      %465 = vmatmul.mubr.f32.gmra.mrb[0].mxu0 %v396
      %v466 = vpop.f32.mrb[0].mxu0
      %v467 = vadd.f32 %v390, %v466
      %v468 = vpop.f32.mrb[0].mxu0
      %469 = vmatprep.mubr.f32.mxu0 0.0
      %470 = vmatmul.mubr.f32.gmra.mrb[0].mxu0 %v397
      %v471 = vpop.f32.mrb[0].mxu0
      %v472 = vadd.f32 %v390, %v471
      %v473 = vpop.f32.mrb[0].mxu0
      %474 = vdwg.mxu0
      %vm475 = vcmp.gt.f32.partialorder %v467, 0.0
      %vm476 = vcmp.gt.f32.partialorder %v472, 0.0
      %v477 = vmul.f32 %v467, 0.1
      %v478 = vmul.f32 %v472, 0.1
      %v479 = vsel %vm475, %v467, %v477
      %v480 = vsel %vm476, %v472, %v478
      %v483 = vcombine.high %v479, %v479
      %v484 = vcombine.high %v480, %v480
      %v487 = vld [vmem:[%s266] sm:$0xf]
      %v488 = vld [vmem:[%s266 + $0x4] sm:$0xf]
      %v489 = vld [vmem:[%s266 + $0x8] sm:$0xf]
      %v490 = vld [vmem:[%s266 + $0xc] sm:$0xf]
      %v491 = vld [vmem:[%s266 + $0x10] sm:$0xf]
      %v492 = vld [vmem:[%s266 + $0x14] sm:$0xf]
      %v493 = vld [vmem:[%s266 + $0x18] sm:$0xf]
      %v494 = vld [vmem:[%s266 + $0x1c] sm:$0xf]
      %495 = vst [vmem:[#allocation3] sm:$0x3f] 0.0
      %s496 = scalar_lea.vmem [#allocation3], 72
      %497 = vst [vmem:[%s496] sm:$0x3f] 0.0
      %498 = vst [vmem:[#allocation3] sm:$0x1] 0.0
      %499 = vst [vmem:[#allocation3 + $0x8] sm:$0x1] 0.0
      %500 = vst [vmem:[#allocation3 + $0x10] sm:$0x1] 0.0
      %501 = vst [vmem:[#allocation3 + $0x18] sm:$0x1] 0.0
      %502 = vst [vmem:[#allocation3 + $0x20] sm:$0x1] 0.0
      %503 = vst [vmem:[#allocation3 + $0x28] sm:$0x1] 0.0
      %504 = vst [vmem:[#allocation3 + $0x30] sm:$0x1] 0.0
      %505 = vst [vmem:[#allocation3 + $0x38] sm:$0x1] 0.0
      %506 = vst [vmem:[#allocation3 + $0x40] sm:$0x1] 0.0
      %507 = vst [vmem:[#allocation3 + $0x48] sm:$0x1] 0.0
      %508 = vst [vmem:[#allocation3 + $0x5] sm:$0x1] 0.0
      %509 = vst [vmem:[#allocation3 + $0xd] sm:$0x1] 0.0
      %510 = vst [vmem:[#allocation3 + $0x15] sm:$0x1] 0.0
      %511 = vst [vmem:[#allocation3 + $0x1d] sm:$0x1] 0.0
      %512 = vst [vmem:[#allocation3 + $0x25] sm:$0x1] 0.0
      %513 = vst [vmem:[#allocation3 + $0x2d] sm:$0x1] 0.0
      %514 = vst [vmem:[#allocation3 + $0x35] sm:$0x1] 0.0
      %515 = vst [vmem:[#allocation3 + $0x3d] sm:$0x1] 0.0
      %516 = vst [vmem:[#allocation3 + $0x45] sm:$0x1] 0.0
      %517 = vst [vmem:[#allocation3 + $0x4d] sm:$0x1] 0.0
      %522 = vrot.lane.b32.xlu0 %v487, 32
      %v523 = vpop.permute.xlu0 %522
      %524 = vrot.lane.b32.xlu0 %v489, 32
      %v525 = vpop.permute.xlu0 %524
      %526 = vrot.lane.b32.xlu0 %v491, 32
      %v527 = vpop.permute.xlu0 %526
      %528 = vrot.lane.b32.xlu0 %v493, 32
      %v529 = vpop.permute.xlu0 %528
      %534 = vrot.lane.b32.xlu0 %v479, 32
      %v535 = vpop.permute.xlu0 %534
      %536 = vrot.lane.b32.xlu0 %v483, 32
      %v537 = vpop.permute.xlu0 %536
      %538 = vrot.lane.b32.xlu0 %v480, 32
      %v539 = vpop.permute.xlu0 %538
      %540 = vrot.lane.b32.xlu0 %v484, 32
      %v541 = vpop.permute.xlu0 %540
      %546 = vrot.lane.b32.xlu0 %v487, 64
      %v547 = vpop.permute.xlu0 %546
      %548 = vrot.lane.b32.xlu0 %v489, 64
      %v549 = vpop.permute.xlu0 %548
      %550 = vrot.lane.b32.xlu0 %v491, 64
      %v551 = vpop.permute.xlu0 %550
      %552 = vrot.lane.b32.xlu0 %v493, 64
      %v553 = vpop.permute.xlu0 %552
      %v558 = vsel %vm354, %v479, %v523
      %v559 = vsel %vm354, %v483, %v525
      %v560 = vsel %vm354, %v480, %v527
      %v561 = vsel %vm354, %v484, %v529
      %v562 = vsel %vm359, %v558, %v535
      %v563 = vsel %vm359, %v559, %v537
      %v564 = vsel %vm359, %v560, %v539
      %v565 = vsel %vm359, %v561, %v541
      %v566 = vsel %vm364, %v562, %v547
      %v567 = vsel %vm364, %v563, %v549
      %v568 = vsel %vm364, %v564, %v551
      %v569 = vsel %vm364, %v565, %v553
      %570 = vrot.lane.b32.xlu0 %v479, 64
      %v571 = vpop.permute.xlu0 %570
      %572 = vrot.lane.b32.xlu0 %v483, 64
      %v573 = vpop.permute.xlu0 %572
      %574 = vrot.lane.b32.xlu0 %v480, 64
      %v575 = vpop.permute.xlu0 %574
      %576 = vrot.lane.b32.xlu0 %v484, 64
      %v577 = vpop.permute.xlu0 %576
      %586 = vrot.lane.b32.xlu0 %v488, 32
      %v587 = vpop.permute.xlu0 %586
      %588 = vrot.lane.b32.xlu0 %v490, 32
      %v589 = vpop.permute.xlu0 %588
      %590 = vrot.lane.b32.xlu0 %v492, 32
      %v591 = vpop.permute.xlu0 %590
      %592 = vrot.lane.b32.xlu0 %v494, 32
      %v593 = vpop.permute.xlu0 %592
      %598 = vrot.lane.b32.xlu0 %v479, 96
      %v599 = vpop.permute.xlu0 %598
      %600 = vrot.lane.b32.xlu0 %v483, 96
      %v601 = vpop.permute.xlu0 %600
      %602 = vrot.lane.b32.xlu0 %v480, 96
      %v603 = vpop.permute.xlu0 %602
      %604 = vrot.lane.b32.xlu0 %v484, 96
      %v605 = vpop.permute.xlu0 %604
      %610 = vrot.lane.b32.xlu0 %v488, 64
      %v611 = vpop.permute.xlu0 %610
      %612 = vrot.lane.b32.xlu0 %v490, 64
      %v613 = vpop.permute.xlu0 %612
      %614 = vrot.lane.b32.xlu0 %v492, 64
      %v615 = vpop.permute.xlu0 %614
      %616 = vrot.lane.b32.xlu0 %v494, 64
      %v617 = vpop.permute.xlu0 %616
      %v622 = vsel %vm354, %v571, %v587
      %v623 = vsel %vm354, %v573, %v589
      %v624 = vsel %vm354, %v575, %v591
      %v625 = vsel %vm354, %v577, %v593
      %v626 = vsel %vm359, %v622, %v599
      %v627 = vsel %vm359, %v623, %v601
      %v628 = vsel %vm359, %v624, %v603
      %v629 = vsel %vm359, %v625, %v605
      %v630 = vsel %vm364, %v626, %v611
      %v631 = vsel %vm364, %v627, %v613
      %v632 = vsel %vm364, %v628, %v615
      %v633 = vsel %vm364, %v629, %v617
      %s634 = scalar_lea.vmem [#allocation3], 8
      %635 = vst [vmem:[%s634 + $0x1] sm:$0xf] %v566
      %636 = vst [vmem:[%s634 + $0x11] sm:$0xf] %v567
      %637 = vst [vmem:[%s634 + $0x21] sm:$0xf] %v568
      %638 = vst [vmem:[%s634 + $0x31] sm:$0xf] %v569
      %s639 = scalar_lea.vmem [#allocation3], 16
      %640 = vst [vmem:[%s639 + $0x1] sm:$0xf] %v630
      %641 = vst [vmem:[%s639 + $0x11] sm:$0xf] %v631
      %642 = vst [vmem:[%s639 + $0x21] sm:$0xf] %v632
      %643 = vst [vmem:[%s639 + $0x31] sm:$0xf] %v633
      %v644 = vld [vmem:[#allocation3] sm:$0x3f]
      %v645 = vld [vmem:[#allocation3 + $0x8] sm:$0x3f]
      %v646 = vld [vmem:[#allocation3 + $0x10] sm:$0x3f]
      %v647 = vld [vmem:[#allocation3 + $0x18] sm:$0x3f]
      %v648 = vld [vmem:[#allocation3 + $0x20] sm:$0x3f]
      %v649 = vld [vmem:[#allocation3 + $0x28] sm:$0x3f]
      %v650 = vld [vmem:[#allocation3 + $0x30] sm:$0x3f]
      %v651 = vld [vmem:[#allocation3 + $0x38] sm:$0x3f]
      %v652 = vld [vmem:[#allocation3 + $0x40] sm:$0x3f]
      %v653 = vld [vmem:[#allocation3 + $0x48] sm:$0x3f]
      %664 = vrot.lane.b32.xlu0 %v644, 64
      %v665 = vpop.permute.xlu0 %664
      %666 = vrot.lane.b32.xlu0 %v645, 64
      %v667 = vpop.permute.xlu0 %666
      %668 = vrot.lane.b32.xlu0 %v646, 64
      %v669 = vpop.permute.xlu0 %668
      %670 = vrot.lane.b32.xlu0 %v647, 64
      %v671 = vpop.permute.xlu0 %670
      %672 = vrot.lane.b32.xlu0 %v648, 64
      %v673 = vpop.permute.xlu0 %672
      %674 = vrot.lane.b32.xlu0 %v649, 64
      %v675 = vpop.permute.xlu0 %674
      %676 = vrot.lane.b32.xlu0 %v650, 64
      %v677 = vpop.permute.xlu0 %676
      %678 = vrot.lane.b32.xlu0 %v651, 64
      %v679 = vpop.permute.xlu0 %678
      %680 = vrot.lane.b32.xlu0 %v652, 64
      %v681 = vpop.permute.xlu0 %680
      %682 = vrot.lane.b32.xlu0 %v653, 64
      %v683 = vpop.permute.xlu0 %682
      %v694 = vrot.slane %v644, 1
      %v695 = vrot.slane %v645, 1
      %v696 = vrot.slane %v646, 1
      %v697 = vrot.slane %v647, 1
      %v698 = vrot.slane %v648, 1
      %v699 = vrot.slane %v649, 1
      %v700 = vrot.slane %v650, 1
      %v701 = vrot.slane %v651, 1
      %v702 = vrot.slane %v652, 1
      %v703 = vrot.slane %v653, 1
      %704 = vrot.lane.b32.xlu0 %v694, 64
      %v705 = vpop.permute.xlu0 %704
      %706 = vrot.lane.b32.xlu0 %v695, 64
      %v707 = vpop.permute.xlu0 %706
      %708 = vrot.lane.b32.xlu0 %v696, 64
      %v709 = vpop.permute.xlu0 %708
      %710 = vrot.lane.b32.xlu0 %v697, 64
      %v711 = vpop.permute.xlu0 %710
      %712 = vrot.lane.b32.xlu0 %v698, 64
      %v713 = vpop.permute.xlu0 %712
      %714 = vrot.lane.b32.xlu0 %v699, 64
      %v715 = vpop.permute.xlu0 %714
      %716 = vrot.lane.b32.xlu0 %v700, 64
      %v717 = vpop.permute.xlu0 %716
      %718 = vrot.lane.b32.xlu0 %v701, 64
      %v719 = vpop.permute.xlu0 %718
      %720 = vrot.lane.b32.xlu0 %v702, 64
      %v721 = vpop.permute.xlu0 %720
      %722 = vrot.lane.b32.xlu0 %v703, 64
      %v723 = vpop.permute.xlu0 %722
      %v734 = vsel %vm359, %v665, %v705
      %v735 = vsel %vm359, %v667, %v707
      %v736 = vsel %vm359, %v669, %v709
      %v737 = vsel %vm359, %v671, %v711
      %v738 = vsel %vm359, %v673, %v713
      %v739 = vsel %vm359, %v675, %v715
      %v740 = vsel %vm359, %v677, %v717
      %v741 = vsel %vm359, %v679, %v719
      %v742 = vsel %vm359, %v681, %v721
      %v743 = vsel %vm359, %v683, %v723
      %v744 = vrot.slane %v694, 1
      %v745 = vrot.slane %v695, 1
      %v746 = vrot.slane %v696, 1
      %v747 = vrot.slane %v697, 1
      %v748 = vrot.slane %v698, 1
      %v749 = vrot.slane %v699, 1
      %v750 = vrot.slane %v700, 1
      %v751 = vrot.slane %v701, 1
      %v752 = vrot.slane %v702, 1
      %v753 = vrot.slane %v703, 1
      %v762 = vcombine.low %v734, %v705
      %v763 = vcombine.low %v735, %v707
      %v764 = vcombine.low %v736, %v709
      %v765 = vcombine.low %v737, %v711
      %v766 = vcombine.low %v738, %v713
      %v767 = vcombine.low %v739, %v715
      %v768 = vcombine.low %v740, %v717
      %v769 = vcombine.low %v741, %v719
      %v770 = vcombine.low %v694, %v744
      %v771 = vcombine.low %v695, %v745
      %v772 = vcombine.low %v696, %v746
      %v773 = vcombine.low %v697, %v747
      %v774 = vcombine.low %v698, %v748
      %v775 = vcombine.low %v699, %v749
      %v776 = vcombine.low %v700, %v750
      %v777 = vcombine.low %v701, %v751
      %v778 = vld [vmem:[%s4] sm:$0xff]
      %v779 = vld [vmem:[%s4 + $0x8] sm:$0xff]
      %v780 = vld [vmem:[%s4 + $0x10] sm:$0xff]
      %v781 = vld [vmem:[%s4 + $0x18] sm:$0xff]
      %v782 = vld [vmem:[%s4 + $0x20] sm:$0xff]
      %v783 = vld [vmem:[%s4 + $0x28] sm:$0xff]
      %v784 = vld [vmem:[%s4 + $0x30] sm:$0xff]
      %v785 = vld [vmem:[%s4 + $0x38] sm:$0xff]
      %v786 = vld [vmem:[%s4 + $0x40] sm:$0xff]
      %v787 = vld [vmem:[%s4 + $0x48] sm:$0xff]
      %v788 = vld [vmem:[%s4 + $0x50] sm:$0xff]
      %v789 = vld [vmem:[%s4 + $0x58] sm:$0xff]
      %v790 = vld [vmem:[%s4 + $0x60] sm:$0xff]
      %v791 = vld [vmem:[%s4 + $0x68] sm:$0xff]
      %v792 = vld [vmem:[%s4 + $0x70] sm:$0xff]
      %v793 = vld [vmem:[%s4 + $0x78] sm:$0xff]
      %v794 = vld [vmem:[%s4 + $0x80] sm:$0xff]
      %v795 = vld [vmem:[%s4 + $0x88] sm:$0xff]
      %v796 = vld [vmem:[%s4 + $0x90] sm:$0xff]
      %v797 = vld [vmem:[%s4 + $0x98] sm:$0xff]
      %v798 = vld [vmem:[%s4 + $0xa0] sm:$0xff]
      %v799 = vld [vmem:[%s4 + $0xa8] sm:$0xff]
      %v800 = vld [vmem:[%s4 + $0xb0] sm:$0xff]
      %v801 = vld [vmem:[%s4 + $0xb8] sm:$0xff]
      %v803 = vcombine.low %v742, %v721
      %v804 = vcombine.low %v702, %v752
      %s805 = scalar_lea.vmem %s4, 192
      %v806 = vld [vmem:[%s805] sm:$0xff]
      %v807 = vld [vmem:[%s805 + $0x8] sm:$0xff]
      %v808 = vld [vmem:[%s805 + $0x10] sm:$0xff]
      %v809 = vld [vmem:[%s805 + $0x18] sm:$0xff]
      %v810 = vld [vmem:[%s805 + $0x20] sm:$0xff]
      %v811 = vld [vmem:[%s805 + $0x28] sm:$0xff]
      %v812 = vld [vmem:[%s805 + $0x30] sm:$0xff]
      %v813 = vld [vmem:[%s805 + $0x38] sm:$0xff]
      %v814 = vld [vmem:[%s805 + $0x40] sm:$0xff]
      %v815 = vld [vmem:[%s805 + $0x48] sm:$0xff]
      %v816 = vld [vmem:[%s805 + $0x50] sm:$0xff]
      %v817 = vld [vmem:[%s805 + $0x58] sm:$0xff]
      %v818 = vld [vmem:[%s805 + $0x60] sm:$0xff]
      %v819 = vld [vmem:[%s805 + $0x68] sm:$0xff]
      %v820 = vld [vmem:[%s805 + $0x70] sm:$0xff]
      %v821 = vld [vmem:[%s805 + $0x78] sm:$0xff]
      %v822 = vld [vmem:[%s805 + $0x80] sm:$0xff]
      %v823 = vld [vmem:[%s805 + $0x88] sm:$0xff]
      %v824 = vld [vmem:[%s805 + $0x90] sm:$0xff]
      %v825 = vld [vmem:[%s805 + $0x98] sm:$0xff]
      %v826 = vld [vmem:[%s805 + $0xa0] sm:$0xff]
      %v827 = vld [vmem:[%s805 + $0xa8] sm:$0xff]
      %v828 = vld [vmem:[%s805 + $0xb0] sm:$0xff]
      %v829 = vld [vmem:[%s805 + $0xb8] sm:$0xff]
      %v830 = vcombine.low %v763, %v764
      %v831 = vcombine.high %v763, %v764
      %v832 = vcombine.low %v765, %v766
      %v833 = vcombine.high %v765, %v766
      %v834 = vcombine.low %v767, %v768
      %v835 = vcombine.high %v767, %v768
      %v836 = vcombine.low %v769, %v803
      %v837 = vcombine.high %v769, %v803
      %v838 = vcombine.low %v771, %v772
      %v839 = vcombine.high %v771, %v772
      %v840 = vcombine.low %v773, %v774
      %v841 = vcombine.high %v773, %v774
      %v842 = vcombine.low %v775, %v776
      %v843 = vcombine.high %v775, %v776
      %v844 = vcombine.low %v777, %v804
      %v845 = vcombine.high %v777, %v804
      %v854 = vsel %vm359, %v831, 0
      %v856 = vsel %vm359, %v833, 0
      %v858 = vsel %vm359, %v835, 0
      %v860 = vsel %vm359, %v837, 0
      %v862 = vsel %vm359, %v839, 0
      %v864 = vsel %vm359, %v841, 0
      %v866 = vsel %vm359, %v843, 0
      %v868 = vsel %vm359, %v845, 0
      %870 = vmatprep.subr.mxu0 0.0
      %871 = vmatpush1.msra.mxu0 %v806
      %872 = vmatprep.subr.mxu0 0.0
      %873 = vmatpush1.msra.mxu0 %v807
      %874 = vmatprep.subr.mxu0 0.0
      %875 = vmatpush1.msra.mxu0 %v808
      %876 = vmatprep.subr.mxu0 0.0
      %877 = vmatpush1.msra.mxu0 %v809
      %878 = vmatprep.subr.mxu0 0.0
      %879 = vmatpush1.msra.mxu0 %v810
      %880 = vmatprep.subr.mxu0 0.0
      %881 = vmatpush1.msra.mxu0 %v811
      %882 = vmatprep.subr.mxu0 0.0
      %883 = vmatpush1.msra.mxu0 %v812
      %884 = vmatprep.subr.mxu0 0.0
      %885 = vmatpush1.msra.mxu0 %v813
      %886 = vmatprep.subr.mxu0 0.0
      %887 = vmatpush1.msra.mxu0 %v814
      %888 = vmatprep.subr.mxu0 0.0
      %889 = vmatpush1.msra.mxu0 %v815
      %890 = vmatprep.subr.mxu0 0.0
      %891 = vmatpush1.msra.mxu0 %v816
      %892 = vmatprep.subr.mxu0 0.0
      %893 = vmatpush1.msra.mxu0 %v817
      %894 = vmatprep.subr.mxu0 0.0
      %895 = vmatpush1.msra.mxu0 %v818
      %896 = vmatprep.subr.mxu0 0.0
      %897 = vmatpush1.msra.mxu0 %v819
      %898 = vmatprep.subr.mxu0 0.0
      %899 = vmatpush1.msra.mxu0 %v820
      %900 = vmatprep.subr.mxu0 0.0
      %901 = vmatpush1.msra.mxu0 %v821
      %902 = vmatprep.subr.mxu0 0.0
      %903 = vmatpush1.msra.mxu0 %v822
      %904 = vmatprep.subr.mxu0 0.0
      %905 = vmatpush1.msra.mxu0 %v823
      %906 = vmatprep.subr.mxu0 0.0
      %907 = vmatpush1.msra.mxu0 %v824
      %908 = vmatprep.subr.mxu0 0.0
      %909 = vmatpush1.msra.mxu0 %v825
      %910 = vmatprep.subr.mxu0 0.0
      %911 = vmatpush1.msra.mxu0 %v826
      %912 = vmatprep.subr.mxu0 0.0
      %913 = vmatpush1.msra.mxu0 %v827
      %914 = vmatprep.subr.mxu0 0.0
      %915 = vmatpush1.msra.mxu0 %v828
      %916 = vmatprep.subr.mxu0 0.0
      %917 = vmatpush1.msra.mxu0 %v829
      %918 = vmatprep.subr.mxu0 0.0
      %919 = vmatpush1.msra.mxu0 0.0
      %920 = vmatprep.subr.mxu0 0.0
      %921 = vmatpush1.msra.mxu0 0.0
      %922 = vmatprep.subr.mxu0 0.0
      %923 = vmatpush1.msra.mxu0 0.0
      %924 = vmatprep.subr.mxu0 0.0
      %925 = vmatpush1.msra.mxu0 0.0
      %926 = vmatprep.subr.mxu0 0.0
      %927 = vmatpush1.msra.mxu0 0.0
      %928 = vmatprep.subr.mxu0 0.0
      %929 = vmatpush1.msra.mxu0 0.0
      %930 = vmatprep.subr.mxu0 0.0
      %931 = vmatpush1.msra.mxu0 0.0
      %932 = vmatprep.subr.mxu0 0.0
      %933 = vmatpush1.msra.mxu0 0.0
      %934 = vmatprep.mubr.f32.mxu0 %v854
      %935 = vmatmul.mubr.f32.gmra.mrb[0].mxu0 %v830
      %v936 = vpop.f32.mrb[0].mxu0
      %v937 = vadd.f32 0.0, %v936
      %v938 = vpop.f32.mrb[0].mxu0
      %939 = vmatprep.mubr.f32.mxu0 %v856
      %940 = vmatmul.mubr.f32.gmra.mrb[0].mxu0 %v832
      %v941 = vpop.f32.mrb[0].mxu0
      %v942 = vadd.f32 0.0, %v941
      %v943 = vpop.f32.mrb[0].mxu0
      %944 = vmatprep.mubr.f32.mxu0 %v858
      %945 = vmatmul.mubr.f32.gmra.mrb[0].mxu0 %v834
      %v946 = vpop.f32.mrb[0].mxu0
      %v947 = vadd.f32 0.0, %v946
      %v948 = vpop.f32.mrb[0].mxu0
      %949 = vmatprep.mubr.f32.mxu0 %v860
      %950 = vmatmul.mubr.f32.gmra.mrb[0].mxu0 %v836
      %v951 = vpop.f32.mrb[0].mxu0
      %v952 = vadd.f32 0.0, %v951
      %v953 = vpop.f32.mrb[0].mxu0
      %954 = vmatprep.mubr.f32.mxu0 %v862
      %955 = vmatmul.mubr.f32.gmra.mrb[0].mxu0 %v838
      %v956 = vpop.f32.mrb[0].mxu0
      %v957 = vadd.f32 0.0, %v956
      %v958 = vpop.f32.mrb[0].mxu0
      %959 = vmatprep.mubr.f32.mxu0 %v864
      %960 = vmatmul.mubr.f32.gmra.mrb[0].mxu0 %v840
      %v961 = vpop.f32.mrb[0].mxu0
      %v962 = vadd.f32 0.0, %v961
      %v963 = vpop.f32.mrb[0].mxu0
      %964 = vmatprep.mubr.f32.mxu0 %v866
      %965 = vmatmul.mubr.f32.gmra.mrb[0].mxu0 %v842
      %v966 = vpop.f32.mrb[0].mxu0
      %v967 = vadd.f32 0.0, %v966
      %v968 = vpop.f32.mrb[0].mxu0
      %969 = vmatprep.mubr.f32.mxu0 %v868
      %970 = vmatmul.mubr.f32.gmra.mrb[0].mxu0 %v844
      %v971 = vpop.f32.mrb[0].mxu0
      %v972 = vadd.f32 0.0, %v971
      %v973 = vpop.f32.mrb[0].mxu0
      %974 = vdwg.mxu0
      %v975 = vcombine.low %v762, %v763
      %v976 = vcombine.high %v762, %v763
      %v977 = vcombine.low %v764, %v765
      %v978 = vcombine.high %v764, %v765
      %v979 = vcombine.low %v766, %v767
      %v980 = vcombine.high %v766, %v767
      %v981 = vcombine.low %v768, %v769
      %v982 = vcombine.high %v768, %v769
      %v983 = vcombine.low %v770, %v771
      %v984 = vcombine.high %v770, %v771
      %v985 = vcombine.low %v772, %v773
      %v986 = vcombine.high %v772, %v773
      %v987 = vcombine.low %v774, %v775
      %v988 = vcombine.high %v774, %v775
      %v989 = vcombine.low %v776, %v777
      %v990 = vcombine.high %v776, %v777
      %v999 = vsel %vm359, %v976, 0
      %v1001 = vsel %vm359, %v978, 0
      %v1003 = vsel %vm359, %v980, 0
      %v1005 = vsel %vm359, %v982, 0
      %v1007 = vsel %vm359, %v984, 0
      %v1009 = vsel %vm359, %v986, 0
      %v1011 = vsel %vm359, %v988, 0
      %v1013 = vsel %vm359, %v990, 0
      %1015 = vmatprep.subr.mxu0 0.0
      %1016 = vmatpush1.msra.mxu0 %v778
      %1017 = vmatprep.subr.mxu0 0.0
      %1018 = vmatpush1.msra.mxu0 %v779
      %1019 = vmatprep.subr.mxu0 0.0
      %1020 = vmatpush1.msra.mxu0 %v780
      %1021 = vmatprep.subr.mxu0 0.0
      %1022 = vmatpush1.msra.mxu0 %v781
      %1023 = vmatprep.subr.mxu0 0.0
      %1024 = vmatpush1.msra.mxu0 %v782
      %1025 = vmatprep.subr.mxu0 0.0
      %1026 = vmatpush1.msra.mxu0 %v783
      %1027 = vmatprep.subr.mxu0 0.0
      %1028 = vmatpush1.msra.mxu0 %v784
      %1029 = vmatprep.subr.mxu0 0.0
      %1030 = vmatpush1.msra.mxu0 %v785
      %1031 = vmatprep.subr.mxu0 0.0
      %1032 = vmatpush1.msra.mxu0 %v786
      %1033 = vmatprep.subr.mxu0 0.0
      %1034 = vmatpush1.msra.mxu0 %v787
      %1035 = vmatprep.subr.mxu0 0.0
      %1036 = vmatpush1.msra.mxu0 %v788
      %1037 = vmatprep.subr.mxu0 0.0
      %1038 = vmatpush1.msra.mxu0 %v789
      %1039 = vmatprep.subr.mxu0 0.0
      %1040 = vmatpush1.msra.mxu0 %v790
      %1041 = vmatprep.subr.mxu0 0.0
      %1042 = vmatpush1.msra.mxu0 %v791
      %1043 = vmatprep.subr.mxu0 0.0
      %1044 = vmatpush1.msra.mxu0 %v792
      %1045 = vmatprep.subr.mxu0 0.0
      %1046 = vmatpush1.msra.mxu0 %v793
      %1047 = vmatprep.subr.mxu0 0.0
      %1048 = vmatpush1.msra.mxu0 %v794
      %1049 = vmatprep.subr.mxu0 0.0
      %1050 = vmatpush1.msra.mxu0 %v795
      %1051 = vmatprep.subr.mxu0 0.0
      %1052 = vmatpush1.msra.mxu0 %v796
      %1053 = vmatprep.subr.mxu0 0.0
      %1054 = vmatpush1.msra.mxu0 %v797
      %1055 = vmatprep.subr.mxu0 0.0
      %1056 = vmatpush1.msra.mxu0 %v798
      %1057 = vmatprep.subr.mxu0 0.0
      %1058 = vmatpush1.msra.mxu0 %v799
      %1059 = vmatprep.subr.mxu0 0.0
      %1060 = vmatpush1.msra.mxu0 %v800
      %1061 = vmatprep.subr.mxu0 0.0
      %1062 = vmatpush1.msra.mxu0 %v801
      %1063 = vmatprep.subr.mxu0 0.0
      %1064 = vmatpush1.msra.mxu0 0.0
      %1065 = vmatprep.subr.mxu0 0.0
      %1066 = vmatpush1.msra.mxu0 0.0
      %1067 = vmatprep.subr.mxu0 0.0
      %1068 = vmatpush1.msra.mxu0 0.0
      %1069 = vmatprep.subr.mxu0 0.0
      %1070 = vmatpush1.msra.mxu0 0.0
      %1071 = vmatprep.subr.mxu0 0.0
      %1072 = vmatpush1.msra.mxu0 0.0
      %1073 = vmatprep.subr.mxu0 0.0
      %1074 = vmatpush1.msra.mxu0 0.0
      %1075 = vmatprep.subr.mxu0 0.0
      %1076 = vmatpush1.msra.mxu0 0.0
      %1077 = vmatprep.subr.mxu0 0.0
      %1078 = vmatpush1.msra.mxu0 0.0
      %1079 = vmatprep.mubr.f32.mxu0 %v999
      %1080 = vmatmul.mubr.f32.gmra.mrb[0].mxu0 %v975
      %v1081 = vpop.f32.mrb[0].mxu0
      %v1082 = vadd.f32 %v937, %v1081
      %v1083 = vpop.f32.mrb[0].mxu0
      %1084 = vmatprep.mubr.f32.mxu0 %v1001
      %1085 = vmatmul.mubr.f32.gmra.mrb[0].mxu0 %v977
      %v1086 = vpop.f32.mrb[0].mxu0
      %v1087 = vadd.f32 %v942, %v1086
      %v1088 = vpop.f32.mrb[0].mxu0
      %1089 = vmatprep.mubr.f32.mxu0 %v1003
      %1090 = vmatmul.mubr.f32.gmra.mrb[0].mxu0 %v979
      %v1091 = vpop.f32.mrb[0].mxu0
      %v1092 = vadd.f32 %v947, %v1091
      %v1093 = vpop.f32.mrb[0].mxu0
      %1094 = vmatprep.mubr.f32.mxu0 %v1005
      %1095 = vmatmul.mubr.f32.gmra.mrb[0].mxu0 %v981
      %v1096 = vpop.f32.mrb[0].mxu0
      %v1097 = vadd.f32 %v952, %v1096
      %v1098 = vpop.f32.mrb[0].mxu0
      %1099 = vmatprep.mubr.f32.mxu0 %v1007
      %1100 = vmatmul.mubr.f32.gmra.mrb[0].mxu0 %v983
      %v1101 = vpop.f32.mrb[0].mxu0
      %v1102 = vadd.f32 %v957, %v1101
      %v1103 = vpop.f32.mrb[0].mxu0
      %1104 = vmatprep.mubr.f32.mxu0 %v1009
      %1105 = vmatmul.mubr.f32.gmra.mrb[0].mxu0 %v985
      %v1106 = vpop.f32.mrb[0].mxu0
      %v1107 = vadd.f32 %v962, %v1106
      %v1108 = vpop.f32.mrb[0].mxu0
      %1109 = vmatprep.mubr.f32.mxu0 %v1011
      %1110 = vmatmul.mubr.f32.gmra.mrb[0].mxu0 %v987
      %v1111 = vpop.f32.mrb[0].mxu0
      %v1112 = vadd.f32 %v967, %v1111
      %v1113 = vpop.f32.mrb[0].mxu0
      %1114 = vmatprep.mubr.f32.mxu0 %v1013
      %1115 = vmatmul.mubr.f32.gmra.mrb[0].mxu0 %v989
      %v1116 = vpop.f32.mrb[0].mxu0
      %v1117 = vadd.f32 %v972, %v1116
      %v1118 = vpop.f32.mrb[0].mxu0
      %1119 = vdwg.mxu0
      %v1121 = vcombine.low %v743, %v723
      %v1122 = vcombine.low %v703, %v753
      %s1123 = scalar_lea.vmem %s4, 384
      %v1124 = vld [vmem:[%s1123] sm:$0xff]
      %v1125 = vld [vmem:[%s1123 + $0x8] sm:$0xff]
      %v1126 = vld [vmem:[%s1123 + $0x10] sm:$0xff]
      %v1127 = vld [vmem:[%s1123 + $0x18] sm:$0xff]
      %v1128 = vld [vmem:[%s1123 + $0x20] sm:$0xff]
      %v1129 = vld [vmem:[%s1123 + $0x28] sm:$0xff]
      %v1130 = vld [vmem:[%s1123 + $0x30] sm:$0xff]
      %v1131 = vld [vmem:[%s1123 + $0x38] sm:$0xff]
      %v1132 = vld [vmem:[%s1123 + $0x40] sm:$0xff]
      %v1133 = vld [vmem:[%s1123 + $0x48] sm:$0xff]
      %v1134 = vld [vmem:[%s1123 + $0x50] sm:$0xff]
      %v1135 = vld [vmem:[%s1123 + $0x58] sm:$0xff]
      %v1136 = vld [vmem:[%s1123 + $0x60] sm:$0xff]
      %v1137 = vld [vmem:[%s1123 + $0x68] sm:$0xff]
      %v1138 = vld [vmem:[%s1123 + $0x70] sm:$0xff]
      %v1139 = vld [vmem:[%s1123 + $0x78] sm:$0xff]
      %v1140 = vld [vmem:[%s1123 + $0x80] sm:$0xff]
      %v1141 = vld [vmem:[%s1123 + $0x88] sm:$0xff]
      %v1142 = vld [vmem:[%s1123 + $0x90] sm:$0xff]
      %v1143 = vld [vmem:[%s1123 + $0x98] sm:$0xff]
      %v1144 = vld [vmem:[%s1123 + $0xa0] sm:$0xff]
      %v1145 = vld [vmem:[%s1123 + $0xa8] sm:$0xff]
      %v1146 = vld [vmem:[%s1123 + $0xb0] sm:$0xff]
      %v1147 = vld [vmem:[%s1123 + $0xb8] sm:$0xff]
      %v1148 = vcombine.low %v803, %v1121
      %v1149 = vcombine.high %v803, %v1121
      %v1150 = vcombine.low %v804, %v1122
      %v1151 = vcombine.high %v804, %v1122
      %v1154 = vsel %vm359, %v1149, 0
      %v1156 = vsel %vm359, %v1151, 0
      %1158 = vmatprep.subr.mxu0 0.0
      %1159 = vmatpush1.msra.mxu0 %v1124
      %1160 = vmatprep.subr.mxu0 0.0
      %1161 = vmatpush1.msra.mxu0 %v1125
      %1162 = vmatprep.subr.mxu0 0.0
      %1163 = vmatpush1.msra.mxu0 %v1126
      %1164 = vmatprep.subr.mxu0 0.0
      %1165 = vmatpush1.msra.mxu0 %v1127
      %1166 = vmatprep.subr.mxu0 0.0
      %1167 = vmatpush1.msra.mxu0 %v1128
      %1168 = vmatprep.subr.mxu0 0.0
      %1169 = vmatpush1.msra.mxu0 %v1129
      %1170 = vmatprep.subr.mxu0 0.0
      %1171 = vmatpush1.msra.mxu0 %v1130
      %1172 = vmatprep.subr.mxu0 0.0
      %1173 = vmatpush1.msra.mxu0 %v1131
      %1174 = vmatprep.subr.mxu0 0.0
      %1175 = vmatpush1.msra.mxu0 %v1132
      %1176 = vmatprep.subr.mxu0 0.0
      %1177 = vmatpush1.msra.mxu0 %v1133
      %1178 = vmatprep.subr.mxu0 0.0
      %1179 = vmatpush1.msra.mxu0 %v1134
      %1180 = vmatprep.subr.mxu0 0.0
      %1181 = vmatpush1.msra.mxu0 %v1135
      %1182 = vmatprep.subr.mxu0 0.0
      %1183 = vmatpush1.msra.mxu0 %v1136
      %1184 = vmatprep.subr.mxu0 0.0
      %1185 = vmatpush1.msra.mxu0 %v1137
      %1186 = vmatprep.subr.mxu0 0.0
      %1187 = vmatpush1.msra.mxu0 %v1138
      %1188 = vmatprep.subr.mxu0 0.0
      %1189 = vmatpush1.msra.mxu0 %v1139
      %1190 = vmatprep.subr.mxu0 0.0
      %1191 = vmatpush1.msra.mxu0 %v1140
      %1192 = vmatprep.subr.mxu0 0.0
      %1193 = vmatpush1.msra.mxu0 %v1141
      %1194 = vmatprep.subr.mxu0 0.0
      %1195 = vmatpush1.msra.mxu0 %v1142
      %1196 = vmatprep.subr.mxu0 0.0
      %1197 = vmatpush1.msra.mxu0 %v1143
      %1198 = vmatprep.subr.mxu0 0.0
      %1199 = vmatpush1.msra.mxu0 %v1144
      %1200 = vmatprep.subr.mxu0 0.0
      %1201 = vmatpush1.msra.mxu0 %v1145
      %1202 = vmatprep.subr.mxu0 0.0
      %1203 = vmatpush1.msra.mxu0 %v1146
      %1204 = vmatprep.subr.mxu0 0.0
      %1205 = vmatpush1.msra.mxu0 %v1147
      %1206 = vmatprep.subr.mxu0 0.0
      %1207 = vmatpush1.msra.mxu0 0.0
      %1208 = vmatprep.subr.mxu0 0.0
      %1209 = vmatpush1.msra.mxu0 0.0
      %1210 = vmatprep.subr.mxu0 0.0
      %1211 = vmatpush1.msra.mxu0 0.0
      %1212 = vmatprep.subr.mxu0 0.0
      %1213 = vmatpush1.msra.mxu0 0.0
      %1214 = vmatprep.subr.mxu0 0.0
      %1215 = vmatpush1.msra.mxu0 0.0
      %1216 = vmatprep.subr.mxu0 0.0
      %1217 = vmatpush1.msra.mxu0 0.0
      %1218 = vmatprep.subr.mxu0 0.0
      %1219 = vmatpush1.msra.mxu0 0.0
      %1220 = vmatprep.subr.mxu0 0.0
      %1221 = vmatpush1.msra.mxu0 0.0
      %1222 = vmatprep.mubr.f32.mxu0 %v1001
      %1223 = vmatmul.mubr.f32.gmra.mrb[0].mxu0 %v977
      %v1224 = vpop.f32.mrb[0].mxu0
      %v1225 = vadd.f32 0.0, %v1224
      %v1226 = vpop.f32.mrb[0].mxu0
      %1227 = vmatprep.mubr.f32.mxu0 %v1003
      %1228 = vmatmul.mubr.f32.gmra.mrb[0].mxu0 %v979
      %v1229 = vpop.f32.mrb[0].mxu0
      %v1230 = vadd.f32 0.0, %v1229
      %v1231 = vpop.f32.mrb[0].mxu0
      %1232 = vmatprep.mubr.f32.mxu0 %v1005
      %1233 = vmatmul.mubr.f32.gmra.mrb[0].mxu0 %v981
      %v1234 = vpop.f32.mrb[0].mxu0
      %v1235 = vadd.f32 0.0, %v1234
      %v1236 = vpop.f32.mrb[0].mxu0
      %1237 = vmatprep.mubr.f32.mxu0 %v1154
      %1238 = vmatmul.mubr.f32.gmra.mrb[0].mxu0 %v1148
      %v1239 = vpop.f32.mrb[0].mxu0
      %v1240 = vadd.f32 0.0, %v1239
      %v1241 = vpop.f32.mrb[0].mxu0
      %1242 = vmatprep.mubr.f32.mxu0 %v1009
      %1243 = vmatmul.mubr.f32.gmra.mrb[0].mxu0 %v985
      %v1244 = vpop.f32.mrb[0].mxu0
      %v1245 = vadd.f32 0.0, %v1244
      %v1246 = vpop.f32.mrb[0].mxu0
      %1247 = vmatprep.mubr.f32.mxu0 %v1011
      %1248 = vmatmul.mubr.f32.gmra.mrb[0].mxu0 %v987
      %v1249 = vpop.f32.mrb[0].mxu0
      %v1250 = vadd.f32 0.0, %v1249
      %v1251 = vpop.f32.mrb[0].mxu0
      %1252 = vmatprep.mubr.f32.mxu0 %v1013
      %1253 = vmatmul.mubr.f32.gmra.mrb[0].mxu0 %v989
      %v1254 = vpop.f32.mrb[0].mxu0
      %v1255 = vadd.f32 0.0, %v1254
      %v1256 = vpop.f32.mrb[0].mxu0
      %1257 = vmatprep.mubr.f32.mxu0 %v1156
      %1258 = vmatmul.mubr.f32.gmra.mrb[0].mxu0 %v1150
      %v1259 = vpop.f32.mrb[0].mxu0
      %v1260 = vadd.f32 0.0, %v1259
      %v1261 = vpop.f32.mrb[0].mxu0
      %1262 = vdwg.mxu0
      %v1263 = vadd.f32 %v1082, %v1225
      %v1264 = vadd.f32 %v1087, %v1230
      %v1265 = vadd.f32 %v1092, %v1235
      %v1266 = vadd.f32 %v1097, %v1240
      %v1267 = vadd.f32 %v1102, %v1245
      %v1268 = vadd.f32 %v1107, %v1250
      %v1269 = vadd.f32 %v1112, %v1255
      %v1270 = vadd.f32 %v1117, %v1260
      %v1271 = vld [vmem:[%s5] sm:$0x1]
      %v1273 = vlaneseq
      %v1274 = vshrl.u32 %v1273, 7
      %v1275 = vsub.s32 0, %v1274
      %v1276 = vrot.slane %v1271, %v1275
      %v1278 = vadd.f32 %v1263, %v1276
      %v1279 = vadd.f32 %v1264, %v1276
      %v1280 = vadd.f32 %v1265, %v1276
      %v1281 = vadd.f32 %v1266, %v1276
      %v1282 = vadd.f32 %v1267, %v1276
      %v1283 = vadd.f32 %v1268, %v1276
      %v1284 = vadd.f32 %v1269, %v1276
      %v1285 = vadd.f32 %v1270, %v1276
      %vm1286 = vcmp.gt.f32.partialorder %v1278, 0.0
      %vm1287 = vcmp.gt.f32.partialorder %v1279, 0.0
      %vm1288 = vcmp.gt.f32.partialorder %v1280, 0.0
      %vm1289 = vcmp.gt.f32.partialorder %v1281, 0.0
      %vm1290 = vcmp.gt.f32.partialorder %v1282, 0.0
      %vm1291 = vcmp.gt.f32.partialorder %v1283, 0.0
      %vm1292 = vcmp.gt.f32.partialorder %v1284, 0.0
      %vm1293 = vcmp.gt.f32.partialorder %v1285, 0.0
      %v1294 = vmul.f32 %v1278, 0.1
      %v1295 = vmul.f32 %v1279, 0.1
      %v1296 = vmul.f32 %v1280, 0.1
      %v1297 = vmul.f32 %v1281, 0.1
      %v1298 = vmul.f32 %v1282, 0.1
      %v1299 = vmul.f32 %v1283, 0.1
      %v1300 = vmul.f32 %v1284, 0.1
      %v1301 = vmul.f32 %v1285, 0.1
      %v1302 = vsel %vm1286, %v1278, %v1294
      %v1303 = vsel %vm1287, %v1279, %v1295
      %v1304 = vsel %vm1288, %v1280, %v1296
      %v1305 = vsel %vm1289, %v1281, %v1297
      %v1306 = vsel %vm1290, %v1282, %v1298
      %v1307 = vsel %vm1291, %v1283, %v1299
      %v1308 = vsel %vm1292, %v1284, %v1300
      %v1309 = vsel %vm1293, %v1285, %v1301
      %v1318 = vcombine.high %v1302, %v1302
      %v1319 = vcombine.high %v1303, %v1303
      %v1320 = vcombine.high %v1304, %v1304
      %v1321 = vcombine.high %v1305, %v1305
      %v1322 = vcombine.high %v1306, %v1306
      %v1323 = vcombine.high %v1307, %v1307
      %v1324 = vcombine.high %v1308, %v1308
      %v1325 = vcombine.high %v1309, %v1309
      %1330 = vrot.lane.b32.xlu0 %v1306, 32
      %v1331 = vpop.permute.xlu0 %1330
      %1332 = vrot.lane.b32.xlu0 %v1322, 32
      %v1333 = vpop.permute.xlu0 %1332
      %1334 = vrot.lane.b32.xlu0 %v1307, 32
      %v1335 = vpop.permute.xlu0 %1334
      %1336 = vrot.lane.b32.xlu0 %v1323, 32
      %v1337 = vpop.permute.xlu0 %1336
      %1338 = vrot.lane.b32.xlu0 %v1308, 32
      %v1339 = vpop.permute.xlu0 %1338
      %1340 = vrot.lane.b32.xlu0 %v1324, 32
      %v1341 = vpop.permute.xlu0 %1340
      %1342 = vrot.lane.b32.xlu0 %v1309, 32
      %v1343 = vpop.permute.xlu0 %1342
      %1344 = vrot.lane.b32.xlu0 %v1325, 32
      %v1345 = vpop.permute.xlu0 %1344
      %v1354 = vsel %vm354, %v1302, %v1331
      %v1355 = vsel %vm354, %v1318, %v1333
      %v1356 = vsel %vm354, %v1303, %v1335
      %v1357 = vsel %vm354, %v1319, %v1337
      %v1358 = vsel %vm354, %v1304, %v1339
      %v1359 = vsel %vm354, %v1320, %v1341
      %v1360 = vsel %vm354, %v1305, %v1343
      %v1361 = vsel %vm354, %v1321, %v1345
      %vm1362 = vcmask 519168
      %1363 = vst.msk [vmem:[%s271] sm:$0xf] %vm1362, %v1354
      %1364 = vst.msk [vmem:[%s271 + $0x4] sm:$0xf] %vm1362, %v1355
      %1365 = vst.msk [vmem:[%s271 + $0x8] sm:$0xf] %vm1362, %v1356
      %1366 = vst.msk [vmem:[%s271 + $0xc] sm:$0xf] %vm1362, %v1357
      %1367 = vst.msk [vmem:[%s271 + $0x10] sm:$0xf] %vm1362, %v1358
      %1368 = vst.msk [vmem:[%s271 + $0x14] sm:$0xf] %vm1362, %v1359
      %1369 = vst.msk [vmem:[%s271 + $0x18] sm:$0xf] %vm1362, %v1360
      %1370 = vst.msk [vmem:[%s271 + $0x1c] sm:$0xf] %vm1362, %v1361
      %p1371 = scmp.lt.s32.totalorder %s17, 1
      %s1372 = scalar_select %p1371, %s17, 1
      %s1373 = smul.addr %s1372, 8
      %s1374 = smul.addr %s1373, 4
      %s1375 = scalar_lea.vmem %s6, %s1374
      // Predicated region
      $region45: #{unet_decoder_forward.2} parent=43 // pred_check
        %p1376 = pneg %p171
      $region46: #{unet_decoder_forward.2} parent=43 // pred_check_branch
        %1378 = sbr.rel (%p1376) target = $region48
      $region47: #{unet_decoder_forward.2} parent=43 // pred_region
        _
      $region48: #{unet_decoder_forward.2} parent=43 // pred_fallthru
        _
    $region44: #{unet_decoder_forward.2} parent=5 // pred_fallthru
      _
    %p1379 = scmp.le.s32.totalorder 2, %s12
    // Predicated region
    $region49: #{unet_decoder_forward.2} parent=5 // pred_check
      %p1380 = pneg %p1379
    $region50: #{unet_decoder_forward.2} parent=5 // pred_check_branch
      %1382 = sbr.rel (%p1380) target = $region52
    $region51: #{unet_decoder_forward.2} parent=5 // pred_region
      %s1383 = ssub.s32 %s12, 2
      // Predicated region
      $region53: #{unet_decoder_forward.2} parent=51 // pred_check
        %p1384 = pneg %p177
      $region54: #{unet_decoder_forward.2} parent=51 // pred_check_branch
        %1386 = sbr.rel (%p1384) target = $region56
      $region55: #{unet_decoder_forward.2} parent=51 // pred_region
        %p1387 = scmp.lt.s32.totalorder %s18, 1
        %s1388 = scalar_select %p1387, %s18, 1
        %s1389 = smul.addr %s1388, 8
        %s1390 = smul.addr %s1389, 4
        %s1391 = scalar_lea.vmem %s6, %s1390
      $region56: #{unet_decoder_forward.2} parent=51 // pred_fallthru
        _
    $region52: #{unet_decoder_forward.2} parent=5 // pred_fallthru
      _
  $region6: #{unet_decoder_forward.2} parent=0 // loop_footer
    %s16 = sadd.s32 1, %s12
  $region7: #{unet_decoder_forward.2} parent=0 // loop_footer_branch
    %11 = sbr.rel target = $region3
  $region8: #{unet_decoder_forward.2} parent=0 // loop_exit
    _

// kernel: unet_decoder_forward.3
$region0: #{unet_decoder_forward.3}
  #allocation0 [shape = 'u32[]', space=smem, size = 0x4, offset = 0x4, fixed_abs, tag = 'smem constant byte address 0x4 - core index']
  #allocation1 [shape = 'u32[144,128]{1,0:T(1,128)}', space=vmem, size = 0x12000, scoped, tag = 'internal scratch']
  #allocation2 [shape = 'f32[9,9,32]{2,1,0:T(8,128)}', space=vmem, size = 0x12000, scoped, tag = 'scratch operand']
  #allocation3 [shape = 'f32[9,2,10,128]{3,2,1,0:T(8,128)}', space=vmem, size = 0x24000, scoped, tag = 'scratch operand']
  %s0 = inlined_call_operand.vmem [shape: f32[2,8,8,32], index: 0, kind: input, shape index: {}]
  %s1 = inlined_call_operand.vmem [shape: f32[2,16,8,64], index: 1, kind: input, shape index: {}]
  %s2 = inlined_call_operand.vmem [shape: f32[128,128], index: 2, kind: input, shape index: {}]
  %s3 = inlined_call_operand.vmem [shape: f32[1,128], index: 3, kind: input, shape index: {}]
  %s4 = inlined_call_operand.vmem [shape: f32[3,192,32], index: 4, kind: input, shape index: {}]
  %s5 = inlined_call_operand.vmem [shape: f32[1,32], index: 5, kind: input, shape index: {}]
  %s6 = inlined_call_operand.vmem [shape: f32[32,4], index: 6, kind: input, shape index: {}]
  %s7 = inlined_call_operand.vmem [shape: f32[1,4], index: 7, kind: input, shape index: {}]
  %s8 = inlined_call_operand.vmem [shape: f32[2,16,8,8], index: 8, kind: output, shape index: {}]
  %s9 = sld [smem:[#allocation0]]
  $region65: #{unet_decoder_forward.3} parent=0
    _
  %s11 = ssub.s32 1, %s9
  %s12 = scalar_select 0, %s11, %s9
  loop: start=0, step=1, limit=4
  $region2: #{unet_decoder_forward.3} parent=0 // loop_pre_header
    _
  $region3: #{unet_decoder_forward.3} parent=0 // loop_header
    %s14 = sphi 0, %s18
    %p15 = scmp.ge.s32.totalorder %s14, 4
    %s24 = sphi 0, %s26
    %s27 = sphi 0, %s24
    %s28 = sphi 0, %s27
    %s44 = sphi 0, %s28
    %s50 = sphi 0, %s52
    %s53 = sphi 0, %s50
    %s54 = sphi 0, %s53
    %s70 = sphi 0, %s54
    %s74 = sphi 0, %s74
    %s76 = sphi 0, %s74
    %s77 = sphi 0, %s76
    %s91 = sphi 0, %s77
    %s95 = sphi 0, %s95
    %s97 = sphi 0, %s95
    %s98 = sphi 0, %s97
    %s112 = sphi 0, %s98
    %s116 = sphi 0, %s116
    %s118 = sphi 0, %s116
    %s119 = sphi 0, %s118
    %s133 = sphi 0, %s119
    %s137 = sphi 0, %s137
    %s139 = sphi 0, %s137
    %s140 = sphi 0, %s139
    %s154 = sphi 0, %s140
    %s158 = sphi 0, %s158
    %s160 = sphi 0, %s158
    %s161 = sphi 0, %s160
    %s175 = sphi 0, %s161
    %s179 = sphi 0, %s179
    %s181 = sphi 0, %s179
    %s182 = sphi 0, %s181
    %s196 = sphi 0, %s182
    %s202 = sphi 0, %s204
    %s205 = sphi 0, %s202
    %s206 = sphi 0, %s205
    %s222 = sphi 0, %s206
  $region4: #{unet_decoder_forward.3} parent=0 // loop_header_branch
    %17 = sbr.rel (%p15) target = $region8
  $region5: #{unet_decoder_forward.3} parent=0 // loop_body
    %s19 = ssub.s32 %s14, 1
    %s20 = ssub.s32 %s14, 2
    %s21 = sadd.s32 %s14, 1
    %s22 = ssub.s32 %s14, %s21
    %p23 = scmp.eq.s32.totalorder %s22, 0
    %s25 = sadd.s32 %s24, 1
    %s26 = scalar_select %p23, %s24, %s25
    %p29 = pneg %p23
    %p30 = scmp.eq.s32.totalorder %s14, 1
    %p31 = por %p29, %p30
    %p32 = scmp.ne.s32.totalorder %s24, %s27
    %p33 = scmp.eq.s32.totalorder %s14, 0
    %p34 = por %p32, %p33
    %p35 = scmp.ne.s32.totalorder %s24, %s27
    %p36 = scmp.eq.s32.totalorder %s19, 1
    %p37 = por %p35, %p36
    %p38 = scmp.ne.s32.totalorder %s27, %s28
    %p39 = scmp.eq.s32.totalorder %s19, 0
    %p40 = por %p38, %p39
    %p41 = scmp.ne.s32.totalorder %s27, %s28
    %p42 = scmp.eq.s32.totalorder %s20, 1
    %p43 = por %p41, %p42
    %p45 = scmp.ne.s32.totalorder %s28, %s44
    %p46 = scmp.eq.s32.totalorder %s20, 0
    %p47 = por %p45, %p46
    %s48 = ssub.s32 %s14, %s21
    %p49 = scmp.eq.s32.totalorder %s48, 0
    %s51 = sadd.s32 %s50, 1
    %s52 = scalar_select %p49, %s50, %s51
    %p55 = pneg %p49
    %p56 = scmp.eq.s32.totalorder %s14, 1
    %p57 = por %p55, %p56
    %p58 = scmp.ne.s32.totalorder %s50, %s53
    %p59 = scmp.eq.s32.totalorder %s14, 0
    %p60 = por %p58, %p59
    %p61 = scmp.ne.s32.totalorder %s50, %s53
    %p62 = scmp.eq.s32.totalorder %s19, 1
    %p63 = por %p61, %p62
    %p64 = scmp.ne.s32.totalorder %s53, %s54
    %p65 = scmp.eq.s32.totalorder %s19, 0
    %p66 = por %p64, %p65
    %p67 = scmp.ne.s32.totalorder %s53, %s54
    %p68 = scmp.eq.s32.totalorder %s20, 1
    %p69 = por %p67, %p68
    %p71 = scmp.ne.s32.totalorder %s54, %s70
    %p72 = scmp.eq.s32.totalorder %s20, 0
    %p73 = por %p71, %p72
    %s75 = sadd.s32 %s74, 1
    %p78 = scmp.eq.s32.totalorder %s14, 1
    %p79 = scmp.ne.s32.totalorder %s74, %s76
    %p80 = scmp.eq.s32.totalorder %s14, 0
    %p81 = por %p79, %p80
    %p82 = scmp.ne.s32.totalorder %s74, %s76
    %p83 = scmp.eq.s32.totalorder %s19, 1
    %p84 = por %p82, %p83
    %p85 = scmp.ne.s32.totalorder %s76, %s77
    %p86 = scmp.eq.s32.totalorder %s19, 0
    %p87 = por %p85, %p86
    %p88 = scmp.ne.s32.totalorder %s76, %s77
    %p89 = scmp.eq.s32.totalorder %s20, 1
    %p90 = por %p88, %p89
    %p92 = scmp.ne.s32.totalorder %s77, %s91
    %p93 = scmp.eq.s32.totalorder %s20, 0
    %p94 = por %p92, %p93
    %s96 = sadd.s32 %s95, 1
    %p99 = scmp.eq.s32.totalorder %s14, 1
    %p100 = scmp.ne.s32.totalorder %s95, %s97
    %p101 = scmp.eq.s32.totalorder %s14, 0
    %p102 = por %p100, %p101
    %p103 = scmp.ne.s32.totalorder %s95, %s97
    %p104 = scmp.eq.s32.totalorder %s19, 1
    %p105 = por %p103, %p104
    %p106 = scmp.ne.s32.totalorder %s97, %s98
    %p107 = scmp.eq.s32.totalorder %s19, 0
    %p108 = por %p106, %p107
    %p109 = scmp.ne.s32.totalorder %s97, %s98
    %p110 = scmp.eq.s32.totalorder %s20, 1
    %p111 = por %p109, %p110
    %p113 = scmp.ne.s32.totalorder %s98, %s112
    %p114 = scmp.eq.s32.totalorder %s20, 0
    %p115 = por %p113, %p114
    %s117 = sadd.s32 %s116, 1
    %p120 = scmp.eq.s32.totalorder %s14, 1
    %p121 = scmp.ne.s32.totalorder %s116, %s118
    %p122 = scmp.eq.s32.totalorder %s14, 0
    %p123 = por %p121, %p122
    %p124 = scmp.ne.s32.totalorder %s116, %s118
    %p125 = scmp.eq.s32.totalorder %s19, 1
    %p126 = por %p124, %p125
    %p127 = scmp.ne.s32.totalorder %s118, %s119
    %p128 = scmp.eq.s32.totalorder %s19, 0
    %p129 = por %p127, %p128
    %p130 = scmp.ne.s32.totalorder %s118, %s119
    %p131 = scmp.eq.s32.totalorder %s20, 1
    %p132 = por %p130, %p131
    %p134 = scmp.ne.s32.totalorder %s119, %s133
    %p135 = scmp.eq.s32.totalorder %s20, 0
    %p136 = por %p134, %p135
    %s138 = sadd.s32 %s137, 1
    %p141 = scmp.eq.s32.totalorder %s14, 1
    %p142 = scmp.ne.s32.totalorder %s137, %s139
    %p143 = scmp.eq.s32.totalorder %s14, 0
    %p144 = por %p142, %p143
    %p145 = scmp.ne.s32.totalorder %s137, %s139
    %p146 = scmp.eq.s32.totalorder %s19, 1
    %p147 = por %p145, %p146
    %p148 = scmp.ne.s32.totalorder %s139, %s140
    %p149 = scmp.eq.s32.totalorder %s19, 0
    %p150 = por %p148, %p149
    %p151 = scmp.ne.s32.totalorder %s139, %s140
    %p152 = scmp.eq.s32.totalorder %s20, 1
    %p153 = por %p151, %p152
    %p155 = scmp.ne.s32.totalorder %s140, %s154
    %p156 = scmp.eq.s32.totalorder %s20, 0
    %p157 = por %p155, %p156
    %s159 = sadd.s32 %s158, 1
    %p162 = scmp.eq.s32.totalorder %s14, 1
    %p163 = scmp.ne.s32.totalorder %s158, %s160
    %p164 = scmp.eq.s32.totalorder %s14, 0
    %p165 = por %p163, %p164
    %p166 = scmp.ne.s32.totalorder %s158, %s160
    %p167 = scmp.eq.s32.totalorder %s19, 1
    %p168 = por %p166, %p167
    %p169 = scmp.ne.s32.totalorder %s160, %s161
    %p170 = scmp.eq.s32.totalorder %s19, 0
    %p171 = por %p169, %p170
    %p172 = scmp.ne.s32.totalorder %s160, %s161
    %p173 = scmp.eq.s32.totalorder %s20, 1
    %p174 = por %p172, %p173
    %p176 = scmp.ne.s32.totalorder %s161, %s175
    %p177 = scmp.eq.s32.totalorder %s20, 0
    %p178 = por %p176, %p177
    %s180 = sadd.s32 %s179, 1
    %p183 = scmp.eq.s32.totalorder %s14, 1
    %p184 = scmp.ne.s32.totalorder %s179, %s181
    %p185 = scmp.eq.s32.totalorder %s14, 0
    %p186 = por %p184, %p185
    %p187 = scmp.ne.s32.totalorder %s179, %s181
    %p188 = scmp.eq.s32.totalorder %s19, 1
    %p189 = por %p187, %p188
    %p190 = scmp.ne.s32.totalorder %s181, %s182
    %p191 = scmp.eq.s32.totalorder %s19, 0
    %p192 = por %p190, %p191
    %p193 = scmp.ne.s32.totalorder %s181, %s182
    %p194 = scmp.eq.s32.totalorder %s20, 1
    %p195 = por %p193, %p194
    %p197 = scmp.ne.s32.totalorder %s182, %s196
    %p198 = scmp.eq.s32.totalorder %s20, 0
    %p199 = por %p197, %p198
    %s200 = ssub.s32 %s14, %s21
    %p201 = scmp.eq.s32.totalorder %s200, 0
    %s203 = sadd.s32 %s202, 1
    %s204 = scalar_select %p201, %s202, %s203
    %p207 = pneg %p201
    %p208 = scmp.eq.s32.totalorder %s14, 1
    %p209 = por %p207, %p208
    %p210 = scmp.ne.s32.totalorder %s202, %s205
    %p211 = scmp.eq.s32.totalorder %s14, 0
    %p212 = por %p210, %p211
    %p213 = scmp.ne.s32.totalorder %s202, %s205
    %p214 = scmp.eq.s32.totalorder %s19, 1
    %p215 = por %p213, %p214
    %p216 = scmp.ne.s32.totalorder %s205, %s206
    %p217 = scmp.eq.s32.totalorder %s19, 0
    %p218 = por %p216, %p217
    %p219 = scmp.ne.s32.totalorder %s205, %s206
    %p220 = scmp.eq.s32.totalorder %s20, 1
    %p221 = por %p219, %p220
    %p223 = scmp.ne.s32.totalorder %s206, %s222
    %p224 = scmp.eq.s32.totalorder %s20, 0
    %p225 = por %p223, %p224
    %p226 = scmp.le.s32.totalorder 1, %s14
    %p227 = scmp.lt.s32.totalorder %s14, 3
    %p228 = pnand %p226, %p227
    %p229 = pneg %p228
    // Predicated region
    $region9: #{unet_decoder_forward.3} parent=5 // pred_check
      _
    $region10: #{unet_decoder_forward.3} parent=5 // pred_check_branch
      %231 = sbr.rel (%p228) target = $region12
    $region11: #{unet_decoder_forward.3} parent=5 // pred_region
      %s232 = ssub.s32 %s14, 1
      // Predicated region
      $region13: #{unet_decoder_forward.3} parent=11 // pred_check
        %p233 = pneg %p87
      $region14: #{unet_decoder_forward.3} parent=11 // pred_check_branch
        %235 = sbr.rel (%p233) target = $region16
      $region15: #{unet_decoder_forward.3} parent=11 // pred_region
        _
      $region16: #{unet_decoder_forward.3} parent=11 // pred_fallthru
        _
      // Predicated region
      $region17: #{unet_decoder_forward.3} parent=11 // pred_check
        %p236 = pneg %p108
      $region18: #{unet_decoder_forward.3} parent=11 // pred_check_branch
        %238 = sbr.rel (%p236) target = $region20
      $region19: #{unet_decoder_forward.3} parent=11 // pred_region
        _
      $region20: #{unet_decoder_forward.3} parent=11 // pred_fallthru
        _
      // Predicated region
      $region21: #{unet_decoder_forward.3} parent=11 // pred_check
        %p239 = pneg %p129
      $region22: #{unet_decoder_forward.3} parent=11 // pred_check_branch
        %241 = sbr.rel (%p239) target = $region24
      $region23: #{unet_decoder_forward.3} parent=11 // pred_region
        _
      $region24: #{unet_decoder_forward.3} parent=11 // pred_fallthru
        _
      // Predicated region
      $region25: #{unet_decoder_forward.3} parent=11 // pred_check
        %p242 = pneg %p150
      $region26: #{unet_decoder_forward.3} parent=11 // pred_check_branch
        %244 = sbr.rel (%p242) target = $region28
      $region27: #{unet_decoder_forward.3} parent=11 // pred_region
        _
      $region28: #{unet_decoder_forward.3} parent=11 // pred_fallthru
        _
      // Predicated region
      $region29: #{unet_decoder_forward.3} parent=11 // pred_check
        %p245 = pneg %p171
      $region30: #{unet_decoder_forward.3} parent=11 // pred_check_branch
        %247 = sbr.rel (%p245) target = $region32
      $region31: #{unet_decoder_forward.3} parent=11 // pred_region
        _
      $region32: #{unet_decoder_forward.3} parent=11 // pred_fallthru
        _
      // Predicated region
      $region33: #{unet_decoder_forward.3} parent=11 // pred_check
        %p248 = pneg %p192
      $region34: #{unet_decoder_forward.3} parent=11 // pred_check_branch
        %250 = sbr.rel (%p248) target = $region36
      $region35: #{unet_decoder_forward.3} parent=11 // pred_region
        _
      $region36: #{unet_decoder_forward.3} parent=11 // pred_fallthru
        _
    $region12: #{unet_decoder_forward.3} parent=5 // pred_fallthru
      _
    %p251 = scmp.lt.s32.totalorder %s14, 2
    // Predicated region
    $region37: #{unet_decoder_forward.3} parent=5 // pred_check
      %p252 = pneg %p251
    $region38: #{unet_decoder_forward.3} parent=5 // pred_check_branch
      %254 = sbr.rel (%p252) target = $region40
    $region39: #{unet_decoder_forward.3} parent=5 // pred_region
      // Predicated region
      $region41: #{unet_decoder_forward.3} parent=39 // pred_check
        %p255 = pneg %p34
      $region42: #{unet_decoder_forward.3} parent=39 // pred_check_branch
        %257 = sbr.rel (%p255) target = $region44
      $region43: #{unet_decoder_forward.3} parent=39 // pred_region
        %p258 = scmp.lt.s32.totalorder %s14, 1
        %s259 = scalar_select %p258, %s14, 1
        %s260 = smul.addr %s259, 8
        %s261 = smul.addr %s260, 8
        %s262 = scalar_lea.vmem %s0, %s261
      $region44: #{unet_decoder_forward.3} parent=39 // pred_fallthru
        _
      // Predicated region
      $region45: #{unet_decoder_forward.3} parent=39 // pred_check
        %p263 = pneg %p60
      $region46: #{unet_decoder_forward.3} parent=39 // pred_check_branch
        %265 = sbr.rel (%p263) target = $region48
      $region47: #{unet_decoder_forward.3} parent=39 // pred_region
        %p266 = scmp.lt.s32.totalorder %s14, 1
        %s267 = scalar_select %p266, %s14, 1
        %s268 = smul.addr %s267, 16
        %s269 = smul.addr %s268, 8
        %s270 = scalar_lea.vmem %s1, %s269
      $region48: #{unet_decoder_forward.3} parent=39 // pred_fallthru
        _
    $region40: #{unet_decoder_forward.3} parent=5 // pred_fallthru
      _
    %p271 = scmp.le.s32.totalorder 1, %s14
    %p272 = scmp.lt.s32.totalorder %s14, 3
    %p273 = pnand %p271, %p272
    %p274 = pneg %p273
    // Predicated region
    $region49: #{unet_decoder_forward.3} parent=5 // pred_check
      _
    $region50: #{unet_decoder_forward.3} parent=5 // pred_check_branch
      %276 = sbr.rel (%p273) target = $region52
    $region51: #{unet_decoder_forward.3} parent=5 // pred_region
      %s277 = ssub.s32 %s14, 1
      %p278 = scmp.lt.s32.totalorder %s19, 1
      %s279 = scalar_select %p278, %s19, 1
      %s280 = smul.addr %s279, 8
      %s281 = smul.addr %s280, 8
      %s282 = scalar_lea.vmem %s0, %s281
      %p283 = pneg %p40
      %p284 = pneg %p37
      %p285 = scmp.lt.s32.totalorder %s19, 1
      %s286 = scalar_select %p285, %s19, 1
      %s287 = smul.addr %s286, 16
      %s288 = smul.addr %s287, 8
      %s289 = scalar_lea.vmem %s1, %s288
      %p290 = pneg %p66
      %p291 = pneg %p63
      %p292 = pneg %p87
      %p293 = pneg %p84
      %p294 = pneg %p108
      %p295 = pneg %p105
      %p296 = pneg %p129
      %p297 = pneg %p126
      %p298 = pneg %p150
      %p299 = pneg %p147
      %p300 = pneg %p171
      %p301 = pneg %p168
      %p302 = pneg %p192
      %p303 = pneg %p189
      %p304 = pneg %p218
      %p305 = pneg %p215
      %p306 = scmp.lt.s32.totalorder %s19, 1
      %s307 = scalar_select %p306, %s19, 1
      %s308 = smul.addr %s307, 16
      %s309 = smul.addr %s308, 8
      %s310 = scalar_lea.vmem %s8, %s309
      %p311 = scmp.lt.s32.totalorder %s19, 1
      %s312 = scalar_select %p311, %s19, 1
      %s313 = smul.addr %s312, 8
      %s314 = smul.addr %s313, 8
      %s315 = scalar_lea.vmem %s0, %s314
      %p316 = scmp.lt.s32.totalorder %s19, 1
      %s317 = scalar_select %p316, %s19, 1
      %s318 = smul.addr %s317, 16
      %s319 = smul.addr %s318, 8
      %s320 = scalar_lea.vmem %s1, %s319
      %p321 = scmp.lt.s32.totalorder %s19, 1
      %s322 = scalar_select %p321, %s19, 1
      %s323 = smul.addr %s322, 16
      %s324 = smul.addr %s323, 8
      %s325 = scalar_lea.vmem %s8, %s324
      %v326 = vld [vmem:[%s315] sm:$0xff]
      %v327 = vld [vmem:[%s315 + $0x8] sm:$0xff]
      %v328 = vld [vmem:[%s315 + $0x10] sm:$0xff]
      %v329 = vld [vmem:[%s315 + $0x18] sm:$0xff]
      %v330 = vld [vmem:[%s315 + $0x20] sm:$0xff]
      %v331 = vld [vmem:[%s315 + $0x28] sm:$0xff]
      %v332 = vld [vmem:[%s315 + $0x30] sm:$0xff]
      %v333 = vld [vmem:[%s315 + $0x38] sm:$0xff]
      %vm334 = vcmask 261120
      %335 = vst.msk [vmem:[#allocation2] sm:$0xff] %vm334, %v326
      %336 = vst.msk [vmem:[#allocation2 + $0x10] sm:$0xff] %vm334, %v327
      %337 = vst.msk [vmem:[#allocation2 + $0x20] sm:$0xff] %vm334, %v328
      %338 = vst.msk [vmem:[#allocation2 + $0x30] sm:$0xff] %vm334, %v329
      %339 = vst.msk [vmem:[#allocation2 + $0x40] sm:$0xff] %vm334, %v330
      %340 = vst.msk [vmem:[#allocation2 + $0x50] sm:$0xff] %vm334, %v331
      %341 = vst.msk [vmem:[#allocation2 + $0x60] sm:$0xff] %vm334, %v332
      %342 = vst.msk [vmem:[#allocation2 + $0x70] sm:$0xff] %vm334, %v333
      %s343 = scalar_lea.vmem [#allocation2], 128
      %344 = vst.msk [vmem:[%s343] sm:$0xff] %vm334, 0.0
      %vm345 = vcmask 253952
      %346 = vst.msk [vmem:[%s343 + $0x8] sm:$0x1] %vm345, 0.0
      %347 = vst.msk [vmem:[#allocation2 + $0x8] sm:$0x1] %vm345, 0.0
      %348 = vst.msk [vmem:[#allocation2 + $0x18] sm:$0x1] %vm345, 0.0
      %349 = vst.msk [vmem:[#allocation2 + $0x28] sm:$0x1] %vm345, 0.0
      %350 = vst.msk [vmem:[#allocation2 + $0x38] sm:$0x1] %vm345, 0.0
      %351 = vst.msk [vmem:[#allocation2 + $0x48] sm:$0x1] %vm345, 0.0
      %352 = vst.msk [vmem:[#allocation2 + $0x58] sm:$0x1] %vm345, 0.0
      %353 = vst.msk [vmem:[#allocation2 + $0x68] sm:$0x1] %vm345, 0.0
      %354 = vst.msk [vmem:[#allocation2 + $0x78] sm:$0x1] %vm345, 0.0
      %v355 = vld [vmem:[#allocation2] sm:$0xff]
      %v356 = vld [vmem:[#allocation2 + $0x10] sm:$0xff]
      %v357 = vld [vmem:[#allocation2 + $0x20] sm:$0xff]
      %v358 = vld [vmem:[#allocation2 + $0x30] sm:$0xff]
      %v359 = vld [vmem:[#allocation2 + $0x40] sm:$0xff]
      %v360 = vld [vmem:[#allocation2 + $0x50] sm:$0xff]
      %v361 = vld [vmem:[#allocation2 + $0x60] sm:$0xff]
      %v362 = vld [vmem:[#allocation2 + $0x70] sm:$0xff]
      %s363 = scalar_lea.vmem [#allocation2], 16
      %v364 = vld [vmem:[%s363] sm:$0xff]
      %v365 = vld [vmem:[%s363 + $0x10] sm:$0xff]
      %v366 = vld [vmem:[%s363 + $0x20] sm:$0xff]
      %v367 = vld [vmem:[%s363 + $0x30] sm:$0xff]
      %v368 = vld [vmem:[%s363 + $0x40] sm:$0xff]
      %v369 = vld [vmem:[%s363 + $0x50] sm:$0xff]
      %v370 = vld [vmem:[%s363 + $0x60] sm:$0xff]
      %v371 = vld [vmem:[%s363 + $0x70] sm:$0xff]
      %v372 = vld [vmem:[#allocation2 + $0x1] sm:$0xff]
      %v373 = vld [vmem:[#allocation2 + $0x11] sm:$0xff]
      %v374 = vld [vmem:[#allocation2 + $0x21] sm:$0xff]
      %v375 = vld [vmem:[#allocation2 + $0x31] sm:$0xff]
      %v376 = vld [vmem:[#allocation2 + $0x41] sm:$0xff]
      %v377 = vld [vmem:[#allocation2 + $0x51] sm:$0xff]
      %v378 = vld [vmem:[#allocation2 + $0x61] sm:$0xff]
      %v379 = vld [vmem:[#allocation2 + $0x71] sm:$0xff]
      %v380 = vld [vmem:[%s363 + $0x1] sm:$0xff]
      %v381 = vld [vmem:[%s363 + $0x11] sm:$0xff]
      %v382 = vld [vmem:[%s363 + $0x21] sm:$0xff]
      %v383 = vld [vmem:[%s363 + $0x31] sm:$0xff]
      %v384 = vld [vmem:[%s363 + $0x41] sm:$0xff]
      %v385 = vld [vmem:[%s363 + $0x51] sm:$0xff]
      %v386 = vld [vmem:[%s363 + $0x61] sm:$0xff]
      %v387 = vld [vmem:[%s363 + $0x71] sm:$0xff]
      %396 = vrot.lane.b32.xlu0 %v364, 32
      %v397 = vpop.permute.xlu0 %396
      %398 = vrot.lane.b32.xlu0 %v365, 32
      %v399 = vpop.permute.xlu0 %398
      %400 = vrot.lane.b32.xlu0 %v366, 32
      %v401 = vpop.permute.xlu0 %400
      %402 = vrot.lane.b32.xlu0 %v367, 32
      %v403 = vpop.permute.xlu0 %402
      %404 = vrot.lane.b32.xlu0 %v368, 32
      %v405 = vpop.permute.xlu0 %404
      %406 = vrot.lane.b32.xlu0 %v369, 32
      %v407 = vpop.permute.xlu0 %406
      %408 = vrot.lane.b32.xlu0 %v370, 32
      %v409 = vpop.permute.xlu0 %408
      %410 = vrot.lane.b32.xlu0 %v371, 32
      %v411 = vpop.permute.xlu0 %410
      %428 = vrot.lane.b32.xlu0 %v372, 64
      %v429 = vpop.permute.xlu0 %428
      %430 = vrot.lane.b32.xlu0 %v373, 64
      %v431 = vpop.permute.xlu0 %430
      %432 = vrot.lane.b32.xlu0 %v374, 64
      %v433 = vpop.permute.xlu0 %432
      %434 = vrot.lane.b32.xlu0 %v375, 64
      %v435 = vpop.permute.xlu0 %434
      %436 = vrot.lane.b32.xlu0 %v376, 64
      %v437 = vpop.permute.xlu0 %436
      %438 = vrot.lane.b32.xlu0 %v377, 64
      %v439 = vpop.permute.xlu0 %438
      %440 = vrot.lane.b32.xlu0 %v378, 64
      %v441 = vpop.permute.xlu0 %440
      %442 = vrot.lane.b32.xlu0 %v379, 64
      %v443 = vpop.permute.xlu0 %442
      %460 = vrot.lane.b32.xlu0 %v355, 96
      %v461 = vpop.permute.xlu0 %460
      %462 = vrot.lane.b32.xlu0 %v356, 96
      %v463 = vpop.permute.xlu0 %462
      %464 = vrot.lane.b32.xlu0 %v357, 96
      %v465 = vpop.permute.xlu0 %464
      %466 = vrot.lane.b32.xlu0 %v358, 96
      %v467 = vpop.permute.xlu0 %466
      %468 = vrot.lane.b32.xlu0 %v359, 96
      %v469 = vpop.permute.xlu0 %468
      %470 = vrot.lane.b32.xlu0 %v360, 96
      %v471 = vpop.permute.xlu0 %470
      %472 = vrot.lane.b32.xlu0 %v361, 96
      %v473 = vpop.permute.xlu0 %472
      %474 = vrot.lane.b32.xlu0 %v362, 96
      %v475 = vpop.permute.xlu0 %474
      %v484 = vsel %vm334, %v380, %v397
      %v485 = vsel %vm334, %v381, %v399
      %v486 = vsel %vm334, %v382, %v401
      %v487 = vsel %vm334, %v383, %v403
      %v488 = vsel %vm334, %v384, %v405
      %v489 = vsel %vm334, %v385, %v407
      %v490 = vsel %vm334, %v386, %v409
      %v491 = vsel %vm334, %v387, %v411
      %vm492 = vcmask 523264
      %v493 = vsel %vm492, %v484, %v429
      %v494 = vsel %vm492, %v485, %v431
      %v495 = vsel %vm492, %v486, %v433
      %v496 = vsel %vm492, %v487, %v435
      %v497 = vsel %vm492, %v488, %v437
      %v498 = vsel %vm492, %v489, %v439
      %v499 = vsel %vm492, %v490, %v441
      %v500 = vsel %vm492, %v491, %v443
      %vm501 = vcmask 785408
      %v502 = vsel %vm501, %v493, %v461
      %v503 = vsel %vm501, %v494, %v463
      %v504 = vsel %vm501, %v495, %v465
      %v505 = vsel %vm501, %v496, %v467
      %v506 = vsel %vm501, %v497, %v469
      %v507 = vsel %vm501, %v498, %v471
      %v508 = vsel %vm501, %v499, %v473
      %v509 = vsel %vm501, %v500, %v475
      %v510 = vld [vmem:[%s2] sm:$0xff]
      %v511 = vld [vmem:[%s2 + $0x8] sm:$0xff]
      %v512 = vld [vmem:[%s2 + $0x10] sm:$0xff]
      %v513 = vld [vmem:[%s2 + $0x18] sm:$0xff]
      %v514 = vld [vmem:[%s2 + $0x20] sm:$0xff]
      %v515 = vld [vmem:[%s2 + $0x28] sm:$0xff]
      %v516 = vld [vmem:[%s2 + $0x30] sm:$0xff]
      %v517 = vld [vmem:[%s2 + $0x38] sm:$0xff]
      %v518 = vld [vmem:[%s2 + $0x40] sm:$0xff]
      %v519 = vld [vmem:[%s2 + $0x48] sm:$0xff]
      %v520 = vld [vmem:[%s2 + $0x50] sm:$0xff]
      %v521 = vld [vmem:[%s2 + $0x58] sm:$0xff]
      %v522 = vld [vmem:[%s2 + $0x60] sm:$0xff]
      %v523 = vld [vmem:[%s2 + $0x68] sm:$0xff]
      %v524 = vld [vmem:[%s2 + $0x70] sm:$0xff]
      %v525 = vld [vmem:[%s2 + $0x78] sm:$0xff]
      %v526 = vld [vmem:[%s3] sm:$0x1]
      %v528 = vlaneseq
      %v529 = vshrl.u32 %v528, 7
      %v530 = vsub.s32 0, %v529
      %v531 = vrot.slane %v526, %v530
      %533 = vmatprep.subr.mxu0 0.0
      %534 = vmatpush1.msra.mxu0 %v510
      %535 = vmatprep.subr.mxu0 0.0
      %536 = vmatpush1.msra.mxu0 %v511
      %537 = vmatprep.subr.mxu0 0.0
      %538 = vmatpush1.msra.mxu0 %v512
      %539 = vmatprep.subr.mxu0 0.0
      %540 = vmatpush1.msra.mxu0 %v513
      %541 = vmatprep.subr.mxu0 0.0
      %542 = vmatpush1.msra.mxu0 %v514
      %543 = vmatprep.subr.mxu0 0.0
      %544 = vmatpush1.msra.mxu0 %v515
      %545 = vmatprep.subr.mxu0 0.0
      %546 = vmatpush1.msra.mxu0 %v516
      %547 = vmatprep.subr.mxu0 0.0
      %548 = vmatpush1.msra.mxu0 %v517
      %549 = vmatprep.subr.mxu0 0.0
      %550 = vmatpush1.msra.mxu0 %v518
      %551 = vmatprep.subr.mxu0 0.0
      %552 = vmatpush1.msra.mxu0 %v519
      %553 = vmatprep.subr.mxu0 0.0
      %554 = vmatpush1.msra.mxu0 %v520
      %555 = vmatprep.subr.mxu0 0.0
      %556 = vmatpush1.msra.mxu0 %v521
      %557 = vmatprep.subr.mxu0 0.0
      %558 = vmatpush1.msra.mxu0 %v522
      %559 = vmatprep.subr.mxu0 0.0
      %560 = vmatpush1.msra.mxu0 %v523
      %561 = vmatprep.subr.mxu0 0.0
      %562 = vmatpush1.msra.mxu0 %v524
      %563 = vmatprep.subr.mxu0 0.0
      %564 = vmatpush1.msra.mxu0 %v525
      %565 = vmatprep.subr.mxu0 0.0
      %566 = vmatpush1.msra.mxu0 0.0
      %567 = vmatprep.subr.mxu0 0.0
      %568 = vmatpush1.msra.mxu0 0.0
      %569 = vmatprep.subr.mxu0 0.0
      %570 = vmatpush1.msra.mxu0 0.0
      %571 = vmatprep.subr.mxu0 0.0
      %572 = vmatpush1.msra.mxu0 0.0
      %573 = vmatprep.subr.mxu0 0.0
      %574 = vmatpush1.msra.mxu0 0.0
      %575 = vmatprep.subr.mxu0 0.0
      %576 = vmatpush1.msra.mxu0 0.0
      %577 = vmatprep.subr.mxu0 0.0
      %578 = vmatpush1.msra.mxu0 0.0
      %579 = vmatprep.subr.mxu0 0.0
      %580 = vmatpush1.msra.mxu0 0.0
      %581 = vmatprep.subr.mxu0 0.0
      %582 = vmatpush1.msra.mxu0 0.0
      %583 = vmatprep.subr.mxu0 0.0
      %584 = vmatpush1.msra.mxu0 0.0
      %585 = vmatprep.subr.mxu0 0.0
      %586 = vmatpush1.msra.mxu0 0.0
      %587 = vmatprep.subr.mxu0 0.0
      %588 = vmatpush1.msra.mxu0 0.0
      %589 = vmatprep.subr.mxu0 0.0
      %590 = vmatpush1.msra.mxu0 0.0
      %591 = vmatprep.subr.mxu0 0.0
      %592 = vmatpush1.msra.mxu0 0.0
      %593 = vmatprep.subr.mxu0 0.0
      %594 = vmatpush1.msra.mxu0 0.0
      %595 = vmatprep.subr.mxu0 0.0
      %596 = vmatpush1.msra.mxu0 0.0
      %597 = vmatprep.mubr.f32.mxu0 0.0
      %598 = vmatmul.mubr.f32.gmra.mrb[0].mxu0 %v502
      %v599 = vpop.f32.mrb[0].mxu0
      %v600 = vadd.f32 %v531, %v599
      %v601 = vpop.f32.mrb[0].mxu0
      %602 = vmatprep.mubr.f32.mxu0 0.0
      %603 = vmatmul.mubr.f32.gmra.mrb[0].mxu0 %v503
      %v604 = vpop.f32.mrb[0].mxu0
      %v605 = vadd.f32 %v531, %v604
      %v606 = vpop.f32.mrb[0].mxu0
      %607 = vmatprep.mubr.f32.mxu0 0.0
      %608 = vmatmul.mubr.f32.gmra.mrb[0].mxu0 %v504
      %v609 = vpop.f32.mrb[0].mxu0
      %v610 = vadd.f32 %v531, %v609
      %v611 = vpop.f32.mrb[0].mxu0
      %612 = vmatprep.mubr.f32.mxu0 0.0
      %613 = vmatmul.mubr.f32.gmra.mrb[0].mxu0 %v505
      %v614 = vpop.f32.mrb[0].mxu0
      %v615 = vadd.f32 %v531, %v614
      %v616 = vpop.f32.mrb[0].mxu0
      %617 = vmatprep.mubr.f32.mxu0 0.0
      %618 = vmatmul.mubr.f32.gmra.mrb[0].mxu0 %v506
      %v619 = vpop.f32.mrb[0].mxu0
      %v620 = vadd.f32 %v531, %v619
      %v621 = vpop.f32.mrb[0].mxu0
      %622 = vmatprep.mubr.f32.mxu0 0.0
      %623 = vmatmul.mubr.f32.gmra.mrb[0].mxu0 %v507
      %v624 = vpop.f32.mrb[0].mxu0
      %v625 = vadd.f32 %v531, %v624
      %v626 = vpop.f32.mrb[0].mxu0
      %627 = vmatprep.mubr.f32.mxu0 0.0
      %628 = vmatmul.mubr.f32.gmra.mrb[0].mxu0 %v508
      %v629 = vpop.f32.mrb[0].mxu0
      %v630 = vadd.f32 %v531, %v629
      %v631 = vpop.f32.mrb[0].mxu0
      %632 = vmatprep.mubr.f32.mxu0 0.0
      %633 = vmatmul.mubr.f32.gmra.mrb[0].mxu0 %v509
      %v634 = vpop.f32.mrb[0].mxu0
      %v635 = vadd.f32 %v531, %v634
      %v636 = vpop.f32.mrb[0].mxu0
      %637 = vdwg.mxu0
      %vm638 = vcmp.gt.f32.partialorder %v600, 0.0
      %vm639 = vcmp.gt.f32.partialorder %v605, 0.0
      %vm640 = vcmp.gt.f32.partialorder %v610, 0.0
      %vm641 = vcmp.gt.f32.partialorder %v615, 0.0
      %vm642 = vcmp.gt.f32.partialorder %v620, 0.0
      %vm643 = vcmp.gt.f32.partialorder %v625, 0.0
      %vm644 = vcmp.gt.f32.partialorder %v630, 0.0
      %vm645 = vcmp.gt.f32.partialorder %v635, 0.0
      %v646 = vmul.f32 %v600, 0.1
      %v647 = vmul.f32 %v605, 0.1
      %v648 = vmul.f32 %v610, 0.1
      %v649 = vmul.f32 %v615, 0.1
      %v650 = vmul.f32 %v620, 0.1
      %v651 = vmul.f32 %v625, 0.1
      %v652 = vmul.f32 %v630, 0.1
      %v653 = vmul.f32 %v635, 0.1
      %v654 = vsel %vm638, %v600, %v646
      %v655 = vsel %vm639, %v605, %v647
      %v656 = vsel %vm640, %v610, %v648
      %v657 = vsel %vm641, %v615, %v649
      %v658 = vsel %vm642, %v620, %v650
      %v659 = vsel %vm643, %v625, %v651
      %v660 = vsel %vm644, %v630, %v652
      %v661 = vsel %vm645, %v635, %v653
      %v662 = vld [vmem:[%s320] sm:$0xff]
      %v663 = vld [vmem:[%s320 + $0x8] sm:$0xff]
      %v664 = vld [vmem:[%s320 + $0x10] sm:$0xff]
      %v665 = vld [vmem:[%s320 + $0x18] sm:$0xff]
      %v666 = vld [vmem:[%s320 + $0x20] sm:$0xff]
      %v667 = vld [vmem:[%s320 + $0x28] sm:$0xff]
      %v668 = vld [vmem:[%s320 + $0x30] sm:$0xff]
      %v669 = vld [vmem:[%s320 + $0x38] sm:$0xff]
      %v670 = vld [vmem:[%s320 + $0x40] sm:$0xff]
      %v671 = vld [vmem:[%s320 + $0x48] sm:$0xff]
      %v672 = vld [vmem:[%s320 + $0x50] sm:$0xff]
      %v673 = vld [vmem:[%s320 + $0x58] sm:$0xff]
      %v674 = vld [vmem:[%s320 + $0x60] sm:$0xff]
      %v675 = vld [vmem:[%s320 + $0x68] sm:$0xff]
      %v676 = vld [vmem:[%s320 + $0x70] sm:$0xff]
      %v677 = vld [vmem:[%s320 + $0x78] sm:$0xff]
      %678 = vst [vmem:[#allocation3] sm:$0xff] 0.0
      %679 = vst [vmem:[#allocation3 + $0x8] sm:$0x3] 0.0
      %s680 = scalar_lea.vmem [#allocation3], 272
      %681 = vst [vmem:[%s680] sm:$0xff] 0.0
      %682 = vst [vmem:[%s680 + $0x8] sm:$0x3] 0.0
      %683 = vst [vmem:[#allocation3] sm:$0x1] 0.0
      %684 = vst [vmem:[#allocation3 + $0x10] sm:$0x1] 0.0
      %685 = vst [vmem:[#allocation3 + $0x20] sm:$0x1] 0.0
      %686 = vst [vmem:[#allocation3 + $0x30] sm:$0x1] 0.0
      %687 = vst [vmem:[#allocation3 + $0x40] sm:$0x1] 0.0
      %688 = vst [vmem:[#allocation3 + $0x50] sm:$0x1] 0.0
      %689 = vst [vmem:[#allocation3 + $0x60] sm:$0x1] 0.0
      %690 = vst [vmem:[#allocation3 + $0x70] sm:$0x1] 0.0
      %691 = vst [vmem:[#allocation3 + $0x80] sm:$0x1] 0.0
      %692 = vst [vmem:[#allocation3 + $0x90] sm:$0x1] 0.0
      %693 = vst [vmem:[#allocation3 + $0xa0] sm:$0x1] 0.0
      %694 = vst [vmem:[#allocation3 + $0xb0] sm:$0x1] 0.0
      %695 = vst [vmem:[#allocation3 + $0xc0] sm:$0x1] 0.0
      %696 = vst [vmem:[#allocation3 + $0xd0] sm:$0x1] 0.0
      %697 = vst [vmem:[#allocation3 + $0xe0] sm:$0x1] 0.0
      %698 = vst [vmem:[#allocation3 + $0xf0] sm:$0x1] 0.0
      %699 = vst [vmem:[#allocation3 + $0x100] sm:$0x1] 0.0
      %700 = vst [vmem:[#allocation3 + $0x110] sm:$0x1] 0.0
      %701 = vst [vmem:[#allocation3 + $0x9] sm:$0x1] 0.0
      %702 = vst [vmem:[#allocation3 + $0x19] sm:$0x1] 0.0
      %703 = vst [vmem:[#allocation3 + $0x29] sm:$0x1] 0.0
      %704 = vst [vmem:[#allocation3 + $0x39] sm:$0x1] 0.0
      %705 = vst [vmem:[#allocation3 + $0x49] sm:$0x1] 0.0
      %706 = vst [vmem:[#allocation3 + $0x59] sm:$0x1] 0.0
      %707 = vst [vmem:[#allocation3 + $0x69] sm:$0x1] 0.0
      %708 = vst [vmem:[#allocation3 + $0x79] sm:$0x1] 0.0
      %709 = vst [vmem:[#allocation3 + $0x89] sm:$0x1] 0.0
      %710 = vst [vmem:[#allocation3 + $0x99] sm:$0x1] 0.0
      %711 = vst [vmem:[#allocation3 + $0xa9] sm:$0x1] 0.0
      %712 = vst [vmem:[#allocation3 + $0xb9] sm:$0x1] 0.0
      %713 = vst [vmem:[#allocation3 + $0xc9] sm:$0x1] 0.0
      %714 = vst [vmem:[#allocation3 + $0xd9] sm:$0x1] 0.0
      %715 = vst [vmem:[#allocation3 + $0xe9] sm:$0x1] 0.0
      %716 = vst [vmem:[#allocation3 + $0xf9] sm:$0x1] 0.0
      %717 = vst [vmem:[#allocation3 + $0x109] sm:$0x1] 0.0
      %718 = vst [vmem:[#allocation3 + $0x119] sm:$0x1] 0.0
      %727 = vrot.lane.b32.xlu0 %v662, 32
      %v728 = vpop.permute.xlu0 %727
      %729 = vrot.lane.b32.xlu0 %v664, 32
      %v730 = vpop.permute.xlu0 %729
      %731 = vrot.lane.b32.xlu0 %v666, 32
      %v732 = vpop.permute.xlu0 %731
      %733 = vrot.lane.b32.xlu0 %v668, 32
      %v734 = vpop.permute.xlu0 %733
      %735 = vrot.lane.b32.xlu0 %v670, 32
      %v736 = vpop.permute.xlu0 %735
      %737 = vrot.lane.b32.xlu0 %v672, 32
      %v738 = vpop.permute.xlu0 %737
      %739 = vrot.lane.b32.xlu0 %v674, 32
      %v740 = vpop.permute.xlu0 %739
      %741 = vrot.lane.b32.xlu0 %v676, 32
      %v742 = vpop.permute.xlu0 %741
      %759 = vrot.lane.b32.xlu0 %v654, 32
      %v760 = vpop.permute.xlu0 %759
      %761 = vrot.lane.b32.xlu0 %v655, 32
      %v762 = vpop.permute.xlu0 %761
      %763 = vrot.lane.b32.xlu0 %v656, 32
      %v764 = vpop.permute.xlu0 %763
      %765 = vrot.lane.b32.xlu0 %v657, 32
      %v766 = vpop.permute.xlu0 %765
      %767 = vrot.lane.b32.xlu0 %v658, 32
      %v768 = vpop.permute.xlu0 %767
      %769 = vrot.lane.b32.xlu0 %v659, 32
      %v770 = vpop.permute.xlu0 %769
      %771 = vrot.lane.b32.xlu0 %v660, 32
      %v772 = vpop.permute.xlu0 %771
      %773 = vrot.lane.b32.xlu0 %v661, 32
      %v774 = vpop.permute.xlu0 %773
      %783 = vrot.lane.b32.xlu0 %v662, 64
      %v784 = vpop.permute.xlu0 %783
      %785 = vrot.lane.b32.xlu0 %v664, 64
      %v786 = vpop.permute.xlu0 %785
      %787 = vrot.lane.b32.xlu0 %v666, 64
      %v788 = vpop.permute.xlu0 %787
      %789 = vrot.lane.b32.xlu0 %v668, 64
      %v790 = vpop.permute.xlu0 %789
      %791 = vrot.lane.b32.xlu0 %v670, 64
      %v792 = vpop.permute.xlu0 %791
      %793 = vrot.lane.b32.xlu0 %v672, 64
      %v794 = vpop.permute.xlu0 %793
      %795 = vrot.lane.b32.xlu0 %v674, 64
      %v796 = vpop.permute.xlu0 %795
      %797 = vrot.lane.b32.xlu0 %v676, 64
      %v798 = vpop.permute.xlu0 %797
      %v807 = vsel %vm334, %v654, %v728
      %v808 = vsel %vm334, %v655, %v730
      %v809 = vsel %vm334, %v656, %v732
      %v810 = vsel %vm334, %v657, %v734
      %v811 = vsel %vm334, %v658, %v736
      %v812 = vsel %vm334, %v659, %v738
      %v813 = vsel %vm334, %v660, %v740
      %v814 = vsel %vm334, %v661, %v742
      %v815 = vsel %vm492, %v807, %v760
      %v816 = vsel %vm492, %v808, %v762
      %v817 = vsel %vm492, %v809, %v764
      %v818 = vsel %vm492, %v810, %v766
      %v819 = vsel %vm492, %v811, %v768
      %v820 = vsel %vm492, %v812, %v770
      %v821 = vsel %vm492, %v813, %v772
      %v822 = vsel %vm492, %v814, %v774
      %v823 = vsel %vm501, %v815, %v784
      %v824 = vsel %vm501, %v816, %v786
      %v825 = vsel %vm501, %v817, %v788
      %v826 = vsel %vm501, %v818, %v790
      %v827 = vsel %vm501, %v819, %v792
      %v828 = vsel %vm501, %v820, %v794
      %v829 = vsel %vm501, %v821, %v796
      %v830 = vsel %vm501, %v822, %v798
      %831 = vrot.lane.b32.xlu0 %v654, 64
      %v832 = vpop.permute.xlu0 %831
      %833 = vrot.lane.b32.xlu0 %v655, 64
      %v834 = vpop.permute.xlu0 %833
      %835 = vrot.lane.b32.xlu0 %v656, 64
      %v836 = vpop.permute.xlu0 %835
      %837 = vrot.lane.b32.xlu0 %v657, 64
      %v838 = vpop.permute.xlu0 %837
      %839 = vrot.lane.b32.xlu0 %v658, 64
      %v840 = vpop.permute.xlu0 %839
      %841 = vrot.lane.b32.xlu0 %v659, 64
      %v842 = vpop.permute.xlu0 %841
      %843 = vrot.lane.b32.xlu0 %v660, 64
      %v844 = vpop.permute.xlu0 %843
      %845 = vrot.lane.b32.xlu0 %v661, 64
      %v846 = vpop.permute.xlu0 %845
      %863 = vrot.lane.b32.xlu0 %v663, 32
      %v864 = vpop.permute.xlu0 %863
      %865 = vrot.lane.b32.xlu0 %v665, 32
      %v866 = vpop.permute.xlu0 %865
      %867 = vrot.lane.b32.xlu0 %v667, 32
      %v868 = vpop.permute.xlu0 %867
      %869 = vrot.lane.b32.xlu0 %v669, 32
      %v870 = vpop.permute.xlu0 %869
      %871 = vrot.lane.b32.xlu0 %v671, 32
      %v872 = vpop.permute.xlu0 %871
      %873 = vrot.lane.b32.xlu0 %v673, 32
      %v874 = vpop.permute.xlu0 %873
      %875 = vrot.lane.b32.xlu0 %v675, 32
      %v876 = vpop.permute.xlu0 %875
      %877 = vrot.lane.b32.xlu0 %v677, 32
      %v878 = vpop.permute.xlu0 %877
      %887 = vrot.lane.b32.xlu0 %v654, 96
      %v888 = vpop.permute.xlu0 %887
      %889 = vrot.lane.b32.xlu0 %v655, 96
      %v890 = vpop.permute.xlu0 %889
      %891 = vrot.lane.b32.xlu0 %v656, 96
      %v892 = vpop.permute.xlu0 %891
      %893 = vrot.lane.b32.xlu0 %v657, 96
      %v894 = vpop.permute.xlu0 %893
      %895 = vrot.lane.b32.xlu0 %v658, 96
      %v896 = vpop.permute.xlu0 %895
      %897 = vrot.lane.b32.xlu0 %v659, 96
      %v898 = vpop.permute.xlu0 %897
      %899 = vrot.lane.b32.xlu0 %v660, 96
      %v900 = vpop.permute.xlu0 %899
      %901 = vrot.lane.b32.xlu0 %v661, 96
      %v902 = vpop.permute.xlu0 %901
      %911 = vrot.lane.b32.xlu0 %v663, 64
      %v912 = vpop.permute.xlu0 %911
      %913 = vrot.lane.b32.xlu0 %v665, 64
      %v914 = vpop.permute.xlu0 %913
      %915 = vrot.lane.b32.xlu0 %v667, 64
      %v916 = vpop.permute.xlu0 %915
      %917 = vrot.lane.b32.xlu0 %v669, 64
      %v918 = vpop.permute.xlu0 %917
      %919 = vrot.lane.b32.xlu0 %v671, 64
      %v920 = vpop.permute.xlu0 %919
      %921 = vrot.lane.b32.xlu0 %v673, 64
      %v922 = vpop.permute.xlu0 %921
      %923 = vrot.lane.b32.xlu0 %v675, 64
      %v924 = vpop.permute.xlu0 %923
      %925 = vrot.lane.b32.xlu0 %v677, 64
      %v926 = vpop.permute.xlu0 %925
      %v935 = vsel %vm334, %v832, %v864
      %v936 = vsel %vm334, %v834, %v866
      %v937 = vsel %vm334, %v836, %v868
      %v938 = vsel %vm334, %v838, %v870
      %v939 = vsel %vm334, %v840, %v872
      %v940 = vsel %vm334, %v842, %v874
      %v941 = vsel %vm334, %v844, %v876
      %v942 = vsel %vm334, %v846, %v878
      %v943 = vsel %vm492, %v935, %v888
      %v944 = vsel %vm492, %v936, %v890
      %v945 = vsel %vm492, %v937, %v892
      %v946 = vsel %vm492, %v938, %v894
      %v947 = vsel %vm492, %v939, %v896
      %v948 = vsel %vm492, %v940, %v898
      %v949 = vsel %vm492, %v941, %v900
      %v950 = vsel %vm492, %v942, %v902
      %v951 = vsel %vm501, %v943, %v912
      %v952 = vsel %vm501, %v944, %v914
      %v953 = vsel %vm501, %v945, %v916
      %v954 = vsel %vm501, %v946, %v918
      %v955 = vsel %vm501, %v947, %v920
      %v956 = vsel %vm501, %v948, %v922
      %v957 = vsel %vm501, %v949, %v924
      %v958 = vsel %vm501, %v950, %v926
      %s959 = scalar_lea.vmem [#allocation3], 16
      %960 = vst [vmem:[%s959 + $0x1] sm:$0xff] %v823
      %961 = vst [vmem:[%s959 + $0x21] sm:$0xff] %v824
      %962 = vst [vmem:[%s959 + $0x41] sm:$0xff] %v825
      %963 = vst [vmem:[%s959 + $0x61] sm:$0xff] %v826
      %964 = vst [vmem:[%s959 + $0x81] sm:$0xff] %v827
      %965 = vst [vmem:[%s959 + $0xa1] sm:$0xff] %v828
      %966 = vst [vmem:[%s959 + $0xc1] sm:$0xff] %v829
      %967 = vst [vmem:[%s959 + $0xe1] sm:$0xff] %v830
      %s968 = scalar_lea.vmem [#allocation3], 32
      %969 = vst [vmem:[%s968 + $0x1] sm:$0xff] %v951
      %970 = vst [vmem:[%s968 + $0x21] sm:$0xff] %v952
      %971 = vst [vmem:[%s968 + $0x41] sm:$0xff] %v953
      %972 = vst [vmem:[%s968 + $0x61] sm:$0xff] %v954
      %973 = vst [vmem:[%s968 + $0x81] sm:$0xff] %v955
      %974 = vst [vmem:[%s968 + $0xa1] sm:$0xff] %v956
      %975 = vst [vmem:[%s968 + $0xc1] sm:$0xff] %v957
      %976 = vst [vmem:[%s968 + $0xe1] sm:$0xff] %v958
      %v977 = vld [vmem:[#allocation3] sm:$0xff]
      %v978 = vld [vmem:[#allocation3 + $0x8] sm:$0x3]
      %v979 = vld [vmem:[#allocation3 + $0x10] sm:$0xff]
      %v980 = vld [vmem:[#allocation3 + $0x18] sm:$0x3]
      %v981 = vld [vmem:[#allocation3 + $0x20] sm:$0xff]
      %v982 = vld [vmem:[#allocation3 + $0x28] sm:$0x3]
      %v983 = vld [vmem:[#allocation3 + $0x30] sm:$0xff]
      %v984 = vld [vmem:[#allocation3 + $0x38] sm:$0x3]
      %v985 = vld [vmem:[#allocation3 + $0x40] sm:$0xff]
      %v986 = vld [vmem:[#allocation3 + $0x48] sm:$0x3]
      %v987 = vld [vmem:[#allocation3 + $0x50] sm:$0xff]
      %v988 = vld [vmem:[#allocation3 + $0x58] sm:$0x3]
      %v989 = vld [vmem:[#allocation3 + $0x60] sm:$0xff]
      %v990 = vld [vmem:[#allocation3 + $0x68] sm:$0x3]
      %v991 = vld [vmem:[#allocation3 + $0x70] sm:$0xff]
      %v992 = vld [vmem:[#allocation3 + $0x78] sm:$0x3]
      %v993 = vld [vmem:[#allocation3 + $0x80] sm:$0xff]
      %v994 = vld [vmem:[#allocation3 + $0x88] sm:$0x3]
      %v995 = vld [vmem:[#allocation3 + $0x90] sm:$0xff]
      %v996 = vld [vmem:[#allocation3 + $0x98] sm:$0x3]
      %v997 = vld [vmem:[#allocation3 + $0xa0] sm:$0xff]
      %v998 = vld [vmem:[#allocation3 + $0xa8] sm:$0x3]
      %v999 = vld [vmem:[#allocation3 + $0xb0] sm:$0xff]
      %v1000 = vld [vmem:[#allocation3 + $0xb8] sm:$0x3]
      %v1001 = vld [vmem:[#allocation3 + $0xc0] sm:$0xff]
      %v1002 = vld [vmem:[#allocation3 + $0xc8] sm:$0x3]
      %v1003 = vld [vmem:[#allocation3 + $0xd0] sm:$0xff]
      %v1004 = vld [vmem:[#allocation3 + $0xd8] sm:$0x3]
      %v1005 = vld [vmem:[#allocation3 + $0xe0] sm:$0xff]
      %v1006 = vld [vmem:[#allocation3 + $0xe8] sm:$0x3]
      %v1007 = vld [vmem:[#allocation3 + $0xf0] sm:$0xff]
      %v1008 = vld [vmem:[#allocation3 + $0xf8] sm:$0x3]
      %v1009 = vld [vmem:[#allocation3 + $0x100] sm:$0xff]
      %v1010 = vld [vmem:[#allocation3 + $0x108] sm:$0x3]
      %v1011 = vld [vmem:[#allocation3 + $0x110] sm:$0xff]
      %v1012 = vld [vmem:[#allocation3 + $0x118] sm:$0x3]
      %1031 = vrot.lane.b32.xlu0 %v977, 64
      %v1032 = vpop.permute.xlu0 %1031
      %1033 = vrot.lane.b32.xlu0 %v979, 64
      %v1034 = vpop.permute.xlu0 %1033
      %1035 = vrot.lane.b32.xlu0 %v981, 64
      %v1036 = vpop.permute.xlu0 %1035
      %1037 = vrot.lane.b32.xlu0 %v983, 64
      %v1038 = vpop.permute.xlu0 %1037
      %1039 = vrot.lane.b32.xlu0 %v985, 64
      %v1040 = vpop.permute.xlu0 %1039
      %1041 = vrot.lane.b32.xlu0 %v987, 64
      %v1042 = vpop.permute.xlu0 %1041
      %1043 = vrot.lane.b32.xlu0 %v989, 64
      %v1044 = vpop.permute.xlu0 %1043
      %1045 = vrot.lane.b32.xlu0 %v991, 64
      %v1046 = vpop.permute.xlu0 %1045
      %1047 = vrot.lane.b32.xlu0 %v993, 64
      %v1048 = vpop.permute.xlu0 %1047
      %1049 = vrot.lane.b32.xlu0 %v995, 64
      %v1050 = vpop.permute.xlu0 %1049
      %1051 = vrot.lane.b32.xlu0 %v997, 64
      %v1052 = vpop.permute.xlu0 %1051
      %1053 = vrot.lane.b32.xlu0 %v999, 64
      %v1054 = vpop.permute.xlu0 %1053
      %1055 = vrot.lane.b32.xlu0 %v1001, 64
      %v1056 = vpop.permute.xlu0 %1055
      %1057 = vrot.lane.b32.xlu0 %v1003, 64
      %v1058 = vpop.permute.xlu0 %1057
      %1059 = vrot.lane.b32.xlu0 %v1005, 64
      %v1060 = vpop.permute.xlu0 %1059
      %1061 = vrot.lane.b32.xlu0 %v1007, 64
      %v1062 = vpop.permute.xlu0 %1061
      %1063 = vrot.lane.b32.xlu0 %v1009, 64
      %v1064 = vpop.permute.xlu0 %1063
      %1065 = vrot.lane.b32.xlu0 %v1011, 64
      %v1066 = vpop.permute.xlu0 %1065
      %vm1103 = vcmask 1046528
      %v1104 = vrot.slane %v977, 1
      %v1105 = vrot.slane %v978, 1
      %v1106 = vsel %vm1103, %v1104, %v1105
      %v1107 = vrot.slane %v979, 1
      %v1108 = vrot.slane %v980, 1
      %v1109 = vsel %vm1103, %v1107, %v1108
      %v1110 = vrot.slane %v981, 1
      %v1111 = vrot.slane %v982, 1
      %v1112 = vsel %vm1103, %v1110, %v1111
      %v1113 = vrot.slane %v983, 1
      %v1114 = vrot.slane %v984, 1
      %v1115 = vsel %vm1103, %v1113, %v1114
      %v1116 = vrot.slane %v985, 1
      %v1117 = vrot.slane %v986, 1
      %v1118 = vsel %vm1103, %v1116, %v1117
      %v1119 = vrot.slane %v987, 1
      %v1120 = vrot.slane %v988, 1
      %v1121 = vsel %vm1103, %v1119, %v1120
      %v1122 = vrot.slane %v989, 1
      %v1123 = vrot.slane %v990, 1
      %v1124 = vsel %vm1103, %v1122, %v1123
      %v1125 = vrot.slane %v991, 1
      %v1126 = vrot.slane %v992, 1
      %v1127 = vsel %vm1103, %v1125, %v1126
      %v1128 = vrot.slane %v993, 1
      %v1129 = vrot.slane %v994, 1
      %v1130 = vsel %vm1103, %v1128, %v1129
      %v1131 = vrot.slane %v995, 1
      %v1132 = vrot.slane %v996, 1
      %v1133 = vsel %vm1103, %v1131, %v1132
      %v1134 = vrot.slane %v997, 1
      %v1135 = vrot.slane %v998, 1
      %v1136 = vsel %vm1103, %v1134, %v1135
      %v1137 = vrot.slane %v999, 1
      %v1138 = vrot.slane %v1000, 1
      %v1139 = vsel %vm1103, %v1137, %v1138
      %v1140 = vrot.slane %v1001, 1
      %v1141 = vrot.slane %v1002, 1
      %v1142 = vsel %vm1103, %v1140, %v1141
      %v1143 = vrot.slane %v1003, 1
      %v1144 = vrot.slane %v1004, 1
      %v1145 = vsel %vm1103, %v1143, %v1144
      %v1146 = vrot.slane %v1005, 1
      %v1147 = vrot.slane %v1006, 1
      %v1148 = vsel %vm1103, %v1146, %v1147
      %v1149 = vrot.slane %v1007, 1
      %v1150 = vrot.slane %v1008, 1
      %v1151 = vsel %vm1103, %v1149, %v1150
      %v1152 = vrot.slane %v1009, 1
      %v1153 = vrot.slane %v1010, 1
      %v1154 = vsel %vm1103, %v1152, %v1153
      %v1155 = vrot.slane %v1011, 1
      %v1156 = vrot.slane %v1012, 1
      %v1157 = vsel %vm1103, %v1155, %v1156
      %1158 = vrot.lane.b32.xlu0 %v1106, 64
      %v1159 = vpop.permute.xlu0 %1158
      %1160 = vrot.lane.b32.xlu0 %v1109, 64
      %v1161 = vpop.permute.xlu0 %1160
      %1162 = vrot.lane.b32.xlu0 %v1112, 64
      %v1163 = vpop.permute.xlu0 %1162
      %1164 = vrot.lane.b32.xlu0 %v1115, 64
      %v1165 = vpop.permute.xlu0 %1164
      %1166 = vrot.lane.b32.xlu0 %v1118, 64
      %v1167 = vpop.permute.xlu0 %1166
      %1168 = vrot.lane.b32.xlu0 %v1121, 64
      %v1169 = vpop.permute.xlu0 %1168
      %1170 = vrot.lane.b32.xlu0 %v1124, 64
      %v1171 = vpop.permute.xlu0 %1170
      %1172 = vrot.lane.b32.xlu0 %v1127, 64
      %v1173 = vpop.permute.xlu0 %1172
      %1174 = vrot.lane.b32.xlu0 %v1130, 64
      %v1175 = vpop.permute.xlu0 %1174
      %1176 = vrot.lane.b32.xlu0 %v1133, 64
      %v1177 = vpop.permute.xlu0 %1176
      %1178 = vrot.lane.b32.xlu0 %v1136, 64
      %v1179 = vpop.permute.xlu0 %1178
      %1180 = vrot.lane.b32.xlu0 %v1139, 64
      %v1181 = vpop.permute.xlu0 %1180
      %1182 = vrot.lane.b32.xlu0 %v1142, 64
      %v1183 = vpop.permute.xlu0 %1182
      %1184 = vrot.lane.b32.xlu0 %v1145, 64
      %v1185 = vpop.permute.xlu0 %1184
      %1186 = vrot.lane.b32.xlu0 %v1148, 64
      %v1187 = vpop.permute.xlu0 %1186
      %1188 = vrot.lane.b32.xlu0 %v1151, 64
      %v1189 = vpop.permute.xlu0 %1188
      %1190 = vrot.lane.b32.xlu0 %v1154, 64
      %v1191 = vpop.permute.xlu0 %1190
      %1192 = vrot.lane.b32.xlu0 %v1157, 64
      %v1193 = vpop.permute.xlu0 %1192
      %v1212 = vsel %vm492, %v1032, %v1159
      %v1213 = vsel %vm492, %v1034, %v1161
      %v1214 = vsel %vm492, %v1036, %v1163
      %v1215 = vsel %vm492, %v1038, %v1165
      %v1216 = vsel %vm492, %v1040, %v1167
      %v1217 = vsel %vm492, %v1042, %v1169
      %v1218 = vsel %vm492, %v1044, %v1171
      %v1219 = vsel %vm492, %v1046, %v1173
      %v1220 = vsel %vm492, %v1048, %v1175
      %v1221 = vsel %vm492, %v1050, %v1177
      %v1222 = vsel %vm492, %v1052, %v1179
      %v1223 = vsel %vm492, %v1054, %v1181
      %v1224 = vsel %vm492, %v1056, %v1183
      %v1225 = vsel %vm492, %v1058, %v1185
      %v1226 = vsel %vm492, %v1060, %v1187
      %v1227 = vsel %vm492, %v1062, %v1189
      %v1228 = vsel %vm492, %v1064, %v1191
      %v1229 = vsel %vm492, %v1066, %v1193
      %v1230 = vrot.slane %v1106, 1
      %v1231 = vrot.slane %v1105, 1
      %v1232 = vsel %vm1103, %v1230, %v1231
      %v1233 = vrot.slane %v1109, 1
      %v1234 = vrot.slane %v1108, 1
      %v1235 = vsel %vm1103, %v1233, %v1234
      %v1236 = vrot.slane %v1112, 1
      %v1237 = vrot.slane %v1111, 1
      %v1238 = vsel %vm1103, %v1236, %v1237
      %v1239 = vrot.slane %v1115, 1
      %v1240 = vrot.slane %v1114, 1
      %v1241 = vsel %vm1103, %v1239, %v1240
      %v1242 = vrot.slane %v1118, 1
      %v1243 = vrot.slane %v1117, 1
      %v1244 = vsel %vm1103, %v1242, %v1243
      %v1245 = vrot.slane %v1121, 1
      %v1246 = vrot.slane %v1120, 1
      %v1247 = vsel %vm1103, %v1245, %v1246
      %v1248 = vrot.slane %v1124, 1
      %v1249 = vrot.slane %v1123, 1
      %v1250 = vsel %vm1103, %v1248, %v1249
      %v1251 = vrot.slane %v1127, 1
      %v1252 = vrot.slane %v1126, 1
      %v1253 = vsel %vm1103, %v1251, %v1252
      %v1254 = vrot.slane %v1130, 1
      %v1255 = vrot.slane %v1129, 1
      %v1256 = vsel %vm1103, %v1254, %v1255
      %v1257 = vrot.slane %v1133, 1
      %v1258 = vrot.slane %v1132, 1
      %v1259 = vsel %vm1103, %v1257, %v1258
      %v1260 = vrot.slane %v1136, 1
      %v1261 = vrot.slane %v1135, 1
      %v1262 = vsel %vm1103, %v1260, %v1261
      %v1263 = vrot.slane %v1139, 1
      %v1264 = vrot.slane %v1138, 1
      %v1265 = vsel %vm1103, %v1263, %v1264
      %v1266 = vrot.slane %v1142, 1
      %v1267 = vrot.slane %v1141, 1
      %v1268 = vsel %vm1103, %v1266, %v1267
      %v1269 = vrot.slane %v1145, 1
      %v1270 = vrot.slane %v1144, 1
      %v1271 = vsel %vm1103, %v1269, %v1270
      %v1272 = vrot.slane %v1148, 1
      %v1273 = vrot.slane %v1147, 1
      %v1274 = vsel %vm1103, %v1272, %v1273
      %v1275 = vrot.slane %v1151, 1
      %v1276 = vrot.slane %v1150, 1
      %v1277 = vsel %vm1103, %v1275, %v1276
      %v1278 = vrot.slane %v1154, 1
      %v1279 = vrot.slane %v1153, 1
      %v1280 = vsel %vm1103, %v1278, %v1279
      %v1281 = vrot.slane %v1157, 1
      %v1282 = vrot.slane %v1156, 1
      %v1283 = vsel %vm1103, %v1281, %v1282
      %v1302 = vld [vmem:[%s4] sm:$0xff]
      %v1303 = vld [vmem:[%s4 + $0x8] sm:$0xff]
      %v1304 = vld [vmem:[%s4 + $0x10] sm:$0xff]
      %v1305 = vld [vmem:[%s4 + $0x18] sm:$0xff]
      %v1306 = vld [vmem:[%s4 + $0x20] sm:$0xff]
      %v1307 = vld [vmem:[%s4 + $0x28] sm:$0xff]
      %v1308 = vld [vmem:[%s4 + $0x30] sm:$0xff]
      %v1309 = vld [vmem:[%s4 + $0x38] sm:$0xff]
      %v1310 = vld [vmem:[%s4 + $0x40] sm:$0xff]
      %v1311 = vld [vmem:[%s4 + $0x48] sm:$0xff]
      %v1312 = vld [vmem:[%s4 + $0x50] sm:$0xff]
      %v1313 = vld [vmem:[%s4 + $0x58] sm:$0xff]
      %v1314 = vld [vmem:[%s4 + $0x60] sm:$0xff]
      %v1315 = vld [vmem:[%s4 + $0x68] sm:$0xff]
      %v1316 = vld [vmem:[%s4 + $0x70] sm:$0xff]
      %v1317 = vld [vmem:[%s4 + $0x78] sm:$0xff]
      %v1318 = vld [vmem:[%s4 + $0x80] sm:$0xff]
      %v1319 = vld [vmem:[%s4 + $0x88] sm:$0xff]
      %v1320 = vld [vmem:[%s4 + $0x90] sm:$0xff]
      %v1321 = vld [vmem:[%s4 + $0x98] sm:$0xff]
      %v1322 = vld [vmem:[%s4 + $0xa0] sm:$0xff]
      %v1323 = vld [vmem:[%s4 + $0xa8] sm:$0xff]
      %v1324 = vld [vmem:[%s4 + $0xb0] sm:$0xff]
      %v1325 = vld [vmem:[%s4 + $0xb8] sm:$0xff]
      %s1326 = scalar_lea.vmem %s4, 192
      %v1327 = vld [vmem:[%s1326] sm:$0xff]
      %v1328 = vld [vmem:[%s1326 + $0x8] sm:$0xff]
      %v1329 = vld [vmem:[%s1326 + $0x10] sm:$0xff]
      %v1330 = vld [vmem:[%s1326 + $0x18] sm:$0xff]
      %v1331 = vld [vmem:[%s1326 + $0x20] sm:$0xff]
      %v1332 = vld [vmem:[%s1326 + $0x28] sm:$0xff]
      %v1333 = vld [vmem:[%s1326 + $0x30] sm:$0xff]
      %v1334 = vld [vmem:[%s1326 + $0x38] sm:$0xff]
      %v1335 = vld [vmem:[%s1326 + $0x40] sm:$0xff]
      %v1336 = vld [vmem:[%s1326 + $0x48] sm:$0xff]
      %v1337 = vld [vmem:[%s1326 + $0x50] sm:$0xff]
      %v1338 = vld [vmem:[%s1326 + $0x58] sm:$0xff]
      %v1339 = vld [vmem:[%s1326 + $0x60] sm:$0xff]
      %v1340 = vld [vmem:[%s1326 + $0x68] sm:$0xff]
      %v1341 = vld [vmem:[%s1326 + $0x70] sm:$0xff]
      %v1342 = vld [vmem:[%s1326 + $0x78] sm:$0xff]
      %v1343 = vld [vmem:[%s1326 + $0x80] sm:$0xff]
      %v1344 = vld [vmem:[%s1326 + $0x88] sm:$0xff]
      %v1345 = vld [vmem:[%s1326 + $0x90] sm:$0xff]
      %v1346 = vld [vmem:[%s1326 + $0x98] sm:$0xff]
      %v1347 = vld [vmem:[%s1326 + $0xa0] sm:$0xff]
      %v1348 = vld [vmem:[%s1326 + $0xa8] sm:$0xff]
      %v1349 = vld [vmem:[%s1326 + $0xb0] sm:$0xff]
      %v1350 = vld [vmem:[%s1326 + $0xb8] sm:$0xff]
      %v1351 = vsel %vm492, %v1161, 0
      %v1353 = vsel %vm492, %v1163, 0
      %v1355 = vsel %vm492, %v1165, 0
      %v1357 = vsel %vm492, %v1167, 0
      %v1359 = vsel %vm492, %v1169, 0
      %v1361 = vsel %vm492, %v1171, 0
      %v1363 = vsel %vm492, %v1173, 0
      %v1365 = vsel %vm492, %v1175, 0
      %v1367 = vsel %vm492, %v1177, 0
      %v1369 = vsel %vm492, %v1179, 0
      %v1371 = vsel %vm492, %v1181, 0
      %v1373 = vsel %vm492, %v1183, 0
      %v1375 = vsel %vm492, %v1185, 0
      %v1377 = vsel %vm492, %v1187, 0
      %v1379 = vsel %vm492, %v1189, 0
      %v1381 = vsel %vm492, %v1191, 0
      %v1383 = vsel %vm492, %v1235, 0
      %v1385 = vsel %vm492, %v1238, 0
      %v1387 = vsel %vm492, %v1241, 0
      %v1389 = vsel %vm492, %v1244, 0
      %v1391 = vsel %vm492, %v1247, 0
      %v1393 = vsel %vm492, %v1250, 0
      %v1395 = vsel %vm492, %v1253, 0
      %v1397 = vsel %vm492, %v1256, 0
      %v1399 = vsel %vm492, %v1259, 0
      %v1401 = vsel %vm492, %v1262, 0
      %v1403 = vsel %vm492, %v1265, 0
      %v1405 = vsel %vm492, %v1268, 0
      %v1407 = vsel %vm492, %v1271, 0
      %v1409 = vsel %vm492, %v1274, 0
      %v1411 = vsel %vm492, %v1277, 0
      %v1413 = vsel %vm492, %v1280, 0
      %1415 = vmatprep.subr.mxu0 0.0
      %1416 = vmatpush1.msra.mxu0 %v1327
      %1417 = vmatprep.subr.mxu0 0.0
      %1418 = vmatpush1.msra.mxu0 %v1328
      %1419 = vmatprep.subr.mxu0 0.0
      %1420 = vmatpush1.msra.mxu0 %v1329
      %1421 = vmatprep.subr.mxu0 0.0
      %1422 = vmatpush1.msra.mxu0 %v1330
      %1423 = vmatprep.subr.mxu0 0.0
      %1424 = vmatpush1.msra.mxu0 %v1331
      %1425 = vmatprep.subr.mxu0 0.0
      %1426 = vmatpush1.msra.mxu0 %v1332
      %1427 = vmatprep.subr.mxu0 0.0
      %1428 = vmatpush1.msra.mxu0 %v1333
      %1429 = vmatprep.subr.mxu0 0.0
      %1430 = vmatpush1.msra.mxu0 %v1334
      %1431 = vmatprep.subr.mxu0 0.0
      %1432 = vmatpush1.msra.mxu0 %v1335
      %1433 = vmatprep.subr.mxu0 0.0
      %1434 = vmatpush1.msra.mxu0 %v1336
      %1435 = vmatprep.subr.mxu0 0.0
      %1436 = vmatpush1.msra.mxu0 %v1337
      %1437 = vmatprep.subr.mxu0 0.0
      %1438 = vmatpush1.msra.mxu0 %v1338
      %1439 = vmatprep.subr.mxu0 0.0
      %1440 = vmatpush1.msra.mxu0 %v1339
      %1441 = vmatprep.subr.mxu0 0.0
      %1442 = vmatpush1.msra.mxu0 %v1340
      %1443 = vmatprep.subr.mxu0 0.0
      %1444 = vmatpush1.msra.mxu0 %v1341
      %1445 = vmatprep.subr.mxu0 0.0
      %1446 = vmatpush1.msra.mxu0 %v1342
      %1447 = vmatprep.subr.mxu0 0.0
      %1448 = vmatpush1.msra.mxu0 %v1343
      %1449 = vmatprep.subr.mxu0 0.0
      %1450 = vmatpush1.msra.mxu0 %v1344
      %1451 = vmatprep.subr.mxu0 0.0
      %1452 = vmatpush1.msra.mxu0 %v1345
      %1453 = vmatprep.subr.mxu0 0.0
      %1454 = vmatpush1.msra.mxu0 %v1346
      %1455 = vmatprep.subr.mxu0 0.0
      %1456 = vmatpush1.msra.mxu0 %v1347
      %1457 = vmatprep.subr.mxu0 0.0
      %1458 = vmatpush1.msra.mxu0 %v1348
      %1459 = vmatprep.subr.mxu0 0.0
      %1460 = vmatpush1.msra.mxu0 %v1349
      %1461 = vmatprep.subr.mxu0 0.0
      %1462 = vmatpush1.msra.mxu0 %v1350
      %1463 = vmatprep.subr.mxu0 0.0
      %1464 = vmatpush1.msra.mxu0 0.0
      %1465 = vmatprep.subr.mxu0 0.0
      %1466 = vmatpush1.msra.mxu0 0.0
      %1467 = vmatprep.subr.mxu0 0.0
      %1468 = vmatpush1.msra.mxu0 0.0
      %1469 = vmatprep.subr.mxu0 0.0
      %1470 = vmatpush1.msra.mxu0 0.0
      %1471 = vmatprep.subr.mxu0 0.0
      %1472 = vmatpush1.msra.mxu0 0.0
      %1473 = vmatprep.subr.mxu0 0.0
      %1474 = vmatpush1.msra.mxu0 0.0
      %1475 = vmatprep.subr.mxu0 0.0
      %1476 = vmatpush1.msra.mxu0 0.0
      %1477 = vmatprep.subr.mxu0 0.0
      %1478 = vmatpush1.msra.mxu0 0.0
      %1479 = vmatprep.mubr.f32.mxu0 %v1351
      %1480 = vmatmul.mubr.f32.gmra.mrb[0].mxu0 %v1213
      %v1481 = vpop.f32.mrb[0].mxu0
      %v1482 = vadd.f32 0.0, %v1481
      %v1483 = vpop.f32.mrb[0].mxu0
      %1484 = vmatprep.mubr.f32.mxu0 %v1353
      %1485 = vmatmul.mubr.f32.gmra.mrb[0].mxu0 %v1214
      %v1486 = vpop.f32.mrb[0].mxu0
      %v1487 = vadd.f32 0.0, %v1486
      %v1488 = vpop.f32.mrb[0].mxu0
      %1489 = vmatprep.mubr.f32.mxu0 %v1355
      %1490 = vmatmul.mubr.f32.gmra.mrb[0].mxu0 %v1215
      %v1491 = vpop.f32.mrb[0].mxu0
      %v1492 = vadd.f32 0.0, %v1491
      %v1493 = vpop.f32.mrb[0].mxu0
      %1494 = vmatprep.mubr.f32.mxu0 %v1357
      %1495 = vmatmul.mubr.f32.gmra.mrb[0].mxu0 %v1216
      %v1496 = vpop.f32.mrb[0].mxu0
      %v1497 = vadd.f32 0.0, %v1496
      %v1498 = vpop.f32.mrb[0].mxu0
      %1499 = vmatprep.mubr.f32.mxu0 %v1359
      %1500 = vmatmul.mubr.f32.gmra.mrb[0].mxu0 %v1217
      %v1501 = vpop.f32.mrb[0].mxu0
      %v1502 = vadd.f32 0.0, %v1501
      %v1503 = vpop.f32.mrb[0].mxu0
      %1504 = vmatprep.mubr.f32.mxu0 %v1361
      %1505 = vmatmul.mubr.f32.gmra.mrb[0].mxu0 %v1218
      %v1506 = vpop.f32.mrb[0].mxu0
      %v1507 = vadd.f32 0.0, %v1506
      %v1508 = vpop.f32.mrb[0].mxu0
      %1509 = vmatprep.mubr.f32.mxu0 %v1363
      %1510 = vmatmul.mubr.f32.gmra.mrb[0].mxu0 %v1219
      %v1511 = vpop.f32.mrb[0].mxu0
      %v1512 = vadd.f32 0.0, %v1511
      %v1513 = vpop.f32.mrb[0].mxu0
      %1514 = vmatprep.mubr.f32.mxu0 %v1365
      %1515 = vmatmul.mubr.f32.gmra.mrb[0].mxu0 %v1220
      %v1516 = vpop.f32.mrb[0].mxu0
      %v1517 = vadd.f32 0.0, %v1516
      %v1518 = vpop.f32.mrb[0].mxu0
      %1519 = vmatprep.mubr.f32.mxu0 %v1367
      %1520 = vmatmul.mubr.f32.gmra.mrb[0].mxu0 %v1221
      %v1521 = vpop.f32.mrb[0].mxu0
      %v1522 = vadd.f32 0.0, %v1521
      %v1523 = vpop.f32.mrb[0].mxu0
      %1524 = vmatprep.mubr.f32.mxu0 %v1369
      %1525 = vmatmul.mubr.f32.gmra.mrb[0].mxu0 %v1222
      %v1526 = vpop.f32.mrb[0].mxu0
      %v1527 = vadd.f32 0.0, %v1526
      %v1528 = vpop.f32.mrb[0].mxu0
      %1529 = vmatprep.mubr.f32.mxu0 %v1371
      %1530 = vmatmul.mubr.f32.gmra.mrb[0].mxu0 %v1223
      %v1531 = vpop.f32.mrb[0].mxu0
      %v1532 = vadd.f32 0.0, %v1531
      %v1533 = vpop.f32.mrb[0].mxu0
      %1534 = vmatprep.mubr.f32.mxu0 %v1373
      %1535 = vmatmul.mubr.f32.gmra.mrb[0].mxu0 %v1224
      %v1536 = vpop.f32.mrb[0].mxu0
      %v1537 = vadd.f32 0.0, %v1536
      %v1538 = vpop.f32.mrb[0].mxu0
      %1539 = vmatprep.mubr.f32.mxu0 %v1375
      %1540 = vmatmul.mubr.f32.gmra.mrb[0].mxu0 %v1225
      %v1541 = vpop.f32.mrb[0].mxu0
      %v1542 = vadd.f32 0.0, %v1541
      %v1543 = vpop.f32.mrb[0].mxu0
      %1544 = vmatprep.mubr.f32.mxu0 %v1377
      %1545 = vmatmul.mubr.f32.gmra.mrb[0].mxu0 %v1226
      %v1546 = vpop.f32.mrb[0].mxu0
      %v1547 = vadd.f32 0.0, %v1546
      %v1548 = vpop.f32.mrb[0].mxu0
      %1549 = vmatprep.mubr.f32.mxu0 %v1379
      %1550 = vmatmul.mubr.f32.gmra.mrb[0].mxu0 %v1227
      %v1551 = vpop.f32.mrb[0].mxu0
      %v1552 = vadd.f32 0.0, %v1551
      %v1553 = vpop.f32.mrb[0].mxu0
      %1554 = vmatprep.mubr.f32.mxu0 %v1381
      %1555 = vmatmul.mubr.f32.gmra.mrb[0].mxu0 %v1228
      %v1556 = vpop.f32.mrb[0].mxu0
      %v1557 = vadd.f32 0.0, %v1556
      %v1558 = vpop.f32.mrb[0].mxu0
      %1559 = vmatprep.mubr.f32.mxu0 %v1383
      %1560 = vmatmul.mubr.f32.gmra.mrb[0].mxu0 %v1109
      %v1561 = vpop.f32.mrb[0].mxu0
      %v1562 = vadd.f32 0.0, %v1561
      %v1563 = vpop.f32.mrb[0].mxu0
      %1564 = vmatprep.mubr.f32.mxu0 %v1385
      %1565 = vmatmul.mubr.f32.gmra.mrb[0].mxu0 %v1112
      %v1566 = vpop.f32.mrb[0].mxu0
      %v1567 = vadd.f32 0.0, %v1566
      %v1568 = vpop.f32.mrb[0].mxu0
      %1569 = vmatprep.mubr.f32.mxu0 %v1387
      %1570 = vmatmul.mubr.f32.gmra.mrb[0].mxu0 %v1115
      %v1571 = vpop.f32.mrb[0].mxu0
      %v1572 = vadd.f32 0.0, %v1571
      %v1573 = vpop.f32.mrb[0].mxu0
      %1574 = vmatprep.mubr.f32.mxu0 %v1389
      %1575 = vmatmul.mubr.f32.gmra.mrb[0].mxu0 %v1118
      %v1576 = vpop.f32.mrb[0].mxu0
      %v1577 = vadd.f32 0.0, %v1576
      %v1578 = vpop.f32.mrb[0].mxu0
      %1579 = vmatprep.mubr.f32.mxu0 %v1391
      %1580 = vmatmul.mubr.f32.gmra.mrb[0].mxu0 %v1121
      %v1581 = vpop.f32.mrb[0].mxu0
      %v1582 = vadd.f32 0.0, %v1581
      %v1583 = vpop.f32.mrb[0].mxu0
      %1584 = vmatprep.mubr.f32.mxu0 %v1393
      %1585 = vmatmul.mubr.f32.gmra.mrb[0].mxu0 %v1124
      %v1586 = vpop.f32.mrb[0].mxu0
      %v1587 = vadd.f32 0.0, %v1586
      %v1588 = vpop.f32.mrb[0].mxu0
      %1589 = vmatprep.mubr.f32.mxu0 %v1395
      %1590 = vmatmul.mubr.f32.gmra.mrb[0].mxu0 %v1127
      %v1591 = vpop.f32.mrb[0].mxu0
      %v1592 = vadd.f32 0.0, %v1591
      %v1593 = vpop.f32.mrb[0].mxu0
      %1594 = vmatprep.mubr.f32.mxu0 %v1397
      %1595 = vmatmul.mubr.f32.gmra.mrb[0].mxu0 %v1130
      %v1596 = vpop.f32.mrb[0].mxu0
      %v1597 = vadd.f32 0.0, %v1596
      %v1598 = vpop.f32.mrb[0].mxu0
      %1599 = vmatprep.mubr.f32.mxu0 %v1399
      %1600 = vmatmul.mubr.f32.gmra.mrb[0].mxu0 %v1133
      %v1601 = vpop.f32.mrb[0].mxu0
      %v1602 = vadd.f32 0.0, %v1601
      %v1603 = vpop.f32.mrb[0].mxu0
      %1604 = vmatprep.mubr.f32.mxu0 %v1401
      %1605 = vmatmul.mubr.f32.gmra.mrb[0].mxu0 %v1136
      %v1606 = vpop.f32.mrb[0].mxu0
      %v1607 = vadd.f32 0.0, %v1606
      %v1608 = vpop.f32.mrb[0].mxu0
      %1609 = vmatprep.mubr.f32.mxu0 %v1403
      %1610 = vmatmul.mubr.f32.gmra.mrb[0].mxu0 %v1139
      %v1611 = vpop.f32.mrb[0].mxu0
      %v1612 = vadd.f32 0.0, %v1611
      %v1613 = vpop.f32.mrb[0].mxu0
      %1614 = vmatprep.mubr.f32.mxu0 %v1405
      %1615 = vmatmul.mubr.f32.gmra.mrb[0].mxu0 %v1142
      %v1616 = vpop.f32.mrb[0].mxu0
      %v1617 = vadd.f32 0.0, %v1616
      %v1618 = vpop.f32.mrb[0].mxu0
      %1619 = vmatprep.mubr.f32.mxu0 %v1407
      %1620 = vmatmul.mubr.f32.gmra.mrb[0].mxu0 %v1145
      %v1621 = vpop.f32.mrb[0].mxu0
      %v1622 = vadd.f32 0.0, %v1621
      %v1623 = vpop.f32.mrb[0].mxu0
      %1624 = vmatprep.mubr.f32.mxu0 %v1409
      %1625 = vmatmul.mubr.f32.gmra.mrb[0].mxu0 %v1148
      %v1626 = vpop.f32.mrb[0].mxu0
      %v1627 = vadd.f32 0.0, %v1626
      %v1628 = vpop.f32.mrb[0].mxu0
      %1629 = vmatprep.mubr.f32.mxu0 %v1411
      %1630 = vmatmul.mubr.f32.gmra.mrb[0].mxu0 %v1151
      %v1631 = vpop.f32.mrb[0].mxu0
      %v1632 = vadd.f32 0.0, %v1631
      %v1633 = vpop.f32.mrb[0].mxu0
      %1634 = vmatprep.mubr.f32.mxu0 %v1413
      %1635 = vmatmul.mubr.f32.gmra.mrb[0].mxu0 %v1154
      %v1636 = vpop.f32.mrb[0].mxu0
      %v1637 = vadd.f32 0.0, %v1636
      %v1638 = vpop.f32.mrb[0].mxu0
      %1639 = vdwg.mxu0
      %v1640 = vsel %vm492, %v1159, 0
      %v1642 = vsel %vm492, %v1232, 0
      %1644 = vmatprep.subr.mxu0 0.0
      %1645 = vmatpush1.msra.mxu0 %v1302
      %1646 = vmatprep.subr.mxu0 0.0
      %1647 = vmatpush1.msra.mxu0 %v1303
      %1648 = vmatprep.subr.mxu0 0.0
      %1649 = vmatpush1.msra.mxu0 %v1304
      %1650 = vmatprep.subr.mxu0 0.0
      %1651 = vmatpush1.msra.mxu0 %v1305
      %1652 = vmatprep.subr.mxu0 0.0
      %1653 = vmatpush1.msra.mxu0 %v1306
      %1654 = vmatprep.subr.mxu0 0.0
      %1655 = vmatpush1.msra.mxu0 %v1307
      %1656 = vmatprep.subr.mxu0 0.0
      %1657 = vmatpush1.msra.mxu0 %v1308
      %1658 = vmatprep.subr.mxu0 0.0
      %1659 = vmatpush1.msra.mxu0 %v1309
      %1660 = vmatprep.subr.mxu0 0.0
      %1661 = vmatpush1.msra.mxu0 %v1310
      %1662 = vmatprep.subr.mxu0 0.0
      %1663 = vmatpush1.msra.mxu0 %v1311
      %1664 = vmatprep.subr.mxu0 0.0
      %1665 = vmatpush1.msra.mxu0 %v1312
      %1666 = vmatprep.subr.mxu0 0.0
      %1667 = vmatpush1.msra.mxu0 %v1313
      %1668 = vmatprep.subr.mxu0 0.0
      %1669 = vmatpush1.msra.mxu0 %v1314
      %1670 = vmatprep.subr.mxu0 0.0
      %1671 = vmatpush1.msra.mxu0 %v1315
      %1672 = vmatprep.subr.mxu0 0.0
      %1673 = vmatpush1.msra.mxu0 %v1316
      %1674 = vmatprep.subr.mxu0 0.0
      %1675 = vmatpush1.msra.mxu0 %v1317
      %1676 = vmatprep.subr.mxu0 0.0
      %1677 = vmatpush1.msra.mxu0 %v1318
      %1678 = vmatprep.subr.mxu0 0.0
      %1679 = vmatpush1.msra.mxu0 %v1319
      %1680 = vmatprep.subr.mxu0 0.0
      %1681 = vmatpush1.msra.mxu0 %v1320
      %1682 = vmatprep.subr.mxu0 0.0
      %1683 = vmatpush1.msra.mxu0 %v1321
      %1684 = vmatprep.subr.mxu0 0.0
      %1685 = vmatpush1.msra.mxu0 %v1322
      %1686 = vmatprep.subr.mxu0 0.0
      %1687 = vmatpush1.msra.mxu0 %v1323
      %1688 = vmatprep.subr.mxu0 0.0
      %1689 = vmatpush1.msra.mxu0 %v1324
      %1690 = vmatprep.subr.mxu0 0.0
      %1691 = vmatpush1.msra.mxu0 %v1325
      %1692 = vmatprep.subr.mxu0 0.0
      %1693 = vmatpush1.msra.mxu0 0.0
      %1694 = vmatprep.subr.mxu0 0.0
      %1695 = vmatpush1.msra.mxu0 0.0
      %1696 = vmatprep.subr.mxu0 0.0
      %1697 = vmatpush1.msra.mxu0 0.0
      %1698 = vmatprep.subr.mxu0 0.0
      %1699 = vmatpush1.msra.mxu0 0.0
      %1700 = vmatprep.subr.mxu0 0.0
      %1701 = vmatpush1.msra.mxu0 0.0
      %1702 = vmatprep.subr.mxu0 0.0
      %1703 = vmatpush1.msra.mxu0 0.0
      %1704 = vmatprep.subr.mxu0 0.0
      %1705 = vmatpush1.msra.mxu0 0.0
      %1706 = vmatprep.subr.mxu0 0.0
      %1707 = vmatpush1.msra.mxu0 0.0
      %1708 = vmatprep.mubr.f32.mxu0 %v1640
      %1709 = vmatmul.mubr.f32.gmra.mrb[0].mxu0 %v1212
      %v1710 = vpop.f32.mrb[0].mxu0
      %v1711 = vadd.f32 %v1482, %v1710
      %v1712 = vpop.f32.mrb[0].mxu0
      %1713 = vmatprep.mubr.f32.mxu0 %v1351
      %1714 = vmatmul.mubr.f32.gmra.mrb[0].mxu0 %v1213
      %v1715 = vpop.f32.mrb[0].mxu0
      %v1716 = vadd.f32 %v1487, %v1715
      %v1717 = vpop.f32.mrb[0].mxu0
      %1718 = vmatprep.mubr.f32.mxu0 %v1353
      %1719 = vmatmul.mubr.f32.gmra.mrb[0].mxu0 %v1214
      %v1720 = vpop.f32.mrb[0].mxu0
      %v1721 = vadd.f32 %v1492, %v1720
      %v1722 = vpop.f32.mrb[0].mxu0
      %1723 = vmatprep.mubr.f32.mxu0 %v1355
      %1724 = vmatmul.mubr.f32.gmra.mrb[0].mxu0 %v1215
      %v1725 = vpop.f32.mrb[0].mxu0
      %v1726 = vadd.f32 %v1497, %v1725
      %v1727 = vpop.f32.mrb[0].mxu0
      %1728 = vmatprep.mubr.f32.mxu0 %v1357
      %1729 = vmatmul.mubr.f32.gmra.mrb[0].mxu0 %v1216
      %v1730 = vpop.f32.mrb[0].mxu0
      %v1731 = vadd.f32 %v1502, %v1730
      %v1732 = vpop.f32.mrb[0].mxu0
      %1733 = vmatprep.mubr.f32.mxu0 %v1359
      %1734 = vmatmul.mubr.f32.gmra.mrb[0].mxu0 %v1217
      %v1735 = vpop.f32.mrb[0].mxu0
      %v1736 = vadd.f32 %v1507, %v1735
      %v1737 = vpop.f32.mrb[0].mxu0
      %1738 = vmatprep.mubr.f32.mxu0 %v1361
      %1739 = vmatmul.mubr.f32.gmra.mrb[0].mxu0 %v1218
      %v1740 = vpop.f32.mrb[0].mxu0
      %v1741 = vadd.f32 %v1512, %v1740
      %v1742 = vpop.f32.mrb[0].mxu0
      %1743 = vmatprep.mubr.f32.mxu0 %v1363
      %1744 = vmatmul.mubr.f32.gmra.mrb[0].mxu0 %v1219
      %v1745 = vpop.f32.mrb[0].mxu0
      %v1746 = vadd.f32 %v1517, %v1745
      %v1747 = vpop.f32.mrb[0].mxu0
      %1748 = vmatprep.mubr.f32.mxu0 %v1365
      %1749 = vmatmul.mubr.f32.gmra.mrb[0].mxu0 %v1220
      %v1750 = vpop.f32.mrb[0].mxu0
      %v1751 = vadd.f32 %v1522, %v1750
      %v1752 = vpop.f32.mrb[0].mxu0
      %1753 = vmatprep.mubr.f32.mxu0 %v1367
      %1754 = vmatmul.mubr.f32.gmra.mrb[0].mxu0 %v1221
      %v1755 = vpop.f32.mrb[0].mxu0
      %v1756 = vadd.f32 %v1527, %v1755
      %v1757 = vpop.f32.mrb[0].mxu0
      %1758 = vmatprep.mubr.f32.mxu0 %v1369
      %1759 = vmatmul.mubr.f32.gmra.mrb[0].mxu0 %v1222
      %v1760 = vpop.f32.mrb[0].mxu0
      %v1761 = vadd.f32 %v1532, %v1760
      %v1762 = vpop.f32.mrb[0].mxu0
      %1763 = vmatprep.mubr.f32.mxu0 %v1371
      %1764 = vmatmul.mubr.f32.gmra.mrb[0].mxu0 %v1223
      %v1765 = vpop.f32.mrb[0].mxu0
      %v1766 = vadd.f32 %v1537, %v1765
      %v1767 = vpop.f32.mrb[0].mxu0
      %1768 = vmatprep.mubr.f32.mxu0 %v1373
      %1769 = vmatmul.mubr.f32.gmra.mrb[0].mxu0 %v1224
      %v1770 = vpop.f32.mrb[0].mxu0
      %v1771 = vadd.f32 %v1542, %v1770
      %v1772 = vpop.f32.mrb[0].mxu0
      %1773 = vmatprep.mubr.f32.mxu0 %v1375
      %1774 = vmatmul.mubr.f32.gmra.mrb[0].mxu0 %v1225
      %v1775 = vpop.f32.mrb[0].mxu0
      %v1776 = vadd.f32 %v1547, %v1775
      %v1777 = vpop.f32.mrb[0].mxu0
      %1778 = vmatprep.mubr.f32.mxu0 %v1377
      %1779 = vmatmul.mubr.f32.gmra.mrb[0].mxu0 %v1226
      %v1780 = vpop.f32.mrb[0].mxu0
      %v1781 = vadd.f32 %v1552, %v1780
      %v1782 = vpop.f32.mrb[0].mxu0
      %1783 = vmatprep.mubr.f32.mxu0 %v1379
      %1784 = vmatmul.mubr.f32.gmra.mrb[0].mxu0 %v1227
      %v1785 = vpop.f32.mrb[0].mxu0
      %v1786 = vadd.f32 %v1557, %v1785
      %v1787 = vpop.f32.mrb[0].mxu0
      %1788 = vmatprep.mubr.f32.mxu0 %v1642
      %1789 = vmatmul.mubr.f32.gmra.mrb[0].mxu0 %v1106
      %v1790 = vpop.f32.mrb[0].mxu0
      %v1791 = vadd.f32 %v1562, %v1790
      %v1792 = vpop.f32.mrb[0].mxu0
      %1793 = vmatprep.mubr.f32.mxu0 %v1383
      %1794 = vmatmul.mubr.f32.gmra.mrb[0].mxu0 %v1109
      %v1795 = vpop.f32.mrb[0].mxu0
      %v1796 = vadd.f32 %v1567, %v1795
      %v1797 = vpop.f32.mrb[0].mxu0
      %1798 = vmatprep.mubr.f32.mxu0 %v1385
      %1799 = vmatmul.mubr.f32.gmra.mrb[0].mxu0 %v1112
      %v1800 = vpop.f32.mrb[0].mxu0
      %v1801 = vadd.f32 %v1572, %v1800
      %v1802 = vpop.f32.mrb[0].mxu0
      %1803 = vmatprep.mubr.f32.mxu0 %v1387
      %1804 = vmatmul.mubr.f32.gmra.mrb[0].mxu0 %v1115
      %v1805 = vpop.f32.mrb[0].mxu0
      %v1806 = vadd.f32 %v1577, %v1805
      %v1807 = vpop.f32.mrb[0].mxu0
      %1808 = vmatprep.mubr.f32.mxu0 %v1389
      %1809 = vmatmul.mubr.f32.gmra.mrb[0].mxu0 %v1118
      %v1810 = vpop.f32.mrb[0].mxu0
      %v1811 = vadd.f32 %v1582, %v1810
      %v1812 = vpop.f32.mrb[0].mxu0
      %1813 = vmatprep.mubr.f32.mxu0 %v1391
      %1814 = vmatmul.mubr.f32.gmra.mrb[0].mxu0 %v1121
      %v1815 = vpop.f32.mrb[0].mxu0
      %v1816 = vadd.f32 %v1587, %v1815
      %v1817 = vpop.f32.mrb[0].mxu0
      %1818 = vmatprep.mubr.f32.mxu0 %v1393
      %1819 = vmatmul.mubr.f32.gmra.mrb[0].mxu0 %v1124
      %v1820 = vpop.f32.mrb[0].mxu0
      %v1821 = vadd.f32 %v1592, %v1820
      %v1822 = vpop.f32.mrb[0].mxu0
      %1823 = vmatprep.mubr.f32.mxu0 %v1395
      %1824 = vmatmul.mubr.f32.gmra.mrb[0].mxu0 %v1127
      %v1825 = vpop.f32.mrb[0].mxu0
      %v1826 = vadd.f32 %v1597, %v1825
      %v1827 = vpop.f32.mrb[0].mxu0
      %1828 = vmatprep.mubr.f32.mxu0 %v1397
      %1829 = vmatmul.mubr.f32.gmra.mrb[0].mxu0 %v1130
      %v1830 = vpop.f32.mrb[0].mxu0
      %v1831 = vadd.f32 %v1602, %v1830
      %v1832 = vpop.f32.mrb[0].mxu0
      %1833 = vmatprep.mubr.f32.mxu0 %v1399
      %1834 = vmatmul.mubr.f32.gmra.mrb[0].mxu0 %v1133
      %v1835 = vpop.f32.mrb[0].mxu0
      %v1836 = vadd.f32 %v1607, %v1835
      %v1837 = vpop.f32.mrb[0].mxu0
      %1838 = vmatprep.mubr.f32.mxu0 %v1401
      %1839 = vmatmul.mubr.f32.gmra.mrb[0].mxu0 %v1136
      %v1840 = vpop.f32.mrb[0].mxu0
      %v1841 = vadd.f32 %v1612, %v1840
      %v1842 = vpop.f32.mrb[0].mxu0
      %1843 = vmatprep.mubr.f32.mxu0 %v1403
      %1844 = vmatmul.mubr.f32.gmra.mrb[0].mxu0 %v1139
      %v1845 = vpop.f32.mrb[0].mxu0
      %v1846 = vadd.f32 %v1617, %v1845
      %v1847 = vpop.f32.mrb[0].mxu0
      %1848 = vmatprep.mubr.f32.mxu0 %v1405
      %1849 = vmatmul.mubr.f32.gmra.mrb[0].mxu0 %v1142
      %v1850 = vpop.f32.mrb[0].mxu0
      %v1851 = vadd.f32 %v1622, %v1850
      %v1852 = vpop.f32.mrb[0].mxu0
      %1853 = vmatprep.mubr.f32.mxu0 %v1407
      %1854 = vmatmul.mubr.f32.gmra.mrb[0].mxu0 %v1145
      %v1855 = vpop.f32.mrb[0].mxu0
      %v1856 = vadd.f32 %v1627, %v1855
      %v1857 = vpop.f32.mrb[0].mxu0
      %1858 = vmatprep.mubr.f32.mxu0 %v1409
      %1859 = vmatmul.mubr.f32.gmra.mrb[0].mxu0 %v1148
      %v1860 = vpop.f32.mrb[0].mxu0
      %v1861 = vadd.f32 %v1632, %v1860
      %v1862 = vpop.f32.mrb[0].mxu0
      %1863 = vmatprep.mubr.f32.mxu0 %v1411
      %1864 = vmatmul.mubr.f32.gmra.mrb[0].mxu0 %v1151
      %v1865 = vpop.f32.mrb[0].mxu0
      %v1866 = vadd.f32 %v1637, %v1865
      %v1867 = vpop.f32.mrb[0].mxu0
      %1868 = vdwg.mxu0
      %s1869 = scalar_lea.vmem %s4, 384
      %v1870 = vld [vmem:[%s1869] sm:$0xff]
      %v1871 = vld [vmem:[%s1869 + $0x8] sm:$0xff]
      %v1872 = vld [vmem:[%s1869 + $0x10] sm:$0xff]
      %v1873 = vld [vmem:[%s1869 + $0x18] sm:$0xff]
      %v1874 = vld [vmem:[%s1869 + $0x20] sm:$0xff]
      %v1875 = vld [vmem:[%s1869 + $0x28] sm:$0xff]
      %v1876 = vld [vmem:[%s1869 + $0x30] sm:$0xff]
      %v1877 = vld [vmem:[%s1869 + $0x38] sm:$0xff]
      %v1878 = vld [vmem:[%s1869 + $0x40] sm:$0xff]
      %v1879 = vld [vmem:[%s1869 + $0x48] sm:$0xff]
      %v1880 = vld [vmem:[%s1869 + $0x50] sm:$0xff]
      %v1881 = vld [vmem:[%s1869 + $0x58] sm:$0xff]
      %v1882 = vld [vmem:[%s1869 + $0x60] sm:$0xff]
      %v1883 = vld [vmem:[%s1869 + $0x68] sm:$0xff]
      %v1884 = vld [vmem:[%s1869 + $0x70] sm:$0xff]
      %v1885 = vld [vmem:[%s1869 + $0x78] sm:$0xff]
      %v1886 = vld [vmem:[%s1869 + $0x80] sm:$0xff]
      %v1887 = vld [vmem:[%s1869 + $0x88] sm:$0xff]
      %v1888 = vld [vmem:[%s1869 + $0x90] sm:$0xff]
      %v1889 = vld [vmem:[%s1869 + $0x98] sm:$0xff]
      %v1890 = vld [vmem:[%s1869 + $0xa0] sm:$0xff]
      %v1891 = vld [vmem:[%s1869 + $0xa8] sm:$0xff]
      %v1892 = vld [vmem:[%s1869 + $0xb0] sm:$0xff]
      %v1893 = vld [vmem:[%s1869 + $0xb8] sm:$0xff]
      %v1894 = vsel %vm492, %v1193, 0
      %v1896 = vsel %vm492, %v1283, 0
      %1898 = vmatprep.subr.mxu0 0.0
      %1899 = vmatpush1.msra.mxu0 %v1870
      %1900 = vmatprep.subr.mxu0 0.0
      %1901 = vmatpush1.msra.mxu0 %v1871
      %1902 = vmatprep.subr.mxu0 0.0
      %1903 = vmatpush1.msra.mxu0 %v1872
      %1904 = vmatprep.subr.mxu0 0.0
      %1905 = vmatpush1.msra.mxu0 %v1873
      %1906 = vmatprep.subr.mxu0 0.0
      %1907 = vmatpush1.msra.mxu0 %v1874
      %1908 = vmatprep.subr.mxu0 0.0
      %1909 = vmatpush1.msra.mxu0 %v1875
      %1910 = vmatprep.subr.mxu0 0.0
      %1911 = vmatpush1.msra.mxu0 %v1876
      %1912 = vmatprep.subr.mxu0 0.0
      %1913 = vmatpush1.msra.mxu0 %v1877
      %1914 = vmatprep.subr.mxu0 0.0
      %1915 = vmatpush1.msra.mxu0 %v1878
      %1916 = vmatprep.subr.mxu0 0.0
      %1917 = vmatpush1.msra.mxu0 %v1879
      %1918 = vmatprep.subr.mxu0 0.0
      %1919 = vmatpush1.msra.mxu0 %v1880
      %1920 = vmatprep.subr.mxu0 0.0
      %1921 = vmatpush1.msra.mxu0 %v1881
      %1922 = vmatprep.subr.mxu0 0.0
      %1923 = vmatpush1.msra.mxu0 %v1882
      %1924 = vmatprep.subr.mxu0 0.0
      %1925 = vmatpush1.msra.mxu0 %v1883
      %1926 = vmatprep.subr.mxu0 0.0
      %1927 = vmatpush1.msra.mxu0 %v1884
      %1928 = vmatprep.subr.mxu0 0.0
      %1929 = vmatpush1.msra.mxu0 %v1885
      %1930 = vmatprep.subr.mxu0 0.0
      %1931 = vmatpush1.msra.mxu0 %v1886
      %1932 = vmatprep.subr.mxu0 0.0
      %1933 = vmatpush1.msra.mxu0 %v1887
      %1934 = vmatprep.subr.mxu0 0.0
      %1935 = vmatpush1.msra.mxu0 %v1888
      %1936 = vmatprep.subr.mxu0 0.0
      %1937 = vmatpush1.msra.mxu0 %v1889
      %1938 = vmatprep.subr.mxu0 0.0
      %1939 = vmatpush1.msra.mxu0 %v1890
      %1940 = vmatprep.subr.mxu0 0.0
      %1941 = vmatpush1.msra.mxu0 %v1891
      %1942 = vmatprep.subr.mxu0 0.0
      %1943 = vmatpush1.msra.mxu0 %v1892
      %1944 = vmatprep.subr.mxu0 0.0
      %1945 = vmatpush1.msra.mxu0 %v1893
      %1946 = vmatprep.subr.mxu0 0.0
      %1947 = vmatpush1.msra.mxu0 0.0
      %1948 = vmatprep.subr.mxu0 0.0
      %1949 = vmatpush1.msra.mxu0 0.0
      %1950 = vmatprep.subr.mxu0 0.0
      %1951 = vmatpush1.msra.mxu0 0.0
      %1952 = vmatprep.subr.mxu0 0.0
      %1953 = vmatpush1.msra.mxu0 0.0
      %1954 = vmatprep.subr.mxu0 0.0
      %1955 = vmatpush1.msra.mxu0 0.0
      %1956 = vmatprep.subr.mxu0 0.0
      %1957 = vmatpush1.msra.mxu0 0.0
      %1958 = vmatprep.subr.mxu0 0.0
      %1959 = vmatpush1.msra.mxu0 0.0
      %1960 = vmatprep.subr.mxu0 0.0
      %1961 = vmatpush1.msra.mxu0 0.0
      %1962 = vmatprep.mubr.f32.mxu0 %v1353
      %1963 = vmatmul.mubr.f32.gmra.mrb[0].mxu0 %v1214
      %v1964 = vpop.f32.mrb[0].mxu0
      %v1965 = vadd.f32 0.0, %v1964
      %v1966 = vpop.f32.mrb[0].mxu0
      %1967 = vmatprep.mubr.f32.mxu0 %v1355
      %1968 = vmatmul.mubr.f32.gmra.mrb[0].mxu0 %v1215
      %v1969 = vpop.f32.mrb[0].mxu0
      %v1970 = vadd.f32 0.0, %v1969
      %v1971 = vpop.f32.mrb[0].mxu0
      %1972 = vmatprep.mubr.f32.mxu0 %v1357
      %1973 = vmatmul.mubr.f32.gmra.mrb[0].mxu0 %v1216
      %v1974 = vpop.f32.mrb[0].mxu0
      %v1975 = vadd.f32 0.0, %v1974
      %v1976 = vpop.f32.mrb[0].mxu0
      %1977 = vmatprep.mubr.f32.mxu0 %v1359
      %1978 = vmatmul.mubr.f32.gmra.mrb[0].mxu0 %v1217
      %v1979 = vpop.f32.mrb[0].mxu0
      %v1980 = vadd.f32 0.0, %v1979
      %v1981 = vpop.f32.mrb[0].mxu0
      %1982 = vmatprep.mubr.f32.mxu0 %v1361
      %1983 = vmatmul.mubr.f32.gmra.mrb[0].mxu0 %v1218
      %v1984 = vpop.f32.mrb[0].mxu0
      %v1985 = vadd.f32 0.0, %v1984
      %v1986 = vpop.f32.mrb[0].mxu0
      %1987 = vmatprep.mubr.f32.mxu0 %v1363
      %1988 = vmatmul.mubr.f32.gmra.mrb[0].mxu0 %v1219
      %v1989 = vpop.f32.mrb[0].mxu0
      %v1990 = vadd.f32 0.0, %v1989
      %v1991 = vpop.f32.mrb[0].mxu0
      %1992 = vmatprep.mubr.f32.mxu0 %v1365
      %1993 = vmatmul.mubr.f32.gmra.mrb[0].mxu0 %v1220
      %v1994 = vpop.f32.mrb[0].mxu0
      %v1995 = vadd.f32 0.0, %v1994
      %v1996 = vpop.f32.mrb[0].mxu0
      %1997 = vmatprep.mubr.f32.mxu0 %v1367
      %1998 = vmatmul.mubr.f32.gmra.mrb[0].mxu0 %v1221
      %v1999 = vpop.f32.mrb[0].mxu0
      %v2000 = vadd.f32 0.0, %v1999
      %v2001 = vpop.f32.mrb[0].mxu0
      %2002 = vmatprep.mubr.f32.mxu0 %v1369
      %2003 = vmatmul.mubr.f32.gmra.mrb[0].mxu0 %v1222
      %v2004 = vpop.f32.mrb[0].mxu0
      %v2005 = vadd.f32 0.0, %v2004
      %v2006 = vpop.f32.mrb[0].mxu0
      %2007 = vmatprep.mubr.f32.mxu0 %v1371
      %2008 = vmatmul.mubr.f32.gmra.mrb[0].mxu0 %v1223
      %v2009 = vpop.f32.mrb[0].mxu0
      %v2010 = vadd.f32 0.0, %v2009
      %v2011 = vpop.f32.mrb[0].mxu0
      %2012 = vmatprep.mubr.f32.mxu0 %v1373
      %2013 = vmatmul.mubr.f32.gmra.mrb[0].mxu0 %v1224
      %v2014 = vpop.f32.mrb[0].mxu0
      %v2015 = vadd.f32 0.0, %v2014
      %v2016 = vpop.f32.mrb[0].mxu0
      %2017 = vmatprep.mubr.f32.mxu0 %v1375
      %2018 = vmatmul.mubr.f32.gmra.mrb[0].mxu0 %v1225
      %v2019 = vpop.f32.mrb[0].mxu0
      %v2020 = vadd.f32 0.0, %v2019
      %v2021 = vpop.f32.mrb[0].mxu0
      %2022 = vmatprep.mubr.f32.mxu0 %v1377
      %2023 = vmatmul.mubr.f32.gmra.mrb[0].mxu0 %v1226
      %v2024 = vpop.f32.mrb[0].mxu0
      %v2025 = vadd.f32 0.0, %v2024
      %v2026 = vpop.f32.mrb[0].mxu0
      %2027 = vmatprep.mubr.f32.mxu0 %v1379
      %2028 = vmatmul.mubr.f32.gmra.mrb[0].mxu0 %v1227
      %v2029 = vpop.f32.mrb[0].mxu0
      %v2030 = vadd.f32 0.0, %v2029
      %v2031 = vpop.f32.mrb[0].mxu0
      %2032 = vmatprep.mubr.f32.mxu0 %v1381
      %2033 = vmatmul.mubr.f32.gmra.mrb[0].mxu0 %v1228
      %v2034 = vpop.f32.mrb[0].mxu0
      %v2035 = vadd.f32 0.0, %v2034
      %v2036 = vpop.f32.mrb[0].mxu0
      %2037 = vmatprep.mubr.f32.mxu0 %v1894
      %2038 = vmatmul.mubr.f32.gmra.mrb[0].mxu0 %v1229
      %v2039 = vpop.f32.mrb[0].mxu0
      %v2040 = vadd.f32 0.0, %v2039
      %v2041 = vpop.f32.mrb[0].mxu0
      %2042 = vmatprep.mubr.f32.mxu0 %v1385
      %2043 = vmatmul.mubr.f32.gmra.mrb[0].mxu0 %v1112
      %v2044 = vpop.f32.mrb[0].mxu0
      %v2045 = vadd.f32 0.0, %v2044
      %v2046 = vpop.f32.mrb[0].mxu0
      %2047 = vmatprep.mubr.f32.mxu0 %v1387
      %2048 = vmatmul.mubr.f32.gmra.mrb[0].mxu0 %v1115
      %v2049 = vpop.f32.mrb[0].mxu0
      %v2050 = vadd.f32 0.0, %v2049
      %v2051 = vpop.f32.mrb[0].mxu0
      %2052 = vmatprep.mubr.f32.mxu0 %v1389
      %2053 = vmatmul.mubr.f32.gmra.mrb[0].mxu0 %v1118
      %v2054 = vpop.f32.mrb[0].mxu0
      %v2055 = vadd.f32 0.0, %v2054
      %v2056 = vpop.f32.mrb[0].mxu0
      %2057 = vmatprep.mubr.f32.mxu0 %v1391
      %2058 = vmatmul.mubr.f32.gmra.mrb[0].mxu0 %v1121
      %v2059 = vpop.f32.mrb[0].mxu0
      %v2060 = vadd.f32 0.0, %v2059
      %v2061 = vpop.f32.mrb[0].mxu0
      %2062 = vmatprep.mubr.f32.mxu0 %v1393
      %2063 = vmatmul.mubr.f32.gmra.mrb[0].mxu0 %v1124
      %v2064 = vpop.f32.mrb[0].mxu0
      %v2065 = vadd.f32 0.0, %v2064
      %v2066 = vpop.f32.mrb[0].mxu0
      %2067 = vmatprep.mubr.f32.mxu0 %v1395
      %2068 = vmatmul.mubr.f32.gmra.mrb[0].mxu0 %v1127
      %v2069 = vpop.f32.mrb[0].mxu0
      %v2070 = vadd.f32 0.0, %v2069
      %v2071 = vpop.f32.mrb[0].mxu0
      %2072 = vmatprep.mubr.f32.mxu0 %v1397
      %2073 = vmatmul.mubr.f32.gmra.mrb[0].mxu0 %v1130
      %v2074 = vpop.f32.mrb[0].mxu0
      %v2075 = vadd.f32 0.0, %v2074
      %v2076 = vpop.f32.mrb[0].mxu0
      %2077 = vmatprep.mubr.f32.mxu0 %v1399
      %2078 = vmatmul.mubr.f32.gmra.mrb[0].mxu0 %v1133
      %v2079 = vpop.f32.mrb[0].mxu0
      %v2080 = vadd.f32 0.0, %v2079
      %v2081 = vpop.f32.mrb[0].mxu0
      %2082 = vmatprep.mubr.f32.mxu0 %v1401
      %2083 = vmatmul.mubr.f32.gmra.mrb[0].mxu0 %v1136
      %v2084 = vpop.f32.mrb[0].mxu0
      %v2085 = vadd.f32 0.0, %v2084
      %v2086 = vpop.f32.mrb[0].mxu0
      %2087 = vmatprep.mubr.f32.mxu0 %v1403
      %2088 = vmatmul.mubr.f32.gmra.mrb[0].mxu0 %v1139
      %v2089 = vpop.f32.mrb[0].mxu0
      %v2090 = vadd.f32 0.0, %v2089
      %v2091 = vpop.f32.mrb[0].mxu0
      %2092 = vmatprep.mubr.f32.mxu0 %v1405
      %2093 = vmatmul.mubr.f32.gmra.mrb[0].mxu0 %v1142
      %v2094 = vpop.f32.mrb[0].mxu0
      %v2095 = vadd.f32 0.0, %v2094
      %v2096 = vpop.f32.mrb[0].mxu0
      %2097 = vmatprep.mubr.f32.mxu0 %v1407
      %2098 = vmatmul.mubr.f32.gmra.mrb[0].mxu0 %v1145
      %v2099 = vpop.f32.mrb[0].mxu0
      %v2100 = vadd.f32 0.0, %v2099
      %v2101 = vpop.f32.mrb[0].mxu0
      %2102 = vmatprep.mubr.f32.mxu0 %v1409
      %2103 = vmatmul.mubr.f32.gmra.mrb[0].mxu0 %v1148
      %v2104 = vpop.f32.mrb[0].mxu0
      %v2105 = vadd.f32 0.0, %v2104
      %v2106 = vpop.f32.mrb[0].mxu0
      %2107 = vmatprep.mubr.f32.mxu0 %v1411
      %2108 = vmatmul.mubr.f32.gmra.mrb[0].mxu0 %v1151
      %v2109 = vpop.f32.mrb[0].mxu0
      %v2110 = vadd.f32 0.0, %v2109
      %v2111 = vpop.f32.mrb[0].mxu0
      %2112 = vmatprep.mubr.f32.mxu0 %v1413
      %2113 = vmatmul.mubr.f32.gmra.mrb[0].mxu0 %v1154
      %v2114 = vpop.f32.mrb[0].mxu0
      %v2115 = vadd.f32 0.0, %v2114
      %v2116 = vpop.f32.mrb[0].mxu0
      %2117 = vmatprep.mubr.f32.mxu0 %v1896
      %2118 = vmatmul.mubr.f32.gmra.mrb[0].mxu0 %v1157
      %v2119 = vpop.f32.mrb[0].mxu0
      %v2120 = vadd.f32 0.0, %v2119
      %v2121 = vpop.f32.mrb[0].mxu0
      %2122 = vdwg.mxu0
      %v2123 = vadd.f32 %v1711, %v1965
      %v2124 = vadd.f32 %v1716, %v1970
      %v2125 = vadd.f32 %v1721, %v1975
      %v2126 = vadd.f32 %v1726, %v1980
      %v2127 = vadd.f32 %v1731, %v1985
      %v2128 = vadd.f32 %v1736, %v1990
      %v2129 = vadd.f32 %v1741, %v1995
      %v2130 = vadd.f32 %v1746, %v2000
      %v2131 = vadd.f32 %v1751, %v2005
      %v2132 = vadd.f32 %v1756, %v2010
      %v2133 = vadd.f32 %v1761, %v2015
      %v2134 = vadd.f32 %v1766, %v2020
      %v2135 = vadd.f32 %v1771, %v2025
      %v2136 = vadd.f32 %v1776, %v2030
      %v2137 = vadd.f32 %v1781, %v2035
      %v2138 = vadd.f32 %v1786, %v2040
      %v2139 = vadd.f32 %v1791, %v2045
      %v2140 = vadd.f32 %v1796, %v2050
      %v2141 = vadd.f32 %v1801, %v2055
      %v2142 = vadd.f32 %v1806, %v2060
      %v2143 = vadd.f32 %v1811, %v2065
      %v2144 = vadd.f32 %v1816, %v2070
      %v2145 = vadd.f32 %v1821, %v2075
      %v2146 = vadd.f32 %v1826, %v2080
      %v2147 = vadd.f32 %v1831, %v2085
      %v2148 = vadd.f32 %v1836, %v2090
      %v2149 = vadd.f32 %v1841, %v2095
      %v2150 = vadd.f32 %v1846, %v2100
      %v2151 = vadd.f32 %v1851, %v2105
      %v2152 = vadd.f32 %v1856, %v2110
      %v2153 = vadd.f32 %v1861, %v2115
      %v2154 = vadd.f32 %v1866, %v2120
      %v2155 = vld [vmem:[%s5] sm:$0x1]
      %v2157 = vlaneseq
      %v2158 = vshrl.u32 %v2157, 7
      %v2159 = vsub.s32 0, %v2158
      %v2160 = vrot.slane %v2155, %v2159
      %v2162 = vadd.f32 %v2123, %v2160
      %v2163 = vadd.f32 %v2124, %v2160
      %v2164 = vadd.f32 %v2125, %v2160
      %v2165 = vadd.f32 %v2126, %v2160
      %v2166 = vadd.f32 %v2127, %v2160
      %v2167 = vadd.f32 %v2128, %v2160
      %v2168 = vadd.f32 %v2129, %v2160
      %v2169 = vadd.f32 %v2130, %v2160
      %v2170 = vadd.f32 %v2131, %v2160
      %v2171 = vadd.f32 %v2132, %v2160
      %v2172 = vadd.f32 %v2133, %v2160
      %v2173 = vadd.f32 %v2134, %v2160
      %v2174 = vadd.f32 %v2135, %v2160
      %v2175 = vadd.f32 %v2136, %v2160
      %v2176 = vadd.f32 %v2137, %v2160
      %v2177 = vadd.f32 %v2138, %v2160
      %v2178 = vadd.f32 %v2139, %v2160
      %v2179 = vadd.f32 %v2140, %v2160
      %v2180 = vadd.f32 %v2141, %v2160
      %v2181 = vadd.f32 %v2142, %v2160
      %v2182 = vadd.f32 %v2143, %v2160
      %v2183 = vadd.f32 %v2144, %v2160
      %v2184 = vadd.f32 %v2145, %v2160
      %v2185 = vadd.f32 %v2146, %v2160
      %v2186 = vadd.f32 %v2147, %v2160
      %v2187 = vadd.f32 %v2148, %v2160
      %v2188 = vadd.f32 %v2149, %v2160
      %v2189 = vadd.f32 %v2150, %v2160
      %v2190 = vadd.f32 %v2151, %v2160
      %v2191 = vadd.f32 %v2152, %v2160
      %v2192 = vadd.f32 %v2153, %v2160
      %v2193 = vadd.f32 %v2154, %v2160
      %vm2194 = vcmp.gt.f32.partialorder %v2162, 0.0
      %vm2195 = vcmp.gt.f32.partialorder %v2163, 0.0
      %vm2196 = vcmp.gt.f32.partialorder %v2164, 0.0
      %vm2197 = vcmp.gt.f32.partialorder %v2165, 0.0
      %vm2198 = vcmp.gt.f32.partialorder %v2166, 0.0
      %vm2199 = vcmp.gt.f32.partialorder %v2167, 0.0
      %vm2200 = vcmp.gt.f32.partialorder %v2168, 0.0
      %vm2201 = vcmp.gt.f32.partialorder %v2169, 0.0
      %vm2202 = vcmp.gt.f32.partialorder %v2170, 0.0
      %vm2203 = vcmp.gt.f32.partialorder %v2171, 0.0
      %vm2204 = vcmp.gt.f32.partialorder %v2172, 0.0
      %vm2205 = vcmp.gt.f32.partialorder %v2173, 0.0
      %vm2206 = vcmp.gt.f32.partialorder %v2174, 0.0
      %vm2207 = vcmp.gt.f32.partialorder %v2175, 0.0
      %vm2208 = vcmp.gt.f32.partialorder %v2176, 0.0
      %vm2209 = vcmp.gt.f32.partialorder %v2177, 0.0
      %vm2210 = vcmp.gt.f32.partialorder %v2178, 0.0
      %vm2211 = vcmp.gt.f32.partialorder %v2179, 0.0
      %vm2212 = vcmp.gt.f32.partialorder %v2180, 0.0
      %vm2213 = vcmp.gt.f32.partialorder %v2181, 0.0
      %vm2214 = vcmp.gt.f32.partialorder %v2182, 0.0
      %vm2215 = vcmp.gt.f32.partialorder %v2183, 0.0
      %vm2216 = vcmp.gt.f32.partialorder %v2184, 0.0
      %vm2217 = vcmp.gt.f32.partialorder %v2185, 0.0
      %vm2218 = vcmp.gt.f32.partialorder %v2186, 0.0
      %vm2219 = vcmp.gt.f32.partialorder %v2187, 0.0
      %vm2220 = vcmp.gt.f32.partialorder %v2188, 0.0
      %vm2221 = vcmp.gt.f32.partialorder %v2189, 0.0
      %vm2222 = vcmp.gt.f32.partialorder %v2190, 0.0
      %vm2223 = vcmp.gt.f32.partialorder %v2191, 0.0
      %vm2224 = vcmp.gt.f32.partialorder %v2192, 0.0
      %vm2225 = vcmp.gt.f32.partialorder %v2193, 0.0
      %v2226 = vmul.f32 %v2162, 0.1
      %v2227 = vmul.f32 %v2163, 0.1
      %v2228 = vmul.f32 %v2164, 0.1
      %v2229 = vmul.f32 %v2165, 0.1
      %v2230 = vmul.f32 %v2166, 0.1
      %v2231 = vmul.f32 %v2167, 0.1
      %v2232 = vmul.f32 %v2168, 0.1
      %v2233 = vmul.f32 %v2169, 0.1
      %v2234 = vmul.f32 %v2170, 0.1
      %v2235 = vmul.f32 %v2171, 0.1
      %v2236 = vmul.f32 %v2172, 0.1
      %v2237 = vmul.f32 %v2173, 0.1
      %v2238 = vmul.f32 %v2174, 0.1
      %v2239 = vmul.f32 %v2175, 0.1
      %v2240 = vmul.f32 %v2176, 0.1
      %v2241 = vmul.f32 %v2177, 0.1
      %v2242 = vmul.f32 %v2178, 0.1
      %v2243 = vmul.f32 %v2179, 0.1
      %v2244 = vmul.f32 %v2180, 0.1
      %v2245 = vmul.f32 %v2181, 0.1
      %v2246 = vmul.f32 %v2182, 0.1
      %v2247 = vmul.f32 %v2183, 0.1
      %v2248 = vmul.f32 %v2184, 0.1
      %v2249 = vmul.f32 %v2185, 0.1
      %v2250 = vmul.f32 %v2186, 0.1
      %v2251 = vmul.f32 %v2187, 0.1
      %v2252 = vmul.f32 %v2188, 0.1
      %v2253 = vmul.f32 %v2189, 0.1
      %v2254 = vmul.f32 %v2190, 0.1
      %v2255 = vmul.f32 %v2191, 0.1
      %v2256 = vmul.f32 %v2192, 0.1
      %v2257 = vmul.f32 %v2193, 0.1
      %v2258 = vsel %vm2194, %v2162, %v2226
      %v2259 = vsel %vm2195, %v2163, %v2227
      %v2260 = vsel %vm2196, %v2164, %v2228
      %v2261 = vsel %vm2197, %v2165, %v2229
      %v2262 = vsel %vm2198, %v2166, %v2230
      %v2263 = vsel %vm2199, %v2167, %v2231
      %v2264 = vsel %vm2200, %v2168, %v2232
      %v2265 = vsel %vm2201, %v2169, %v2233
      %v2266 = vsel %vm2202, %v2170, %v2234
      %v2267 = vsel %vm2203, %v2171, %v2235
      %v2268 = vsel %vm2204, %v2172, %v2236
      %v2269 = vsel %vm2205, %v2173, %v2237
      %v2270 = vsel %vm2206, %v2174, %v2238
      %v2271 = vsel %vm2207, %v2175, %v2239
      %v2272 = vsel %vm2208, %v2176, %v2240
      %v2273 = vsel %vm2209, %v2177, %v2241
      %v2274 = vsel %vm2210, %v2178, %v2242
      %v2275 = vsel %vm2211, %v2179, %v2243
      %v2276 = vsel %vm2212, %v2180, %v2244
      %v2277 = vsel %vm2213, %v2181, %v2245
      %v2278 = vsel %vm2214, %v2182, %v2246
      %v2279 = vsel %vm2215, %v2183, %v2247
      %v2280 = vsel %vm2216, %v2184, %v2248
      %v2281 = vsel %vm2217, %v2185, %v2249
      %v2282 = vsel %vm2218, %v2186, %v2250
      %v2283 = vsel %vm2219, %v2187, %v2251
      %v2284 = vsel %vm2220, %v2188, %v2252
      %v2285 = vsel %vm2221, %v2189, %v2253
      %v2286 = vsel %vm2222, %v2190, %v2254
      %v2287 = vsel %vm2223, %v2191, %v2255
      %v2288 = vsel %vm2224, %v2192, %v2256
      %v2289 = vsel %vm2225, %v2193, %v2257
      %v2290 = vld [vmem:[%s6] sm:$0xff]
      %v2291 = vld [vmem:[%s6 + $0x8] sm:$0xff]
      %v2292 = vld [vmem:[%s6 + $0x10] sm:$0xff]
      %v2293 = vld [vmem:[%s6 + $0x18] sm:$0xff]
      %v2294 = vld [vmem:[%s7] sm:$0x1]
      %v2296 = vlaneseq
      %v2297 = vshrl.u32 %v2296, 7
      %v2298 = vsub.s32 0, %v2297
      %v2299 = vrot.slane %v2294, %v2298
      %v2302 = vsel %vm334, %v2258, 0
      %v2305 = vsel %vm334, %v2259, 0
      %v2308 = vsel %vm334, %v2260, 0
      %v2311 = vsel %vm334, %v2261, 0
      %v2314 = vsel %vm334, %v2262, 0
      %v2317 = vsel %vm334, %v2263, 0
      %v2320 = vsel %vm334, %v2264, 0
      %v2323 = vsel %vm334, %v2265, 0
      %v2326 = vsel %vm334, %v2266, 0
      %v2329 = vsel %vm334, %v2267, 0
      %v2332 = vsel %vm334, %v2268, 0
      %v2335 = vsel %vm334, %v2269, 0
      %v2338 = vsel %vm334, %v2270, 0
      %v2341 = vsel %vm334, %v2271, 0
      %v2344 = vsel %vm334, %v2272, 0
      %v2347 = vsel %vm334, %v2273, 0
      %v2350 = vsel %vm334, %v2274, 0
      %v2353 = vsel %vm334, %v2275, 0
      %v2356 = vsel %vm334, %v2276, 0
      %v2359 = vsel %vm334, %v2277, 0
      %v2362 = vsel %vm334, %v2278, 0
      %v2365 = vsel %vm334, %v2279, 0
      %v2368 = vsel %vm334, %v2280, 0
      %v2371 = vsel %vm334, %v2281, 0
      %v2374 = vsel %vm334, %v2282, 0
      %v2377 = vsel %vm334, %v2283, 0
      %v2380 = vsel %vm334, %v2284, 0
      %v2383 = vsel %vm334, %v2285, 0
      %v2386 = vsel %vm334, %v2286, 0
      %v2389 = vsel %vm334, %v2287, 0
      %v2392 = vsel %vm334, %v2288, 0
      %v2395 = vsel %vm334, %v2289, 0
      %2397 = vmatprep.subr.mxu0 0.0
      %2398 = vmatpush1.msra.mxu0 %v2290
      %2399 = vmatprep.subr.mxu0 0.0
      %2400 = vmatpush1.msra.mxu0 %v2291
      %2401 = vmatprep.subr.mxu0 0.0
      %2402 = vmatpush1.msra.mxu0 %v2292
      %2403 = vmatprep.subr.mxu0 0.0
      %2404 = vmatpush1.msra.mxu0 %v2293
      %2405 = vmatprep.subr.mxu0 0.0
      %2406 = vmatpush1.msra.mxu0 0.0
      %2407 = vmatprep.subr.mxu0 0.0
      %2408 = vmatpush1.msra.mxu0 0.0
      %2409 = vmatprep.subr.mxu0 0.0
      %2410 = vmatpush1.msra.mxu0 0.0
      %2411 = vmatprep.subr.mxu0 0.0
      %2412 = vmatpush1.msra.mxu0 0.0
      %2413 = vmatprep.subr.mxu0 0.0
      %2414 = vmatpush1.msra.mxu0 0.0
      %2415 = vmatprep.subr.mxu0 0.0
      %2416 = vmatpush1.msra.mxu0 0.0
      %2417 = vmatprep.subr.mxu0 0.0
      %2418 = vmatpush1.msra.mxu0 0.0
      %2419 = vmatprep.subr.mxu0 0.0
      %2420 = vmatpush1.msra.mxu0 0.0
      %2421 = vmatprep.subr.mxu0 0.0
      %2422 = vmatpush1.msra.mxu0 0.0
      %2423 = vmatprep.subr.mxu0 0.0
      %2424 = vmatpush1.msra.mxu0 0.0
      %2425 = vmatprep.subr.mxu0 0.0
      %2426 = vmatpush1.msra.mxu0 0.0
      %2427 = vmatprep.subr.mxu0 0.0
      %2428 = vmatpush1.msra.mxu0 0.0
      %2429 = vmatprep.subr.mxu0 0.0
      %2430 = vmatpush1.msra.mxu0 0.0
      %2431 = vmatprep.subr.mxu0 0.0
      %2432 = vmatpush1.msra.mxu0 0.0
      %2433 = vmatprep.subr.mxu0 0.0
      %2434 = vmatpush1.msra.mxu0 0.0
      %2435 = vmatprep.subr.mxu0 0.0
      %2436 = vmatpush1.msra.mxu0 0.0
      %2437 = vmatprep.subr.mxu0 0.0
      %2438 = vmatpush1.msra.mxu0 0.0
      %2439 = vmatprep.subr.mxu0 0.0
      %2440 = vmatpush1.msra.mxu0 0.0
      %2441 = vmatprep.subr.mxu0 0.0
      %2442 = vmatpush1.msra.mxu0 0.0
      %2443 = vmatprep.subr.mxu0 0.0
      %2444 = vmatpush1.msra.mxu0 0.0
      %2445 = vmatprep.subr.mxu0 0.0
      %2446 = vmatpush1.msra.mxu0 0.0
      %2447 = vmatprep.subr.mxu0 0.0
      %2448 = vmatpush1.msra.mxu0 0.0
      %2449 = vmatprep.subr.mxu0 0.0
      %2450 = vmatpush1.msra.mxu0 0.0
      %2451 = vmatprep.subr.mxu0 0.0
      %2452 = vmatpush1.msra.mxu0 0.0
      %2453 = vmatprep.subr.mxu0 0.0
      %2454 = vmatpush1.msra.mxu0 0.0
      %2455 = vmatprep.subr.mxu0 0.0
      %2456 = vmatpush1.msra.mxu0 0.0
      %2457 = vmatprep.subr.mxu0 0.0
      %2458 = vmatpush1.msra.mxu0 0.0
      %2459 = vmatprep.subr.mxu0 0.0
      %2460 = vmatpush1.msra.mxu0 0.0
      %2461 = vmatprep.mubr.f32.mxu0 0.0
      %2462 = vmatmul.mubr.f32.gmra.mrb[0].mxu0 %v2302
      %v2463 = vpop.f32.mrb[0].mxu0
      %v2464 = vadd.f32 %v2299, %v2463
      %v2465 = vpop.f32.mrb[0].mxu0
      %2466 = vmatprep.mubr.f32.mxu0 0.0
      %2467 = vmatmul.mubr.f32.gmra.mrb[0].mxu0 %v2305
      %v2468 = vpop.f32.mrb[0].mxu0
      %v2469 = vadd.f32 %v2299, %v2468
      %v2470 = vpop.f32.mrb[0].mxu0
      %2471 = vmatprep.mubr.f32.mxu0 0.0
      %2472 = vmatmul.mubr.f32.gmra.mrb[0].mxu0 %v2308
      %v2473 = vpop.f32.mrb[0].mxu0
      %v2474 = vadd.f32 %v2299, %v2473
      %v2475 = vpop.f32.mrb[0].mxu0
      %2476 = vmatprep.mubr.f32.mxu0 0.0
      %2477 = vmatmul.mubr.f32.gmra.mrb[0].mxu0 %v2311
      %v2478 = vpop.f32.mrb[0].mxu0
      %v2479 = vadd.f32 %v2299, %v2478
      %v2480 = vpop.f32.mrb[0].mxu0
      %2481 = vmatprep.mubr.f32.mxu0 0.0
      %2482 = vmatmul.mubr.f32.gmra.mrb[0].mxu0 %v2314
      %v2483 = vpop.f32.mrb[0].mxu0
      %v2484 = vadd.f32 %v2299, %v2483
      %v2485 = vpop.f32.mrb[0].mxu0
      %2486 = vmatprep.mubr.f32.mxu0 0.0
      %2487 = vmatmul.mubr.f32.gmra.mrb[0].mxu0 %v2317
      %v2488 = vpop.f32.mrb[0].mxu0
      %v2489 = vadd.f32 %v2299, %v2488
      %v2490 = vpop.f32.mrb[0].mxu0
      %2491 = vmatprep.mubr.f32.mxu0 0.0
      %2492 = vmatmul.mubr.f32.gmra.mrb[0].mxu0 %v2320
      %v2493 = vpop.f32.mrb[0].mxu0
      %v2494 = vadd.f32 %v2299, %v2493
      %v2495 = vpop.f32.mrb[0].mxu0
      %2496 = vmatprep.mubr.f32.mxu0 0.0
      %2497 = vmatmul.mubr.f32.gmra.mrb[0].mxu0 %v2323
      %v2498 = vpop.f32.mrb[0].mxu0
      %v2499 = vadd.f32 %v2299, %v2498
      %v2500 = vpop.f32.mrb[0].mxu0
      %2501 = vmatprep.mubr.f32.mxu0 0.0
      %2502 = vmatmul.mubr.f32.gmra.mrb[0].mxu0 %v2326
      %v2503 = vpop.f32.mrb[0].mxu0
      %v2504 = vadd.f32 %v2299, %v2503
      %v2505 = vpop.f32.mrb[0].mxu0
      %2506 = vmatprep.mubr.f32.mxu0 0.0
      %2507 = vmatmul.mubr.f32.gmra.mrb[0].mxu0 %v2329
      %v2508 = vpop.f32.mrb[0].mxu0
      %v2509 = vadd.f32 %v2299, %v2508
      %v2510 = vpop.f32.mrb[0].mxu0
      %2511 = vmatprep.mubr.f32.mxu0 0.0
      %2512 = vmatmul.mubr.f32.gmra.mrb[0].mxu0 %v2332
      %v2513 = vpop.f32.mrb[0].mxu0
      %v2514 = vadd.f32 %v2299, %v2513
      %v2515 = vpop.f32.mrb[0].mxu0
      %2516 = vmatprep.mubr.f32.mxu0 0.0
      %2517 = vmatmul.mubr.f32.gmra.mrb[0].mxu0 %v2335
      %v2518 = vpop.f32.mrb[0].mxu0
      %v2519 = vadd.f32 %v2299, %v2518
      %v2520 = vpop.f32.mrb[0].mxu0
      %2521 = vmatprep.mubr.f32.mxu0 0.0
      %2522 = vmatmul.mubr.f32.gmra.mrb[0].mxu0 %v2338
      %v2523 = vpop.f32.mrb[0].mxu0
      %v2524 = vadd.f32 %v2299, %v2523
      %v2525 = vpop.f32.mrb[0].mxu0
      %2526 = vmatprep.mubr.f32.mxu0 0.0
      %2527 = vmatmul.mubr.f32.gmra.mrb[0].mxu0 %v2341
      %v2528 = vpop.f32.mrb[0].mxu0
      %v2529 = vadd.f32 %v2299, %v2528
      %v2530 = vpop.f32.mrb[0].mxu0
      %2531 = vmatprep.mubr.f32.mxu0 0.0
      %2532 = vmatmul.mubr.f32.gmra.mrb[0].mxu0 %v2344
      %v2533 = vpop.f32.mrb[0].mxu0
      %v2534 = vadd.f32 %v2299, %v2533
      %v2535 = vpop.f32.mrb[0].mxu0
      %2536 = vmatprep.mubr.f32.mxu0 0.0
      %2537 = vmatmul.mubr.f32.gmra.mrb[0].mxu0 %v2347
      %v2538 = vpop.f32.mrb[0].mxu0
      %v2539 = vadd.f32 %v2299, %v2538
      %v2540 = vpop.f32.mrb[0].mxu0
      %2541 = vmatprep.mubr.f32.mxu0 0.0
      %2542 = vmatmul.mubr.f32.gmra.mrb[0].mxu0 %v2350
      %v2543 = vpop.f32.mrb[0].mxu0
      %v2544 = vadd.f32 %v2299, %v2543
      %v2545 = vpop.f32.mrb[0].mxu0
      %2546 = vmatprep.mubr.f32.mxu0 0.0
      %2547 = vmatmul.mubr.f32.gmra.mrb[0].mxu0 %v2353
      %v2548 = vpop.f32.mrb[0].mxu0
      %v2549 = vadd.f32 %v2299, %v2548
      %v2550 = vpop.f32.mrb[0].mxu0
      %2551 = vmatprep.mubr.f32.mxu0 0.0
      %2552 = vmatmul.mubr.f32.gmra.mrb[0].mxu0 %v2356
      %v2553 = vpop.f32.mrb[0].mxu0
      %v2554 = vadd.f32 %v2299, %v2553
      %v2555 = vpop.f32.mrb[0].mxu0
      %2556 = vmatprep.mubr.f32.mxu0 0.0
      %2557 = vmatmul.mubr.f32.gmra.mrb[0].mxu0 %v2359
      %v2558 = vpop.f32.mrb[0].mxu0
      %v2559 = vadd.f32 %v2299, %v2558
      %v2560 = vpop.f32.mrb[0].mxu0
      %2561 = vmatprep.mubr.f32.mxu0 0.0
      %2562 = vmatmul.mubr.f32.gmra.mrb[0].mxu0 %v2362
      %v2563 = vpop.f32.mrb[0].mxu0
      %v2564 = vadd.f32 %v2299, %v2563
      %v2565 = vpop.f32.mrb[0].mxu0
      %2566 = vmatprep.mubr.f32.mxu0 0.0
      %2567 = vmatmul.mubr.f32.gmra.mrb[0].mxu0 %v2365
      %v2568 = vpop.f32.mrb[0].mxu0
      %v2569 = vadd.f32 %v2299, %v2568
      %v2570 = vpop.f32.mrb[0].mxu0
      %2571 = vmatprep.mubr.f32.mxu0 0.0
      %2572 = vmatmul.mubr.f32.gmra.mrb[0].mxu0 %v2368
      %v2573 = vpop.f32.mrb[0].mxu0
      %v2574 = vadd.f32 %v2299, %v2573
      %v2575 = vpop.f32.mrb[0].mxu0
      %2576 = vmatprep.mubr.f32.mxu0 0.0
      %2577 = vmatmul.mubr.f32.gmra.mrb[0].mxu0 %v2371
      %v2578 = vpop.f32.mrb[0].mxu0
      %v2579 = vadd.f32 %v2299, %v2578
      %v2580 = vpop.f32.mrb[0].mxu0
      %2581 = vmatprep.mubr.f32.mxu0 0.0
      %2582 = vmatmul.mubr.f32.gmra.mrb[0].mxu0 %v2374
      %v2583 = vpop.f32.mrb[0].mxu0
      %v2584 = vadd.f32 %v2299, %v2583
      %v2585 = vpop.f32.mrb[0].mxu0
      %2586 = vmatprep.mubr.f32.mxu0 0.0
      %2587 = vmatmul.mubr.f32.gmra.mrb[0].mxu0 %v2377
      %v2588 = vpop.f32.mrb[0].mxu0
      %v2589 = vadd.f32 %v2299, %v2588
      %v2590 = vpop.f32.mrb[0].mxu0
      %2591 = vmatprep.mubr.f32.mxu0 0.0
      %2592 = vmatmul.mubr.f32.gmra.mrb[0].mxu0 %v2380
      %v2593 = vpop.f32.mrb[0].mxu0
      %v2594 = vadd.f32 %v2299, %v2593
      %v2595 = vpop.f32.mrb[0].mxu0
      %2596 = vmatprep.mubr.f32.mxu0 0.0
      %2597 = vmatmul.mubr.f32.gmra.mrb[0].mxu0 %v2383
      %v2598 = vpop.f32.mrb[0].mxu0
      %v2599 = vadd.f32 %v2299, %v2598
      %v2600 = vpop.f32.mrb[0].mxu0
      %2601 = vmatprep.mubr.f32.mxu0 0.0
      %2602 = vmatmul.mubr.f32.gmra.mrb[0].mxu0 %v2386
      %v2603 = vpop.f32.mrb[0].mxu0
      %v2604 = vadd.f32 %v2299, %v2603
      %v2605 = vpop.f32.mrb[0].mxu0
      %2606 = vmatprep.mubr.f32.mxu0 0.0
      %2607 = vmatmul.mubr.f32.gmra.mrb[0].mxu0 %v2389
      %v2608 = vpop.f32.mrb[0].mxu0
      %v2609 = vadd.f32 %v2299, %v2608
      %v2610 = vpop.f32.mrb[0].mxu0
      %2611 = vmatprep.mubr.f32.mxu0 0.0
      %2612 = vmatmul.mubr.f32.gmra.mrb[0].mxu0 %v2392
      %v2613 = vpop.f32.mrb[0].mxu0
      %v2614 = vadd.f32 %v2299, %v2613
      %v2615 = vpop.f32.mrb[0].mxu0
      %2616 = vmatprep.mubr.f32.mxu0 0.0
      %2617 = vmatmul.mubr.f32.gmra.mrb[0].mxu0 %v2395
      %v2618 = vpop.f32.mrb[0].mxu0
      %v2619 = vadd.f32 %v2299, %v2618
      %v2620 = vpop.f32.mrb[0].mxu0
      %2621 = vdwg.mxu0
      %2638 = vrot.lane.b32.xlu0 %v2544, 4
      %v2639 = vpop.permute.xlu0 %2638
      %2640 = vrot.lane.b32.xlu0 %v2549, 4
      %v2641 = vpop.permute.xlu0 %2640
      %2642 = vrot.lane.b32.xlu0 %v2554, 4
      %v2643 = vpop.permute.xlu0 %2642
      %2644 = vrot.lane.b32.xlu0 %v2559, 4
      %v2645 = vpop.permute.xlu0 %2644
      %2646 = vrot.lane.b32.xlu0 %v2564, 4
      %v2647 = vpop.permute.xlu0 %2646
      %2648 = vrot.lane.b32.xlu0 %v2569, 4
      %v2649 = vpop.permute.xlu0 %2648
      %2650 = vrot.lane.b32.xlu0 %v2574, 4
      %v2651 = vpop.permute.xlu0 %2650
      %2652 = vrot.lane.b32.xlu0 %v2579, 4
      %v2653 = vpop.permute.xlu0 %2652
      %2654 = vrot.lane.b32.xlu0 %v2584, 4
      %v2655 = vpop.permute.xlu0 %2654
      %2656 = vrot.lane.b32.xlu0 %v2589, 4
      %v2657 = vpop.permute.xlu0 %2656
      %2658 = vrot.lane.b32.xlu0 %v2594, 4
      %v2659 = vpop.permute.xlu0 %2658
      %2660 = vrot.lane.b32.xlu0 %v2599, 4
      %v2661 = vpop.permute.xlu0 %2660
      %2662 = vrot.lane.b32.xlu0 %v2604, 4
      %v2663 = vpop.permute.xlu0 %2662
      %2664 = vrot.lane.b32.xlu0 %v2609, 4
      %v2665 = vpop.permute.xlu0 %2664
      %2666 = vrot.lane.b32.xlu0 %v2614, 4
      %v2667 = vpop.permute.xlu0 %2666
      %2668 = vrot.lane.b32.xlu0 %v2619, 4
      %v2669 = vpop.permute.xlu0 %2668
      %vm2686 = vcmask 31744
      %v2687 = vsel %vm2686, %v2464, %v2639
      %v2688 = vsel %vm2686, %v2469, %v2641
      %v2689 = vsel %vm2686, %v2474, %v2643
      %v2690 = vsel %vm2686, %v2479, %v2645
      %v2691 = vsel %vm2686, %v2484, %v2647
      %v2692 = vsel %vm2686, %v2489, %v2649
      %v2693 = vsel %vm2686, %v2494, %v2651
      %v2694 = vsel %vm2686, %v2499, %v2653
      %v2695 = vsel %vm2686, %v2504, %v2655
      %v2696 = vsel %vm2686, %v2509, %v2657
      %v2697 = vsel %vm2686, %v2514, %v2659
      %v2698 = vsel %vm2686, %v2519, %v2661
      %v2699 = vsel %vm2686, %v2524, %v2663
      %v2700 = vsel %vm2686, %v2529, %v2665
      %v2701 = vsel %vm2686, %v2534, %v2667
      %v2702 = vsel %vm2686, %v2539, %v2669
      %vm2703 = vcmask 64512
      %2704 = vst.msk [vmem:[%s325] sm:$0xff] %vm2703, %v2687
      %2705 = vst.msk [vmem:[%s325 + $0x8] sm:$0xff] %vm2703, %v2688
      %2706 = vst.msk [vmem:[%s325 + $0x10] sm:$0xff] %vm2703, %v2689
      %2707 = vst.msk [vmem:[%s325 + $0x18] sm:$0xff] %vm2703, %v2690
      %2708 = vst.msk [vmem:[%s325 + $0x20] sm:$0xff] %vm2703, %v2691
      %2709 = vst.msk [vmem:[%s325 + $0x28] sm:$0xff] %vm2703, %v2692
      %2710 = vst.msk [vmem:[%s325 + $0x30] sm:$0xff] %vm2703, %v2693
      %2711 = vst.msk [vmem:[%s325 + $0x38] sm:$0xff] %vm2703, %v2694
      %2712 = vst.msk [vmem:[%s325 + $0x40] sm:$0xff] %vm2703, %v2695
      %2713 = vst.msk [vmem:[%s325 + $0x48] sm:$0xff] %vm2703, %v2696
      %2714 = vst.msk [vmem:[%s325 + $0x50] sm:$0xff] %vm2703, %v2697
      %2715 = vst.msk [vmem:[%s325 + $0x58] sm:$0xff] %vm2703, %v2698
      %2716 = vst.msk [vmem:[%s325 + $0x60] sm:$0xff] %vm2703, %v2699
      %2717 = vst.msk [vmem:[%s325 + $0x68] sm:$0xff] %vm2703, %v2700
      %2718 = vst.msk [vmem:[%s325 + $0x70] sm:$0xff] %vm2703, %v2701
      %2719 = vst.msk [vmem:[%s325 + $0x78] sm:$0xff] %vm2703, %v2702
      %p2720 = scmp.lt.s32.totalorder %s19, 1
      %s2721 = scalar_select %p2720, %s19, 1
      %s2722 = smul.addr %s2721, 16
      %s2723 = smul.addr %s2722, 8
      %s2724 = scalar_lea.vmem %s8, %s2723
      // Predicated region
      $region53: #{unet_decoder_forward.3} parent=51 // pred_check
        %p2725 = pneg %p215
      $region54: #{unet_decoder_forward.3} parent=51 // pred_check_branch
        %2727 = sbr.rel (%p2725) target = $region56
      $region55: #{unet_decoder_forward.3} parent=51 // pred_region
        _
      $region56: #{unet_decoder_forward.3} parent=51 // pred_fallthru
        _
    $region52: #{unet_decoder_forward.3} parent=5 // pred_fallthru
      _
    %p2728 = scmp.le.s32.totalorder 2, %s14
    // Predicated region
    $region57: #{unet_decoder_forward.3} parent=5 // pred_check
      %p2729 = pneg %p2728
    $region58: #{unet_decoder_forward.3} parent=5 // pred_check_branch
      %2731 = sbr.rel (%p2729) target = $region60
    $region59: #{unet_decoder_forward.3} parent=5 // pred_region
      %s2732 = ssub.s32 %s14, 2
      // Predicated region
      $region61: #{unet_decoder_forward.3} parent=59 // pred_check
        %p2733 = pneg %p221
      $region62: #{unet_decoder_forward.3} parent=59 // pred_check_branch
        %2735 = sbr.rel (%p2733) target = $region64
      $region63: #{unet_decoder_forward.3} parent=59 // pred_region
        %p2736 = scmp.lt.s32.totalorder %s20, 1
        %s2737 = scalar_select %p2736, %s20, 1
        %s2738 = smul.addr %s2737, 16
        %s2739 = smul.addr %s2738, 8
        %s2740 = scalar_lea.vmem %s8, %s2739
      $region64: #{unet_decoder_forward.3} parent=59 // pred_fallthru
        _
    $region60: #{unet_decoder_forward.3} parent=5 // pred_fallthru
      _
  $region6: #{unet_decoder_forward.3} parent=0 // loop_footer
    %s18 = sadd.s32 1, %s14
  $region7: #{unet_decoder_forward.3} parent=0 // loop_footer_branch
    %13 = sbr.rel target = $region3
  $region8: #{unet_decoder_forward.3} parent=0 // loop_exit
    _

</llo_original>
